<compile_context>
chip_gen: v7x
topology: tpu7x:2x2x1
jax: 0.10.0
libtpu: 0.0.40
codegen_flags: <defaults>
</compile_context>

<pallas_src>
import math
import jax
import jax.numpy as jnp
from jax import lax
from jax.experimental import pallas as pl
from jax.experimental.pallas import tpu as pltpu

# ---------------- model config (small, synthetic) ----------------
VOCAB = 128
MAX_POS = 64
HIDDEN = 32
NUM_HEADS = 2
HEAD_DIM = HIDDEN // NUM_HEADS
INTERMEDIATE = 64
NUM_LAYERS = 2
NUM_LABELS = 13          # 'O' + 12 punct/case combinations (sbert_punc_case_ru head)
PAD_LABELS = 128         # lane-dense classifier output (slice [:, :NUM_LABELS] outside)
LN_EPS = 1e-12


def _full_spec(shape):
    """Full-array BlockSpec (no grid): whole array resident in VMEM."""
    zeros = (0,) * len(shape)
    return pl.BlockSpec(shape, lambda: zeros)


# ---------------- fused forward ----------------
def sbert_punc_case_forward(params, input_ids, attention_mask):
    """Returns logits of shape (B, S, NUM_LABELS) — equivalent of model(...).logits."""
    B, S = input_ids.shape
    M = B * S
    scale = 1.0 / math.sqrt(HEAD_DIM)
    inv_sqrt2 = 1.0 / math.sqrt(2.0)

    # Only remaining host-side prep: trivial int32 reshapes of the raw inputs.
    ids_col = input_ids.reshape(M, 1)            # (M, 1) int32, flat token column
    mask_row = attention_mask.reshape(1, M)      # (1, M) int32, flat key-padding mask

    def kernel(ids_ref, mask_ref, we_ref, pe_ref, te_ref, eg_ref, eb_ref,
               wq_ref, bq_ref, wk_ref, bk_ref, wv_ref, bv_ref,
               wo_ref, bo_ref, g1_ref, b1_ref,
               wi_ref, bi_ref, wo2_ref, bo2_ref, g2_ref, b2_ref,
               cw_ref, cb_ref, o_ref):
        f32 = jnp.float32

        def ln(h, g, b):
            mu = jnp.mean(h, axis=-1, keepdims=True)
            var = jnp.mean((h - mu) ** 2, axis=-1, keepdims=True)
            return (h - mu) * lax.rsqrt(var + LN_EPS) * g + b

        def erf(x):
            # Abramowitz & Stegun 7.1.26 polynomial, |err| < 1.5e-7 (f32-exact).
            a1, a2, a3, a4, a5 = (0.254829592, -0.284496736, 1.421413741,
                                  -1.453152027, 1.061405429)
            pp = 0.3275911
            ax = jnp.abs(x)
            t = 1.0 / (1.0 + pp * ax)
            poly = ((((a5 * t + a4) * t + a3) * t + a2) * t + a1) * t
            y = 1.0 - poly * jnp.exp(-ax * ax)
            return jnp.where(x >= 0.0, y, -y)

        def gelu(x):  # exact erf-GELU (HF/PyTorch BERT), not the tanh approximation
            return 0.5 * x * (1.0 + erf(x * inv_sqrt2))

        # ---- embeddings fused as one-hot matmul (word) + tiled position + type(0) ----
        ids = ids_ref[...]                                                  # (M, 1) int32
        onehot = (jnp.broadcast_to(ids, (M, VOCAB))
                  == lax.broadcasted_iota(jnp.int32, (M, VOCAB), 1)).astype(f32)
        pos = jnp.concatenate([pe_ref[0:S, :]] * B, axis=0)                 # (M, H)
        x = (jnp.dot(onehot, we_ref[...], preferred_element_type=f32)
             + pos + te_ref[0:1, :])
        xx = ln(x, eg_ref[...], eb_ref[...])                                # embedding LayerNorm

        # ---- combined attention bias, computed ONCE (hoisted out of the layer loop):
        #      key-padding mask + block-diagonal -10000 so batches never attend across rows.
        kmask = mask_ref[...].astype(f32)                                   # (1, M)
        ri = lax.broadcasted_iota(jnp.int32, (M, M), 0)                     # flat query idx
        ci = lax.broadcasted_iota(jnp.int32, (M, M), 1)                     # flat key idx
        same_batch = None
        for b in range(B):
            in_q = (ri >= b * S) & (ri < (b + 1) * S)
            in_k = (ci >= b * S) & (ci < (b + 1) * S)
            blk = in_q & in_k
            same_batch = blk if same_batch is None else (same_batch | blk)
        valid = jnp.where(same_batch, jnp.broadcast_to(kmask, (M, M)), 0.0)
        bias = (1.0 - valid) * -10000.0                                     # (M, M)

        for l in range(NUM_LAYERS):
            # full-token per-head attention; only weight refs are sliced (per-head packed),
            # per-head context is folded into W_O row blocks — no ctx scratch, no lane slices.
            attn = jnp.zeros((M, HIDDEN), f32)
            for h in range(NUM_HEADS):
                qh = jnp.dot(xx, wq_ref[l, h, :, :], preferred_element_type=f32) + bq_ref[l, h, :, :]
                kh = jnp.dot(xx, wk_ref[l, h, :, :], preferred_element_type=f32) + bk_ref[l, h, :, :]
                vh = jnp.dot(xx, wv_ref[l, h, :, :], preferred_element_type=f32) + bv_ref[l, h, :, :]
                s = lax.dot_general(qh, kh, (((1,), (1,)), ((), ())),
                                    preferred_element_type=f32) * scale + bias
                s = s - jnp.max(s, axis=-1, keepdims=True)
                p = jnp.exp(s)
                p = p / jnp.sum(p, axis=-1, keepdims=True)                  # exact normalizer
                ctx = jnp.dot(p, vh, preferred_element_type=f32)            # (M, HEAD_DIM)
                attn = attn + jnp.dot(ctx, wo_ref[l, h, :, :], preferred_element_type=f32)
            attn = attn + bo_ref[l, :, :]
            xx = ln(attn + xx, g1_ref[l, :, :], b1_ref[l, :, :])

            hh = jnp.dot(xx, wi_ref[l], preferred_element_type=f32) + bi_ref[l, :, :]
            hh = gelu(hh)
            hh = jnp.dot(hh, wo2_ref[l], preferred_element_type=f32) + bo2_ref[l, :, :]
            xx = ln(hh + xx, g2_ref[l, :, :], b2_ref[l, :, :])

        # classifier, lane-dense padded output (M, 128)
        logits = jnp.dot(xx, cw_ref[...], preferred_element_type=f32) + cb_ref[...]
        o_ref[...] = logits.astype(o_ref.dtype)

    args = (ids_col, mask_row,
            params["word_emb"], params["pos_emb"], params["type_emb"],
            params["emb_ln_g"], params["emb_ln_b"],
            params["wq"], params["bq"], params["wk"], params["bk"],
            params["wv"], params["bv"],
            params["wo"], params["bo"], params["ln1_g"], params["ln1_b"],
            params["wi"], params["bi"], params["wo2"], params["bo2"],
            params["ln2_g"], params["ln2_b"],
            params["cls_w_pad"], params["cls_b_pad"])

    out = pl.pallas_call(
        kernel,
        out_shape=jax.ShapeDtypeStruct((M, PAD_LABELS), jnp.float32),
        in_specs=[_full_spec(a.shape) for a in args],
        out_specs=_full_spec((M, PAD_LABELS)),
    )(*args)

    # tiny post-kernel slice/reshape to present logits in the module's (B, S, NUM_LABELS) form
    return out[:, :NUM_LABELS].reshape(B, S, NUM_LABELS)


# ---------------- deterministic parameter init (weights pre-packed per head for the fused kernel) ----------------
def init_params(key):
    def nrm(k, shape, scale=0.02):
        return (scale * jax.random.normal(k, shape)).astype(jnp.float32)

    keys = jax.random.split(key, 4 + NUM_LAYERS)
    cls_w = nrm(keys[3], (HIDDEN, NUM_LABELS))
    params = {
        "word_emb": nrm(keys[0], (VOCAB, HIDDEN)),
        "pos_emb": nrm(keys[1], (MAX_POS, HIDDEN)),
        "type_emb": nrm(keys[2], (2, HIDDEN)),
        "emb_ln_g": jnp.ones((1, HIDDEN), jnp.float32),
        "emb_ln_b": jnp.zeros((1, HIDDEN), jnp.float32),
        # lane-dense classifier: pad NUM_LABELS=13 -> 128 (padded cols are zero, sliced off outside)
        "cls_w_pad": jnp.zeros((HIDDEN, PAD_LABELS), jnp.float32).at[:, :NUM_LABELS].set(cls_w),
        "cls_b_pad": jnp.zeros((1, PAD_LABELS), jnp.float32),
    }

    wq, wk, wv, woh, wi, wo2 = [], [], [], [], [], []
    for li in range(NUM_LAYERS):
        lk = jax.random.split(keys[4 + li], 6)
        wq_l = nrm(lk[0], (HIDDEN, HIDDEN))
        wk_l = nrm(lk[1], (HIDDEN, HIDDEN))
        wv_l = nrm(lk[2], (HIDDEN, HIDDEN))
        wo_l = nrm(lk[3], (HIDDEN, HIDDEN))
        # per-head packing: Q/K/V columns -> (NH, H, HD); output-projection rows -> (NH, HD, H)
        wq.append(wq_l.reshape(HIDDEN, NUM_HEADS, HEAD_DIM).transpose(1, 0, 2))
        wk.append(wk_l.reshape(HIDDEN, NUM_HEADS, HEAD_DIM).transpose(1, 0, 2))
        wv.append(wv_l.reshape(HIDDEN, NUM_HEADS, HEAD_DIM).transpose(1, 0, 2))
        woh.append(wo_l.reshape(NUM_HEADS, HEAD_DIM, HIDDEN))
        wi.append(nrm(lk[4], (HIDDEN, INTERMEDIATE)))
        wo2.append(nrm(lk[5], (INTERMEDIATE, HIDDEN)))

    L = NUM_LAYERS
    params.update({
        "wq": jnp.stack(wq), "wk": jnp.stack(wk), "wv": jnp.stack(wv),
        "bq": jnp.zeros((L, NUM_HEADS, 1, HEAD_DIM), jnp.float32),
        "bk": jnp.zeros((L, NUM_HEADS, 1, HEAD_DIM), jnp.float32),
        "bv": jnp.zeros((L, NUM_HEADS, 1, HEAD_DIM), jnp.float32),
        "wo": jnp.stack(woh), "bo": jnp.zeros((L, 1, HIDDEN), jnp.float32),
        "ln1_g": jnp.ones((L, 1, HIDDEN), jnp.float32),
        "ln1_b": jnp.zeros((L, 1, HIDDEN), jnp.float32),
        "wi": jnp.stack(wi), "bi": jnp.zeros((L, 1, INTERMEDIATE), jnp.float32),
        "wo2": jnp.stack(wo2), "bo2": jnp.zeros((L, 1, HIDDEN), jnp.float32),
        "ln2_g": jnp.ones((L, 1, HIDDEN), jnp.float32),
        "ln2_b": jnp.zeros((L, 1, HIDDEN), jnp.float32),
    })
    return params


if __name__ == "__main__":
    # TODO(synk): tokenizer + punctuate()/token_to_label() string post-processing are host-side
    # (no device compute) and the pretrained checkpoint is not loaded; synthetic weights are used.
    key = jax.random.PRNGKey(0)
    pkey, ikey = jax.random.split(key)

    B, S = 2, 8
    params = init_params(pkey)
    input_ids = jax.random.randint(ikey, (B, S), 0, VOCAB, dtype=jnp.int32)
    attention_mask = jnp.ones((B, S), jnp.int32).at[1, 6:].set(0)   # pad last 2 tokens of row 1

    logits = jax.jit(sbert_punc_case_forward)(params, input_ids, attention_mask)
    logits = jax.block_until_ready(logits)
    assert logits.shape == (B, S, NUM_LABELS)
    assert bool(jnp.all(jnp.isfinite(logits)))
    print("KERNEL_OK")
</pallas_src>

<mosaic_0001>
module attributes {stable_mosaic.version = 11 : i64} {
  func.func @kernel(%arg0: memref<16x1xi32, #tpu.memory_space<vmem>>, %arg1: memref<1x16xi32, #tpu.memory_space<vmem>>, %arg2: memref<128x32xf32, #tpu.memory_space<vmem>>, %arg3: memref<64x32xf32, #tpu.memory_space<vmem>>, %arg4: memref<2x32xf32, #tpu.memory_space<vmem>>, %arg5: memref<1x32xf32, #tpu.memory_space<vmem>>, %arg6: memref<1x32xf32, #tpu.memory_space<vmem>>, %arg7: memref<2x2x32x16xf32, #tpu.memory_space<vmem>>, %arg8: memref<2x2x1x16xf32, #tpu.memory_space<vmem>>, %arg9: memref<2x2x32x16xf32, #tpu.memory_space<vmem>>, %arg10: memref<2x2x1x16xf32, #tpu.memory_space<vmem>>, %arg11: memref<2x2x32x16xf32, #tpu.memory_space<vmem>>, %arg12: memref<2x2x1x16xf32, #tpu.memory_space<vmem>>, %arg13: memref<2x2x16x32xf32, #tpu.memory_space<vmem>>, %arg14: memref<2x1x32xf32, #tpu.memory_space<vmem>>, %arg15: memref<2x1x32xf32, #tpu.memory_space<vmem>>, %arg16: memref<2x1x32xf32, #tpu.memory_space<vmem>>, %arg17: memref<2x32x64xf32, #tpu.memory_space<vmem>>, %arg18: memref<2x1x64xf32, #tpu.memory_space<vmem>>, %arg19: memref<2x64x32xf32, #tpu.memory_space<vmem>>, %arg20: memref<2x1x32xf32, #tpu.memory_space<vmem>>, %arg21: memref<2x1x32xf32, #tpu.memory_space<vmem>>, %arg22: memref<2x1x32xf32, #tpu.memory_space<vmem>>, %arg23: memref<32x128xf32, #tpu.memory_space<vmem>>, %arg24: memref<1x128xf32, #tpu.memory_space<vmem>>, %arg25: memref<16x128xf32, #tpu.memory_space<vmem>>) attributes {dimension_semantics = [], scalar_prefetch = 0 : i64, scratch_operands = 0 : i64, tpu.core_type = #tpu.core_type<tc>} {
    %c0 = arith.constant 0 : index
    %c0_0 = arith.constant 0 : index
    %0 = vector.load %arg0[%c0, %c0_0] : memref<16x1xi32, #tpu.memory_space<vmem>>, vector<16x1xi32>
    %1 = vector.shape_cast %0 : vector<16x1xi32> to vector<16x1xi32>
    %2 = vector.broadcast %1 : vector<16x1xi32> to vector<16x128xi32>
    %3 = tpu.iota {dimensions = array<i32: 1>} : vector<16x128xi32>
    %4 = arith.cmpi eq, %2, %3 : vector<16x128xi32>
    %5 = arith.extui %4 : vector<16x128xi1> to vector<16x128xi32>
    %6 = arith.sitofp %5 : vector<16x128xi32> to vector<16x128xf32>
    %c0_1 = arith.constant 0 : index
    %c0_2 = arith.constant 0 : index
    %7 = vector.load %arg3[%c0_1, %c0_2] : memref<64x32xf32, #tpu.memory_space<vmem>>, vector<8x32xf32>
    %8 = tpu.concatenate %7, %7 in 0 : vector<8x32xf32>, vector<8x32xf32> -> vector<16x32xf32>
    %c0_3 = arith.constant 0 : index
    %c0_4 = arith.constant 0 : index
    %9 = vector.load %arg2[%c0_3, %c0_4] : memref<128x32xf32, #tpu.memory_space<vmem>>, vector<128x32xf32>
    %cst = arith.constant dense<0.000000e+00> : vector<16x32xf32>
    %10 = tpu.matmul %6, %9, %cst {dimension_numbers = #tpu.dot_dimension_numbers<[1], [0], [0], [1], [0, 0, 1, 1], [], []>} : vector<16x128xf32>, vector<128x32xf32>, vector<16x32xf32> -> vector<16x32xf32>
    %11 = arith.addf %10, %8 : vector<16x32xf32>
    %c0_5 = arith.constant 0 : index
    %c0_6 = arith.constant 0 : index
    %12 = vector.load %arg4[%c0_5, %c0_6] : memref<2x32xf32, #tpu.memory_space<vmem>>, vector<1x32xf32>
    %13 = vector.broadcast %12 : vector<1x32xf32> to vector<16x32xf32>
    %14 = arith.addf %11, %13 : vector<16x32xf32>
    %c0_7 = arith.constant 0 : index
    %c0_8 = arith.constant 0 : index
    %15 = vector.load %arg5[%c0_7, %c0_8] : memref<1x32xf32, #tpu.memory_space<vmem>>, vector<1x32xf32>
    %c0_9 = arith.constant 0 : index
    %c0_10 = arith.constant 0 : index
    %16 = vector.load %arg6[%c0_9, %c0_10] : memref<1x32xf32, #tpu.memory_space<vmem>>, vector<1x32xf32>
    %cst_11 = arith.constant dense<0.000000e+00> : vector<16xf32>
    %17 = vector.multi_reduction <add>, %14, %cst_11 [1] : vector<16x32xf32> to vector<16xf32>
    %18 = vector.shape_cast %17 : vector<16xf32> to vector<16x1xf32>
    %cst_12 = arith.constant 3.200000e+01 : f32
    %19 = vector.broadcast %cst_12 : f32 to vector<16x1xf32>
    %20 = arith.divf %18, %19 : vector<16x1xf32>
    %21 = vector.broadcast %20 : vector<16x1xf32> to vector<16x32xf32>
    %22 = arith.subf %14, %21 : vector<16x32xf32>
    %23 = arith.mulf %22, %22 : vector<16x32xf32>
    %cst_13 = arith.constant dense<0.000000e+00> : vector<16xf32>
    %24 = vector.multi_reduction <add>, %23, %cst_13 [1] : vector<16x32xf32> to vector<16xf32>
    %25 = vector.shape_cast %24 : vector<16xf32> to vector<16x1xf32>
    %cst_14 = arith.constant 3.200000e+01 : f32
    %26 = vector.broadcast %cst_14 : f32 to vector<16x1xf32>
    %27 = arith.divf %25, %26 : vector<16x1xf32>
    %28 = vector.broadcast %20 : vector<16x1xf32> to vector<16x32xf32>
    %29 = arith.subf %14, %28 : vector<16x32xf32>
    %cst_15 = arith.constant 9.99999996E-13 : f32
    %30 = vector.broadcast %cst_15 : f32 to vector<16x1xf32>
    %31 = arith.addf %27, %30 : vector<16x1xf32>
    %32 = math.rsqrt %31 : vector<16x1xf32>
    %33 = vector.broadcast %32 : vector<16x1xf32> to vector<16x32xf32>
    %34 = arith.mulf %29, %33 : vector<16x32xf32>
    %35 = vector.broadcast %15 : vector<1x32xf32> to vector<16x32xf32>
    %36 = arith.mulf %34, %35 : vector<16x32xf32>
    %37 = vector.broadcast %16 : vector<1x32xf32> to vector<16x32xf32>
    %38 = arith.addf %36, %37 : vector<16x32xf32>
    %c0_16 = arith.constant 0 : index
    %c0_17 = arith.constant 0 : index
    %39 = vector.load %arg1[%c0_16, %c0_17] : memref<1x16xi32, #tpu.memory_space<vmem>>, vector<1x16xi32>
    %40 = arith.sitofp %39 : vector<1x16xi32> to vector<1x16xf32>
    %41 = tpu.iota {dimensions = array<i32: 0>} : vector<16x16xi32>
    %42 = tpu.iota {dimensions = array<i32: 1>} : vector<16x16xi32>
    %c0_i32 = arith.constant 0 : i32
    %43 = vector.broadcast %c0_i32 : i32 to vector<16x16xi32>
    %44 = arith.cmpi sge, %41, %43 : vector<16x16xi32>
    %c8_i32 = arith.constant 8 : i32
    %45 = vector.broadcast %c8_i32 : i32 to vector<16x16xi32>
    %46 = arith.cmpi slt, %41, %45 : vector<16x16xi32>
    %47 = arith.andi %44, %46 : vector<16x16xi1>
    %c0_i32_18 = arith.constant 0 : i32
    %48 = vector.broadcast %c0_i32_18 : i32 to vector<16x16xi32>
    %49 = arith.cmpi sge, %42, %48 : vector<16x16xi32>
    %c8_i32_19 = arith.constant 8 : i32
    %50 = vector.broadcast %c8_i32_19 : i32 to vector<16x16xi32>
    %51 = arith.cmpi slt, %42, %50 : vector<16x16xi32>
    %52 = arith.andi %49, %51 : vector<16x16xi1>
    %53 = arith.andi %47, %52 : vector<16x16xi1>
    %c8_i32_20 = arith.constant 8 : i32
    %54 = vector.broadcast %c8_i32_20 : i32 to vector<16x16xi32>
    %55 = arith.cmpi sge, %41, %54 : vector<16x16xi32>
    %c16_i32 = arith.constant 16 : i32
    %56 = vector.broadcast %c16_i32 : i32 to vector<16x16xi32>
    %57 = arith.cmpi slt, %41, %56 : vector<16x16xi32>
    %58 = arith.andi %55, %57 : vector<16x16xi1>
    %c8_i32_21 = arith.constant 8 : i32
    %59 = vector.broadcast %c8_i32_21 : i32 to vector<16x16xi32>
    %60 = arith.cmpi sge, %42, %59 : vector<16x16xi32>
    %c16_i32_22 = arith.constant 16 : i32
    %61 = vector.broadcast %c16_i32_22 : i32 to vector<16x16xi32>
    %62 = arith.cmpi slt, %42, %61 : vector<16x16xi32>
    %63 = arith.andi %60, %62 : vector<16x16xi1>
    %64 = arith.andi %58, %63 : vector<16x16xi1>
    %65 = arith.ori %53, %64 : vector<16x16xi1>
    %66 = vector.shape_cast %40 : vector<1x16xf32> to vector<1x16xf32>
    %67 = vector.broadcast %66 : vector<1x16xf32> to vector<16x16xf32>
    %cst_23 = arith.constant 0.000000e+00 : f32
    %68 = vector.broadcast %cst_23 : f32 to vector<16x16xf32>
    %69 = arith.select %65, %67, %68 : vector<16x16xi1>, vector<16x16xf32>
    %cst_24 = arith.constant 1.000000e+00 : f32
    %70 = vector.broadcast %cst_24 : f32 to vector<16x16xf32>
    %71 = arith.subf %70, %69 : vector<16x16xf32>
    %cst_25 = arith.constant -1.000000e+04 : f32
    %72 = vector.broadcast %cst_25 : f32 to vector<16x16xf32>
    %73 = arith.mulf %71, %72 : vector<16x16xf32>
    %cst_26 = arith.constant 0.000000e+00 : f32
    %74 = vector.broadcast %cst_26 : f32 to vector<16x32xf32>
    %c0_27 = arith.constant 0 : index
    %c0_28 = arith.constant 0 : index
    %c0_29 = arith.constant 0 : index
    %c0_30 = arith.constant 0 : index
    %75 = vector.load %arg7[%c0_27, %c0_28, %c0_29, %c0_30] : memref<2x2x32x16xf32, #tpu.memory_space<vmem>>, vector<1x1x32x16xf32>
    %76 = vector.shape_cast %75 : vector<1x1x32x16xf32> to vector<32x16xf32>
    %cst_31 = arith.constant dense<0.000000e+00> : vector<16x16xf32>
    %77 = tpu.matmul %38, %76, %cst_31 {dimension_numbers = #tpu.dot_dimension_numbers<[1], [0], [0], [1], [0, 0, 1, 1], [], []>} : vector<16x32xf32>, vector<32x16xf32>, vector<16x16xf32> -> vector<16x16xf32>
    %c0_32 = arith.constant 0 : index
    %c0_33 = arith.constant 0 : index
    %c0_34 = arith.constant 0 : index
    %c0_35 = arith.constant 0 : index
    %78 = vector.load %arg8[%c0_32, %c0_33, %c0_34, %c0_35] : memref<2x2x1x16xf32, #tpu.memory_space<vmem>>, vector<1x1x1x16xf32>
    %79 = vector.shape_cast %78 : vector<1x1x1x16xf32> to vector<1x16xf32>
    %80 = vector.broadcast %79 : vector<1x16xf32> to vector<16x16xf32>
    %81 = arith.addf %77, %80 : vector<16x16xf32>
    %c0_36 = arith.constant 0 : index
    %c0_37 = arith.constant 0 : index
    %c0_38 = arith.constant 0 : index
    %c0_39 = arith.constant 0 : index
    %82 = vector.load %arg9[%c0_36, %c0_37, %c0_38, %c0_39] : memref<2x2x32x16xf32, #tpu.memory_space<vmem>>, vector<1x1x32x16xf32>
    %83 = vector.shape_cast %82 : vector<1x1x32x16xf32> to vector<32x16xf32>
    %cst_40 = arith.constant dense<0.000000e+00> : vector<16x16xf32>
    %84 = tpu.matmul %38, %83, %cst_40 {dimension_numbers = #tpu.dot_dimension_numbers<[1], [0], [0], [1], [0, 0, 1, 1], [], []>} : vector<16x32xf32>, vector<32x16xf32>, vector<16x16xf32> -> vector<16x16xf32>
    %c0_41 = arith.constant 0 : index
    %c0_42 = arith.constant 0 : index
    %c0_43 = arith.constant 0 : index
    %c0_44 = arith.constant 0 : index
    %85 = vector.load %arg10[%c0_41, %c0_42, %c0_43, %c0_44] : memref<2x2x1x16xf32, #tpu.memory_space<vmem>>, vector<1x1x1x16xf32>
    %86 = vector.shape_cast %85 : vector<1x1x1x16xf32> to vector<1x16xf32>
    %87 = vector.broadcast %86 : vector<1x16xf32> to vector<16x16xf32>
    %88 = arith.addf %84, %87 : vector<16x16xf32>
    %c0_45 = arith.constant 0 : index
    %c0_46 = arith.constant 0 : index
    %c0_47 = arith.constant 0 : index
    %c0_48 = arith.constant 0 : index
    %89 = vector.load %arg11[%c0_45, %c0_46, %c0_47, %c0_48] : memref<2x2x32x16xf32, #tpu.memory_space<vmem>>, vector<1x1x32x16xf32>
    %90 = vector.shape_cast %89 : vector<1x1x32x16xf32> to vector<32x16xf32>
    %cst_49 = arith.constant dense<0.000000e+00> : vector<16x16xf32>
    %91 = tpu.matmul %38, %90, %cst_49 {dimension_numbers = #tpu.dot_dimension_numbers<[1], [0], [0], [1], [0, 0, 1, 1], [], []>} : vector<16x32xf32>, vector<32x16xf32>, vector<16x16xf32> -> vector<16x16xf32>
    %c0_50 = arith.constant 0 : index
    %c0_51 = arith.constant 0 : index
    %c0_52 = arith.constant 0 : index
    %c0_53 = arith.constant 0 : index
    %92 = vector.load %arg12[%c0_50, %c0_51, %c0_52, %c0_53] : memref<2x2x1x16xf32, #tpu.memory_space<vmem>>, vector<1x1x1x16xf32>
    %93 = vector.shape_cast %92 : vector<1x1x1x16xf32> to vector<1x16xf32>
    %94 = vector.broadcast %93 : vector<1x16xf32> to vector<16x16xf32>
    %95 = arith.addf %91, %94 : vector<16x16xf32>
    %cst_54 = arith.constant dense<0.000000e+00> : vector<16x16xf32>
    %96 = tpu.matmul %81, %88, %cst_54 {dimension_numbers = #tpu.dot_dimension_numbers<[1], [1], [0], [0], [0, 0, 1, 0], [], []>} : vector<16x16xf32>, vector<16x16xf32>, vector<16x16xf32> -> vector<16x16xf32>
    %cst_55 = arith.constant 2.500000e-01 : f32
    %97 = vector.broadcast %cst_55 : f32 to vector<16x16xf32>
    %98 = arith.mulf %96, %97 : vector<16x16xf32>
    %99 = arith.addf %98, %73 : vector<16x16xf32>
    %cst_56 = arith.constant dense<0xFF800000> : vector<16xf32>
    %100 = vector.multi_reduction <maximumf>, %99, %cst_56 [1] : vector<16x16xf32> to vector<16xf32>
    %101 = vector.shape_cast %100 : vector<16xf32> to vector<16x1xf32>
    %102 = vector.broadcast %101 : vector<16x1xf32> to vector<16x16xf32>
    %103 = arith.subf %99, %102 : vector<16x16xf32>
    %104 = math.exp %103 : vector<16x16xf32>
    %cst_57 = arith.constant dense<0.000000e+00> : vector<16xf32>
    %105 = vector.multi_reduction <add>, %104, %cst_57 [1] : vector<16x16xf32> to vector<16xf32>
    %106 = vector.shape_cast %105 : vector<16xf32> to vector<16x1xf32>
    %107 = vector.broadcast %106 : vector<16x1xf32> to vector<16x16xf32>
    %108 = arith.divf %104, %107 : vector<16x16xf32>
    %cst_58 = arith.constant dense<0.000000e+00> : vector<16x16xf32>
    %109 = tpu.matmul %108, %95, %cst_58 {dimension_numbers = #tpu.dot_dimension_numbers<[1], [0], [0], [1], [0, 0, 1, 1], [], []>} : vector<16x16xf32>, vector<16x16xf32>, vector<16x16xf32> -> vector<16x16xf32>
    %c0_59 = arith.constant 0 : index
    %c0_60 = arith.constant 0 : index
    %c0_61 = arith.constant 0 : index
    %c0_62 = arith.constant 0 : index
    %110 = vector.load %arg13[%c0_59, %c0_60, %c0_61, %c0_62] : memref<2x2x16x32xf32, #tpu.memory_space<vmem>>, vector<1x1x16x32xf32>
    %111 = vector.shape_cast %110 : vector<1x1x16x32xf32> to vector<16x32xf32>
    %cst_63 = arith.constant dense<0.000000e+00> : vector<16x32xf32>
    %112 = tpu.matmul %109, %111, %cst_63 {dimension_numbers = #tpu.dot_dimension_numbers<[1], [0], [0], [1], [0, 0, 1, 1], [], []>} : vector<16x16xf32>, vector<16x32xf32>, vector<16x32xf32> -> vector<16x32xf32>
    %113 = arith.addf %74, %112 : vector<16x32xf32>
    %c0_64 = arith.constant 0 : index
    %c1 = arith.constant 1 : index
    %c0_65 = arith.constant 0 : index
    %c0_66 = arith.constant 0 : index
    %114 = vector.load %arg7[%c0_64, %c1, %c0_65, %c0_66] : memref<2x2x32x16xf32, #tpu.memory_space<vmem>>, vector<1x1x32x16xf32>
    %115 = vector.shape_cast %114 : vector<1x1x32x16xf32> to vector<32x16xf32>
    %cst_67 = arith.constant dense<0.000000e+00> : vector<16x16xf32>
    %116 = tpu.matmul %38, %115, %cst_67 {dimension_numbers = #tpu.dot_dimension_numbers<[1], [0], [0], [1], [0, 0, 1, 1], [], []>} : vector<16x32xf32>, vector<32x16xf32>, vector<16x16xf32> -> vector<16x16xf32>
    %c0_68 = arith.constant 0 : index
    %c1_69 = arith.constant 1 : index
    %c0_70 = arith.constant 0 : index
    %c0_71 = arith.constant 0 : index
    %117 = vector.load %arg8[%c0_68, %c1_69, %c0_70, %c0_71] : memref<2x2x1x16xf32, #tpu.memory_space<vmem>>, vector<1x1x1x16xf32>
    %118 = vector.shape_cast %117 : vector<1x1x1x16xf32> to vector<1x16xf32>
    %119 = vector.broadcast %118 : vector<1x16xf32> to vector<16x16xf32>
    %120 = arith.addf %116, %119 : vector<16x16xf32>
    %c0_72 = arith.constant 0 : index
    %c1_73 = arith.constant 1 : index
    %c0_74 = arith.constant 0 : index
    %c0_75 = arith.constant 0 : index
    %121 = vector.load %arg9[%c0_72, %c1_73, %c0_74, %c0_75] : memref<2x2x32x16xf32, #tpu.memory_space<vmem>>, vector<1x1x32x16xf32>
    %122 = vector.shape_cast %121 : vector<1x1x32x16xf32> to vector<32x16xf32>
    %cst_76 = arith.constant dense<0.000000e+00> : vector<16x16xf32>
    %123 = tpu.matmul %38, %122, %cst_76 {dimension_numbers = #tpu.dot_dimension_numbers<[1], [0], [0], [1], [0, 0, 1, 1], [], []>} : vector<16x32xf32>, vector<32x16xf32>, vector<16x16xf32> -> vector<16x16xf32>
    %c0_77 = arith.constant 0 : index
    %c1_78 = arith.constant 1 : index
    %c0_79 = arith.constant 0 : index
    %c0_80 = arith.constant 0 : index
    %124 = vector.load %arg10[%c0_77, %c1_78, %c0_79, %c0_80] : memref<2x2x1x16xf32, #tpu.memory_space<vmem>>, vector<1x1x1x16xf32>
    %125 = vector.shape_cast %124 : vector<1x1x1x16xf32> to vector<1x16xf32>
    %126 = vector.broadcast %125 : vector<1x16xf32> to vector<16x16xf32>
    %127 = arith.addf %123, %126 : vector<16x16xf32>
    %c0_81 = arith.constant 0 : index
    %c1_82 = arith.constant 1 : index
    %c0_83 = arith.constant 0 : index
    %c0_84 = arith.constant 0 : index
    %128 = vector.load %arg11[%c0_81, %c1_82, %c0_83, %c0_84] : memref<2x2x32x16xf32, #tpu.memory_space<vmem>>, vector<1x1x32x16xf32>
    %129 = vector.shape_cast %128 : vector<1x1x32x16xf32> to vector<32x16xf32>
    %cst_85 = arith.constant dense<0.000000e+00> : vector<16x16xf32>
    %130 = tpu.matmul %38, %129, %cst_85 {dimension_numbers = #tpu.dot_dimension_numbers<[1], [0], [0], [1], [0, 0, 1, 1], [], []>} : vector<16x32xf32>, vector<32x16xf32>, vector<16x16xf32> -> vector<16x16xf32>
    %c0_86 = arith.constant 0 : index
    %c1_87 = arith.constant 1 : index
    %c0_88 = arith.constant 0 : index
    %c0_89 = arith.constant 0 : index
    %131 = vector.load %arg12[%c0_86, %c1_87, %c0_88, %c0_89] : memref<2x2x1x16xf32, #tpu.memory_space<vmem>>, vector<1x1x1x16xf32>
    %132 = vector.shape_cast %131 : vector<1x1x1x16xf32> to vector<1x16xf32>
    %133 = vector.broadcast %132 : vector<1x16xf32> to vector<16x16xf32>
    %134 = arith.addf %130, %133 : vector<16x16xf32>
    %cst_90 = arith.constant dense<0.000000e+00> : vector<16x16xf32>
    %135 = tpu.matmul %120, %127, %cst_90 {dimension_numbers = #tpu.dot_dimension_numbers<[1], [1], [0], [0], [0, 0, 1, 0], [], []>} : vector<16x16xf32>, vector<16x16xf32>, vector<16x16xf32> -> vector<16x16xf32>
    %cst_91 = arith.constant 2.500000e-01 : f32
    %136 = vector.broadcast %cst_91 : f32 to vector<16x16xf32>
    %137 = arith.mulf %135, %136 : vector<16x16xf32>
    %138 = arith.addf %137, %73 : vector<16x16xf32>
    %cst_92 = arith.constant dense<0xFF800000> : vector<16xf32>
    %139 = vector.multi_reduction <maximumf>, %138, %cst_92 [1] : vector<16x16xf32> to vector<16xf32>
    %140 = vector.shape_cast %139 : vector<16xf32> to vector<16x1xf32>
    %141 = vector.broadcast %140 : vector<16x1xf32> to vector<16x16xf32>
    %142 = arith.subf %138, %141 : vector<16x16xf32>
    %143 = math.exp %142 : vector<16x16xf32>
    %cst_93 = arith.constant dense<0.000000e+00> : vector<16xf32>
    %144 = vector.multi_reduction <add>, %143, %cst_93 [1] : vector<16x16xf32> to vector<16xf32>
    %145 = vector.shape_cast %144 : vector<16xf32> to vector<16x1xf32>
    %146 = vector.broadcast %145 : vector<16x1xf32> to vector<16x16xf32>
    %147 = arith.divf %143, %146 : vector<16x16xf32>
    %cst_94 = arith.constant dense<0.000000e+00> : vector<16x16xf32>
    %148 = tpu.matmul %147, %134, %cst_94 {dimension_numbers = #tpu.dot_dimension_numbers<[1], [0], [0], [1], [0, 0, 1, 1], [], []>} : vector<16x16xf32>, vector<16x16xf32>, vector<16x16xf32> -> vector<16x16xf32>
    %c0_95 = arith.constant 0 : index
    %c1_96 = arith.constant 1 : index
    %c0_97 = arith.constant 0 : index
    %c0_98 = arith.constant 0 : index
    %149 = vector.load %arg13[%c0_95, %c1_96, %c0_97, %c0_98] : memref<2x2x16x32xf32, #tpu.memory_space<vmem>>, vector<1x1x16x32xf32>
    %150 = vector.shape_cast %149 : vector<1x1x16x32xf32> to vector<16x32xf32>
    %cst_99 = arith.constant dense<0.000000e+00> : vector<16x32xf32>
    %151 = tpu.matmul %148, %150, %cst_99 {dimension_numbers = #tpu.dot_dimension_numbers<[1], [0], [0], [1], [0, 0, 1, 1], [], []>} : vector<16x16xf32>, vector<16x32xf32>, vector<16x32xf32> -> vector<16x32xf32>
    %152 = arith.addf %113, %151 : vector<16x32xf32>
    %c0_100 = arith.constant 0 : index
    %c0_101 = arith.constant 0 : index
    %c0_102 = arith.constant 0 : index
    %153 = vector.load %arg14[%c0_100, %c0_101, %c0_102] : memref<2x1x32xf32, #tpu.memory_space<vmem>>, vector<1x1x32xf32>
    %154 = vector.shape_cast %153 : vector<1x1x32xf32> to vector<1x32xf32>
    %155 = vector.broadcast %154 : vector<1x32xf32> to vector<16x32xf32>
    %156 = arith.addf %152, %155 : vector<16x32xf32>
    %157 = arith.addf %156, %38 : vector<16x32xf32>
    %c0_103 = arith.constant 0 : index
    %c0_104 = arith.constant 0 : index
    %c0_105 = arith.constant 0 : index
    %158 = vector.load %arg15[%c0_103, %c0_104, %c0_105] : memref<2x1x32xf32, #tpu.memory_space<vmem>>, vector<1x1x32xf32>
    %159 = vector.shape_cast %158 : vector<1x1x32xf32> to vector<1x32xf32>
    %c0_106 = arith.constant 0 : index
    %c0_107 = arith.constant 0 : index
    %c0_108 = arith.constant 0 : index
    %160 = vector.load %arg16[%c0_106, %c0_107, %c0_108] : memref<2x1x32xf32, #tpu.memory_space<vmem>>, vector<1x1x32xf32>
    %161 = vector.shape_cast %160 : vector<1x1x32xf32> to vector<1x32xf32>
    %cst_109 = arith.constant dense<0.000000e+00> : vector<16xf32>
    %162 = vector.multi_reduction <add>, %157, %cst_109 [1] : vector<16x32xf32> to vector<16xf32>
    %163 = vector.shape_cast %162 : vector<16xf32> to vector<16x1xf32>
    %cst_110 = arith.constant 3.200000e+01 : f32
    %164 = vector.broadcast %cst_110 : f32 to vector<16x1xf32>
    %165 = arith.divf %163, %164 : vector<16x1xf32>
    %166 = vector.broadcast %165 : vector<16x1xf32> to vector<16x32xf32>
    %167 = arith.subf %157, %166 : vector<16x32xf32>
    %168 = arith.mulf %167, %167 : vector<16x32xf32>
    %cst_111 = arith.constant dense<0.000000e+00> : vector<16xf32>
    %169 = vector.multi_reduction <add>, %168, %cst_111 [1] : vector<16x32xf32> to vector<16xf32>
    %170 = vector.shape_cast %169 : vector<16xf32> to vector<16x1xf32>
    %cst_112 = arith.constant 3.200000e+01 : f32
    %171 = vector.broadcast %cst_112 : f32 to vector<16x1xf32>
    %172 = arith.divf %170, %171 : vector<16x1xf32>
    %173 = vector.broadcast %165 : vector<16x1xf32> to vector<16x32xf32>
    %174 = arith.subf %157, %173 : vector<16x32xf32>
    %cst_113 = arith.constant 9.99999996E-13 : f32
    %175 = vector.broadcast %cst_113 : f32 to vector<16x1xf32>
    %176 = arith.addf %172, %175 : vector<16x1xf32>
    %177 = math.rsqrt %176 : vector<16x1xf32>
    %178 = vector.broadcast %177 : vector<16x1xf32> to vector<16x32xf32>
    %179 = arith.mulf %174, %178 : vector<16x32xf32>
    %180 = vector.broadcast %159 : vector<1x32xf32> to vector<16x32xf32>
    %181 = arith.mulf %179, %180 : vector<16x32xf32>
    %182 = vector.broadcast %161 : vector<1x32xf32> to vector<16x32xf32>
    %183 = arith.addf %181, %182 : vector<16x32xf32>
    %c0_114 = arith.constant 0 : index
    %c0_115 = arith.constant 0 : index
    %c0_116 = arith.constant 0 : index
    %184 = vector.load %arg17[%c0_114, %c0_115, %c0_116] : memref<2x32x64xf32, #tpu.memory_space<vmem>>, vector<1x32x64xf32>
    %185 = vector.shape_cast %184 : vector<1x32x64xf32> to vector<32x64xf32>
    %cst_117 = arith.constant dense<0.000000e+00> : vector<16x64xf32>
    %186 = tpu.matmul %183, %185, %cst_117 {dimension_numbers = #tpu.dot_dimension_numbers<[1], [0], [0], [1], [0, 0, 1, 1], [], []>} : vector<16x32xf32>, vector<32x64xf32>, vector<16x64xf32> -> vector<16x64xf32>
    %c0_118 = arith.constant 0 : index
    %c0_119 = arith.constant 0 : index
    %c0_120 = arith.constant 0 : index
    %187 = vector.load %arg18[%c0_118, %c0_119, %c0_120] : memref<2x1x64xf32, #tpu.memory_space<vmem>>, vector<1x1x64xf32>
    %188 = vector.shape_cast %187 : vector<1x1x64xf32> to vector<1x64xf32>
    %189 = vector.broadcast %188 : vector<1x64xf32> to vector<16x64xf32>
    %190 = arith.addf %186, %189 : vector<16x64xf32>
    %cst_121 = arith.constant 5.000000e-01 : f32
    %191 = vector.broadcast %cst_121 : f32 to vector<16x64xf32>
    %192 = arith.mulf %191, %190 : vector<16x64xf32>
    %cst_122 = arith.constant 0.707106769 : f32
    %193 = vector.broadcast %cst_122 : f32 to vector<16x64xf32>
    %194 = arith.mulf %190, %193 : vector<16x64xf32>
    %195 = math.absf %194 : vector<16x64xf32>
    %cst_123 = arith.constant 0.327591091 : f32
    %196 = vector.broadcast %cst_123 : f32 to vector<16x64xf32>
    %197 = arith.mulf %196, %195 : vector<16x64xf32>
    %cst_124 = arith.constant 1.000000e+00 : f32
    %198 = vector.broadcast %cst_124 : f32 to vector<16x64xf32>
    %199 = arith.addf %198, %197 : vector<16x64xf32>
    %cst_125 = arith.constant 1.000000e+00 : f32
    %200 = vector.broadcast %cst_125 : f32 to vector<16x64xf32>
    %201 = arith.divf %200, %199 : vector<16x64xf32>
    %cst_126 = arith.constant 1.06140542 : f32
    %202 = vector.broadcast %cst_126 : f32 to vector<16x64xf32>
    %203 = arith.mulf %202, %201 : vector<16x64xf32>
    %cst_127 = arith.constant -1.45315206 : f32
    %204 = vector.broadcast %cst_127 : f32 to vector<16x64xf32>
    %205 = arith.addf %203, %204 : vector<16x64xf32>
    %206 = arith.mulf %205, %201 : vector<16x64xf32>
    %cst_128 = arith.constant 1.42141378 : f32
    %207 = vector.broadcast %cst_128 : f32 to vector<16x64xf32>
    %208 = arith.addf %206, %207 : vector<16x64xf32>
    %209 = arith.mulf %208, %201 : vector<16x64xf32>
    %cst_129 = arith.constant -0.284496725 : f32
    %210 = vector.broadcast %cst_129 : f32 to vector<16x64xf32>
    %211 = arith.addf %209, %210 : vector<16x64xf32>
    %212 = arith.mulf %211, %201 : vector<16x64xf32>
    %cst_130 = arith.constant 0.254829586 : f32
    %213 = vector.broadcast %cst_130 : f32 to vector<16x64xf32>
    %214 = arith.addf %212, %213 : vector<16x64xf32>
    %215 = arith.mulf %214, %201 : vector<16x64xf32>
    %cst_131 = arith.constant 0.000000e+00 : f32
    %216 = vector.broadcast %cst_131 : f32 to vector<16x64xf32>
    %217 = arith.subf %216, %195 : vector<16x64xf32>
    %218 = arith.mulf %217, %195 : vector<16x64xf32>
    %219 = math.exp %218 : vector<16x64xf32>
    %220 = arith.mulf %215, %219 : vector<16x64xf32>
    %cst_132 = arith.constant 1.000000e+00 : f32
    %221 = vector.broadcast %cst_132 : f32 to vector<16x64xf32>
    %222 = arith.subf %221, %220 : vector<16x64xf32>
    %cst_133 = arith.constant 0.000000e+00 : f32
    %223 = vector.broadcast %cst_133 : f32 to vector<16x64xf32>
    %224 = arith.cmpf oge, %194, %223 : vector<16x64xf32>
    %cst_134 = arith.constant 0.000000e+00 : f32
    %225 = vector.broadcast %cst_134 : f32 to vector<16x64xf32>
    %226 = arith.subf %225, %222 : vector<16x64xf32>
    %227 = arith.select %224, %222, %226 : vector<16x64xi1>, vector<16x64xf32>
    %cst_135 = arith.constant 1.000000e+00 : f32
    %228 = vector.broadcast %cst_135 : f32 to vector<16x64xf32>
    %229 = arith.addf %228, %227 : vector<16x64xf32>
    %230 = arith.mulf %192, %229 : vector<16x64xf32>
    %c0_136 = arith.constant 0 : index
    %c0_137 = arith.constant 0 : index
    %c0_138 = arith.constant 0 : index
    %231 = vector.load %arg19[%c0_136, %c0_137, %c0_138] : memref<2x64x32xf32, #tpu.memory_space<vmem>>, vector<1x64x32xf32>
    %232 = vector.shape_cast %231 : vector<1x64x32xf32> to vector<64x32xf32>
    %cst_139 = arith.constant dense<0.000000e+00> : vector<16x32xf32>
    %233 = tpu.matmul %230, %232, %cst_139 {dimension_numbers = #tpu.dot_dimension_numbers<[1], [0], [0], [1], [0, 0, 1, 1], [], []>} : vector<16x64xf32>, vector<64x32xf32>, vector<16x32xf32> -> vector<16x32xf32>
    %c0_140 = arith.constant 0 : index
    %c0_141 = arith.constant 0 : index
    %c0_142 = arith.constant 0 : index
    %234 = vector.load %arg20[%c0_140, %c0_141, %c0_142] : memref<2x1x32xf32, #tpu.memory_space<vmem>>, vector<1x1x32xf32>
    %235 = vector.shape_cast %234 : vector<1x1x32xf32> to vector<1x32xf32>
    %236 = vector.broadcast %235 : vector<1x32xf32> to vector<16x32xf32>
    %237 = arith.addf %233, %236 : vector<16x32xf32>
    %238 = arith.addf %237, %183 : vector<16x32xf32>
    %c0_143 = arith.constant 0 : index
    %c0_144 = arith.constant 0 : index
    %c0_145 = arith.constant 0 : index
    %239 = vector.load %arg21[%c0_143, %c0_144, %c0_145] : memref<2x1x32xf32, #tpu.memory_space<vmem>>, vector<1x1x32xf32>
    %240 = vector.shape_cast %239 : vector<1x1x32xf32> to vector<1x32xf32>
    %c0_146 = arith.constant 0 : index
    %c0_147 = arith.constant 0 : index
    %c0_148 = arith.constant 0 : index
    %241 = vector.load %arg22[%c0_146, %c0_147, %c0_148] : memref<2x1x32xf32, #tpu.memory_space<vmem>>, vector<1x1x32xf32>
    %242 = vector.shape_cast %241 : vector<1x1x32xf32> to vector<1x32xf32>
    %cst_149 = arith.constant dense<0.000000e+00> : vector<16xf32>
    %243 = vector.multi_reduction <add>, %238, %cst_149 [1] : vector<16x32xf32> to vector<16xf32>
    %244 = vector.shape_cast %243 : vector<16xf32> to vector<16x1xf32>
    %cst_150 = arith.constant 3.200000e+01 : f32
    %245 = vector.broadcast %cst_150 : f32 to vector<16x1xf32>
    %246 = arith.divf %244, %245 : vector<16x1xf32>
    %247 = vector.broadcast %246 : vector<16x1xf32> to vector<16x32xf32>
    %248 = arith.subf %238, %247 : vector<16x32xf32>
    %249 = arith.mulf %248, %248 : vector<16x32xf32>
    %cst_151 = arith.constant dense<0.000000e+00> : vector<16xf32>
    %250 = vector.multi_reduction <add>, %249, %cst_151 [1] : vector<16x32xf32> to vector<16xf32>
    %251 = vector.shape_cast %250 : vector<16xf32> to vector<16x1xf32>
    %cst_152 = arith.constant 3.200000e+01 : f32
    %252 = vector.broadcast %cst_152 : f32 to vector<16x1xf32>
    %253 = arith.divf %251, %252 : vector<16x1xf32>
    %254 = vector.broadcast %246 : vector<16x1xf32> to vector<16x32xf32>
    %255 = arith.subf %238, %254 : vector<16x32xf32>
    %cst_153 = arith.constant 9.99999996E-13 : f32
    %256 = vector.broadcast %cst_153 : f32 to vector<16x1xf32>
    %257 = arith.addf %253, %256 : vector<16x1xf32>
    %258 = math.rsqrt %257 : vector<16x1xf32>
    %259 = vector.broadcast %258 : vector<16x1xf32> to vector<16x32xf32>
    %260 = arith.mulf %255, %259 : vector<16x32xf32>
    %261 = vector.broadcast %240 : vector<1x32xf32> to vector<16x32xf32>
    %262 = arith.mulf %260, %261 : vector<16x32xf32>
    %263 = vector.broadcast %242 : vector<1x32xf32> to vector<16x32xf32>
    %264 = arith.addf %262, %263 : vector<16x32xf32>
    %cst_154 = arith.constant 0.000000e+00 : f32
    %265 = vector.broadcast %cst_154 : f32 to vector<16x32xf32>
    %c1_155 = arith.constant 1 : index
    %c0_156 = arith.constant 0 : index
    %c0_157 = arith.constant 0 : index
    %c0_158 = arith.constant 0 : index
    %266 = vector.load %arg7[%c1_155, %c0_156, %c0_157, %c0_158] : memref<2x2x32x16xf32, #tpu.memory_space<vmem>>, vector<1x1x32x16xf32>
    %267 = vector.shape_cast %266 : vector<1x1x32x16xf32> to vector<32x16xf32>
    %cst_159 = arith.constant dense<0.000000e+00> : vector<16x16xf32>
    %268 = tpu.matmul %264, %267, %cst_159 {dimension_numbers = #tpu.dot_dimension_numbers<[1], [0], [0], [1], [0, 0, 1, 1], [], []>} : vector<16x32xf32>, vector<32x16xf32>, vector<16x16xf32> -> vector<16x16xf32>
    %c1_160 = arith.constant 1 : index
    %c0_161 = arith.constant 0 : index
    %c0_162 = arith.constant 0 : index
    %c0_163 = arith.constant 0 : index
    %269 = vector.load %arg8[%c1_160, %c0_161, %c0_162, %c0_163] : memref<2x2x1x16xf32, #tpu.memory_space<vmem>>, vector<1x1x1x16xf32>
    %270 = vector.shape_cast %269 : vector<1x1x1x16xf32> to vector<1x16xf32>
    %271 = vector.broadcast %270 : vector<1x16xf32> to vector<16x16xf32>
    %272 = arith.addf %268, %271 : vector<16x16xf32>
    %c1_164 = arith.constant 1 : index
    %c0_165 = arith.constant 0 : index
    %c0_166 = arith.constant 0 : index
    %c0_167 = arith.constant 0 : index
    %273 = vector.load %arg9[%c1_164, %c0_165, %c0_166, %c0_167] : memref<2x2x32x16xf32, #tpu.memory_space<vmem>>, vector<1x1x32x16xf32>
    %274 = vector.shape_cast %273 : vector<1x1x32x16xf32> to vector<32x16xf32>
    %cst_168 = arith.constant dense<0.000000e+00> : vector<16x16xf32>
    %275 = tpu.matmul %264, %274, %cst_168 {dimension_numbers = #tpu.dot_dimension_numbers<[1], [0], [0], [1], [0, 0, 1, 1], [], []>} : vector<16x32xf32>, vector<32x16xf32>, vector<16x16xf32> -> vector<16x16xf32>
    %c1_169 = arith.constant 1 : index
    %c0_170 = arith.constant 0 : index
    %c0_171 = arith.constant 0 : index
    %c0_172 = arith.constant 0 : index
    %276 = vector.load %arg10[%c1_169, %c0_170, %c0_171, %c0_172] : memref<2x2x1x16xf32, #tpu.memory_space<vmem>>, vector<1x1x1x16xf32>
    %277 = vector.shape_cast %276 : vector<1x1x1x16xf32> to vector<1x16xf32>
    %278 = vector.broadcast %277 : vector<1x16xf32> to vector<16x16xf32>
    %279 = arith.addf %275, %278 : vector<16x16xf32>
    %c1_173 = arith.constant 1 : index
    %c0_174 = arith.constant 0 : index
    %c0_175 = arith.constant 0 : index
    %c0_176 = arith.constant 0 : index
    %280 = vector.load %arg11[%c1_173, %c0_174, %c0_175, %c0_176] : memref<2x2x32x16xf32, #tpu.memory_space<vmem>>, vector<1x1x32x16xf32>
    %281 = vector.shape_cast %280 : vector<1x1x32x16xf32> to vector<32x16xf32>
    %cst_177 = arith.constant dense<0.000000e+00> : vector<16x16xf32>
    %282 = tpu.matmul %264, %281, %cst_177 {dimension_numbers = #tpu.dot_dimension_numbers<[1], [0], [0], [1], [0, 0, 1, 1], [], []>} : vector<16x32xf32>, vector<32x16xf32>, vector<16x16xf32> -> vector<16x16xf32>
    %c1_178 = arith.constant 1 : index
    %c0_179 = arith.constant 0 : index
    %c0_180 = arith.constant 0 : index
    %c0_181 = arith.constant 0 : index
    %283 = vector.load %arg12[%c1_178, %c0_179, %c0_180, %c0_181] : memref<2x2x1x16xf32, #tpu.memory_space<vmem>>, vector<1x1x1x16xf32>
    %284 = vector.shape_cast %283 : vector<1x1x1x16xf32> to vector<1x16xf32>
    %285 = vector.broadcast %284 : vector<1x16xf32> to vector<16x16xf32>
    %286 = arith.addf %282, %285 : vector<16x16xf32>
    %cst_182 = arith.constant dense<0.000000e+00> : vector<16x16xf32>
    %287 = tpu.matmul %272, %279, %cst_182 {dimension_numbers = #tpu.dot_dimension_numbers<[1], [1], [0], [0], [0, 0, 1, 0], [], []>} : vector<16x16xf32>, vector<16x16xf32>, vector<16x16xf32> -> vector<16x16xf32>
    %cst_183 = arith.constant 2.500000e-01 : f32
    %288 = vector.broadcast %cst_183 : f32 to vector<16x16xf32>
    %289 = arith.mulf %287, %288 : vector<16x16xf32>
    %290 = arith.addf %289, %73 : vector<16x16xf32>
    %cst_184 = arith.constant dense<0xFF800000> : vector<16xf32>
    %291 = vector.multi_reduction <maximumf>, %290, %cst_184 [1] : vector<16x16xf32> to vector<16xf32>
    %292 = vector.shape_cast %291 : vector<16xf32> to vector<16x1xf32>
    %293 = vector.broadcast %292 : vector<16x1xf32> to vector<16x16xf32>
    %294 = arith.subf %290, %293 : vector<16x16xf32>
    %295 = math.exp %294 : vector<16x16xf32>
    %cst_185 = arith.constant dense<0.000000e+00> : vector<16xf32>
    %296 = vector.multi_reduction <add>, %295, %cst_185 [1] : vector<16x16xf32> to vector<16xf32>
    %297 = vector.shape_cast %296 : vector<16xf32> to vector<16x1xf32>
    %298 = vector.broadcast %297 : vector<16x1xf32> to vector<16x16xf32>
    %299 = arith.divf %295, %298 : vector<16x16xf32>
    %cst_186 = arith.constant dense<0.000000e+00> : vector<16x16xf32>
    %300 = tpu.matmul %299, %286, %cst_186 {dimension_numbers = #tpu.dot_dimension_numbers<[1], [0], [0], [1], [0, 0, 1, 1], [], []>} : vector<16x16xf32>, vector<16x16xf32>, vector<16x16xf32> -> vector<16x16xf32>
    %c1_187 = arith.constant 1 : index
    %c0_188 = arith.constant 0 : index
    %c0_189 = arith.constant 0 : index
    %c0_190 = arith.constant 0 : index
    %301 = vector.load %arg13[%c1_187, %c0_188, %c0_189, %c0_190] : memref<2x2x16x32xf32, #tpu.memory_space<vmem>>, vector<1x1x16x32xf32>
    %302 = vector.shape_cast %301 : vector<1x1x16x32xf32> to vector<16x32xf32>
    %cst_191 = arith.constant dense<0.000000e+00> : vector<16x32xf32>
    %303 = tpu.matmul %300, %302, %cst_191 {dimension_numbers = #tpu.dot_dimension_numbers<[1], [0], [0], [1], [0, 0, 1, 1], [], []>} : vector<16x16xf32>, vector<16x32xf32>, vector<16x32xf32> -> vector<16x32xf32>
    %304 = arith.addf %265, %303 : vector<16x32xf32>
    %c1_192 = arith.constant 1 : index
    %c1_193 = arith.constant 1 : index
    %c0_194 = arith.constant 0 : index
    %c0_195 = arith.constant 0 : index
    %305 = vector.load %arg7[%c1_192, %c1_193, %c0_194, %c0_195] : memref<2x2x32x16xf32, #tpu.memory_space<vmem>>, vector<1x1x32x16xf32>
    %306 = vector.shape_cast %305 : vector<1x1x32x16xf32> to vector<32x16xf32>
    %cst_196 = arith.constant dense<0.000000e+00> : vector<16x16xf32>
    %307 = tpu.matmul %264, %306, %cst_196 {dimension_numbers = #tpu.dot_dimension_numbers<[1], [0], [0], [1], [0, 0, 1, 1], [], []>} : vector<16x32xf32>, vector<32x16xf32>, vector<16x16xf32> -> vector<16x16xf32>
    %c1_197 = arith.constant 1 : index
    %c1_198 = arith.constant 1 : index
    %c0_199 = arith.constant 0 : index
    %c0_200 = arith.constant 0 : index
    %308 = vector.load %arg8[%c1_197, %c1_198, %c0_199, %c0_200] : memref<2x2x1x16xf32, #tpu.memory_space<vmem>>, vector<1x1x1x16xf32>
    %309 = vector.shape_cast %308 : vector<1x1x1x16xf32> to vector<1x16xf32>
    %310 = vector.broadcast %309 : vector<1x16xf32> to vector<16x16xf32>
    %311 = arith.addf %307, %310 : vector<16x16xf32>
    %c1_201 = arith.constant 1 : index
    %c1_202 = arith.constant 1 : index
    %c0_203 = arith.constant 0 : index
    %c0_204 = arith.constant 0 : index
    %312 = vector.load %arg9[%c1_201, %c1_202, %c0_203, %c0_204] : memref<2x2x32x16xf32, #tpu.memory_space<vmem>>, vector<1x1x32x16xf32>
    %313 = vector.shape_cast %312 : vector<1x1x32x16xf32> to vector<32x16xf32>
    %cst_205 = arith.constant dense<0.000000e+00> : vector<16x16xf32>
    %314 = tpu.matmul %264, %313, %cst_205 {dimension_numbers = #tpu.dot_dimension_numbers<[1], [0], [0], [1], [0, 0, 1, 1], [], []>} : vector<16x32xf32>, vector<32x16xf32>, vector<16x16xf32> -> vector<16x16xf32>
    %c1_206 = arith.constant 1 : index
    %c1_207 = arith.constant 1 : index
    %c0_208 = arith.constant 0 : index
    %c0_209 = arith.constant 0 : index
    %315 = vector.load %arg10[%c1_206, %c1_207, %c0_208, %c0_209] : memref<2x2x1x16xf32, #tpu.memory_space<vmem>>, vector<1x1x1x16xf32>
    %316 = vector.shape_cast %315 : vector<1x1x1x16xf32> to vector<1x16xf32>
    %317 = vector.broadcast %316 : vector<1x16xf32> to vector<16x16xf32>
    %318 = arith.addf %314, %317 : vector<16x16xf32>
    %c1_210 = arith.constant 1 : index
    %c1_211 = arith.constant 1 : index
    %c0_212 = arith.constant 0 : index
    %c0_213 = arith.constant 0 : index
    %319 = vector.load %arg11[%c1_210, %c1_211, %c0_212, %c0_213] : memref<2x2x32x16xf32, #tpu.memory_space<vmem>>, vector<1x1x32x16xf32>
    %320 = vector.shape_cast %319 : vector<1x1x32x16xf32> to vector<32x16xf32>
    %cst_214 = arith.constant dense<0.000000e+00> : vector<16x16xf32>
    %321 = tpu.matmul %264, %320, %cst_214 {dimension_numbers = #tpu.dot_dimension_numbers<[1], [0], [0], [1], [0, 0, 1, 1], [], []>} : vector<16x32xf32>, vector<32x16xf32>, vector<16x16xf32> -> vector<16x16xf32>
    %c1_215 = arith.constant 1 : index
    %c1_216 = arith.constant 1 : index
    %c0_217 = arith.constant 0 : index
    %c0_218 = arith.constant 0 : index
    %322 = vector.load %arg12[%c1_215, %c1_216, %c0_217, %c0_218] : memref<2x2x1x16xf32, #tpu.memory_space<vmem>>, vector<1x1x1x16xf32>
    %323 = vector.shape_cast %322 : vector<1x1x1x16xf32> to vector<1x16xf32>
    %324 = vector.broadcast %323 : vector<1x16xf32> to vector<16x16xf32>
    %325 = arith.addf %321, %324 : vector<16x16xf32>
    %cst_219 = arith.constant dense<0.000000e+00> : vector<16x16xf32>
    %326 = tpu.matmul %311, %318, %cst_219 {dimension_numbers = #tpu.dot_dimension_numbers<[1], [1], [0], [0], [0, 0, 1, 0], [], []>} : vector<16x16xf32>, vector<16x16xf32>, vector<16x16xf32> -> vector<16x16xf32>
    %cst_220 = arith.constant 2.500000e-01 : f32
    %327 = vector.broadcast %cst_220 : f32 to vector<16x16xf32>
    %328 = arith.mulf %326, %327 : vector<16x16xf32>
    %329 = arith.addf %328, %73 : vector<16x16xf32>
    %cst_221 = arith.constant dense<0xFF800000> : vector<16xf32>
    %330 = vector.multi_reduction <maximumf>, %329, %cst_221 [1] : vector<16x16xf32> to vector<16xf32>
    %331 = vector.shape_cast %330 : vector<16xf32> to vector<16x1xf32>
    %332 = vector.broadcast %331 : vector<16x1xf32> to vector<16x16xf32>
    %333 = arith.subf %329, %332 : vector<16x16xf32>
    %334 = math.exp %333 : vector<16x16xf32>
    %cst_222 = arith.constant dense<0.000000e+00> : vector<16xf32>
    %335 = vector.multi_reduction <add>, %334, %cst_222 [1] : vector<16x16xf32> to vector<16xf32>
    %336 = vector.shape_cast %335 : vector<16xf32> to vector<16x1xf32>
    %337 = vector.broadcast %336 : vector<16x1xf32> to vector<16x16xf32>
    %338 = arith.divf %334, %337 : vector<16x16xf32>
    %cst_223 = arith.constant dense<0.000000e+00> : vector<16x16xf32>
    %339 = tpu.matmul %338, %325, %cst_223 {dimension_numbers = #tpu.dot_dimension_numbers<[1], [0], [0], [1], [0, 0, 1, 1], [], []>} : vector<16x16xf32>, vector<16x16xf32>, vector<16x16xf32> -> vector<16x16xf32>
    %c1_224 = arith.constant 1 : index
    %c1_225 = arith.constant 1 : index
    %c0_226 = arith.constant 0 : index
    %c0_227 = arith.constant 0 : index
    %340 = vector.load %arg13[%c1_224, %c1_225, %c0_226, %c0_227] : memref<2x2x16x32xf32, #tpu.memory_space<vmem>>, vector<1x1x16x32xf32>
    %341 = vector.shape_cast %340 : vector<1x1x16x32xf32> to vector<16x32xf32>
    %cst_228 = arith.constant dense<0.000000e+00> : vector<16x32xf32>
    %342 = tpu.matmul %339, %341, %cst_228 {dimension_numbers = #tpu.dot_dimension_numbers<[1], [0], [0], [1], [0, 0, 1, 1], [], []>} : vector<16x16xf32>, vector<16x32xf32>, vector<16x32xf32> -> vector<16x32xf32>
    %343 = arith.addf %304, %342 : vector<16x32xf32>
    %c1_229 = arith.constant 1 : index
    %c0_230 = arith.constant 0 : index
    %c0_231 = arith.constant 0 : index
    %344 = vector.load %arg14[%c1_229, %c0_230, %c0_231] : memref<2x1x32xf32, #tpu.memory_space<vmem>>, vector<1x1x32xf32>
    %345 = vector.shape_cast %344 : vector<1x1x32xf32> to vector<1x32xf32>
    %346 = vector.broadcast %345 : vector<1x32xf32> to vector<16x32xf32>
    %347 = arith.addf %343, %346 : vector<16x32xf32>
    %348 = arith.addf %347, %264 : vector<16x32xf32>
    %c1_232 = arith.constant 1 : index
    %c0_233 = arith.constant 0 : index
    %c0_234 = arith.constant 0 : index
    %349 = vector.load %arg15[%c1_232, %c0_233, %c0_234] : memref<2x1x32xf32, #tpu.memory_space<vmem>>, vector<1x1x32xf32>
    %350 = vector.shape_cast %349 : vector<1x1x32xf32> to vector<1x32xf32>
    %c1_235 = arith.constant 1 : index
    %c0_236 = arith.constant 0 : index
    %c0_237 = arith.constant 0 : index
    %351 = vector.load %arg16[%c1_235, %c0_236, %c0_237] : memref<2x1x32xf32, #tpu.memory_space<vmem>>, vector<1x1x32xf32>
    %352 = vector.shape_cast %351 : vector<1x1x32xf32> to vector<1x32xf32>
    %cst_238 = arith.constant dense<0.000000e+00> : vector<16xf32>
    %353 = vector.multi_reduction <add>, %348, %cst_238 [1] : vector<16x32xf32> to vector<16xf32>
    %354 = vector.shape_cast %353 : vector<16xf32> to vector<16x1xf32>
    %cst_239 = arith.constant 3.200000e+01 : f32
    %355 = vector.broadcast %cst_239 : f32 to vector<16x1xf32>
    %356 = arith.divf %354, %355 : vector<16x1xf32>
    %357 = vector.broadcast %356 : vector<16x1xf32> to vector<16x32xf32>
    %358 = arith.subf %348, %357 : vector<16x32xf32>
    %359 = arith.mulf %358, %358 : vector<16x32xf32>
    %cst_240 = arith.constant dense<0.000000e+00> : vector<16xf32>
    %360 = vector.multi_reduction <add>, %359, %cst_240 [1] : vector<16x32xf32> to vector<16xf32>
    %361 = vector.shape_cast %360 : vector<16xf32> to vector<16x1xf32>
    %cst_241 = arith.constant 3.200000e+01 : f32
    %362 = vector.broadcast %cst_241 : f32 to vector<16x1xf32>
    %363 = arith.divf %361, %362 : vector<16x1xf32>
    %364 = vector.broadcast %356 : vector<16x1xf32> to vector<16x32xf32>
    %365 = arith.subf %348, %364 : vector<16x32xf32>
    %cst_242 = arith.constant 9.99999996E-13 : f32
    %366 = vector.broadcast %cst_242 : f32 to vector<16x1xf32>
    %367 = arith.addf %363, %366 : vector<16x1xf32>
    %368 = math.rsqrt %367 : vector<16x1xf32>
    %369 = vector.broadcast %368 : vector<16x1xf32> to vector<16x32xf32>
    %370 = arith.mulf %365, %369 : vector<16x32xf32>
    %371 = vector.broadcast %350 : vector<1x32xf32> to vector<16x32xf32>
    %372 = arith.mulf %370, %371 : vector<16x32xf32>
    %373 = vector.broadcast %352 : vector<1x32xf32> to vector<16x32xf32>
    %374 = arith.addf %372, %373 : vector<16x32xf32>
    %c1_243 = arith.constant 1 : index
    %c0_244 = arith.constant 0 : index
    %c0_245 = arith.constant 0 : index
    %375 = vector.load %arg17[%c1_243, %c0_244, %c0_245] : memref<2x32x64xf32, #tpu.memory_space<vmem>>, vector<1x32x64xf32>
    %376 = vector.shape_cast %375 : vector<1x32x64xf32> to vector<32x64xf32>
    %cst_246 = arith.constant dense<0.000000e+00> : vector<16x64xf32>
    %377 = tpu.matmul %374, %376, %cst_246 {dimension_numbers = #tpu.dot_dimension_numbers<[1], [0], [0], [1], [0, 0, 1, 1], [], []>} : vector<16x32xf32>, vector<32x64xf32>, vector<16x64xf32> -> vector<16x64xf32>
    %c1_247 = arith.constant 1 : index
    %c0_248 = arith.constant 0 : index
    %c0_249 = arith.constant 0 : index
    %378 = vector.load %arg18[%c1_247, %c0_248, %c0_249] : memref<2x1x64xf32, #tpu.memory_space<vmem>>, vector<1x1x64xf32>
    %379 = vector.shape_cast %378 : vector<1x1x64xf32> to vector<1x64xf32>
    %380 = vector.broadcast %379 : vector<1x64xf32> to vector<16x64xf32>
    %381 = arith.addf %377, %380 : vector<16x64xf32>
    %cst_250 = arith.constant 5.000000e-01 : f32
    %382 = vector.broadcast %cst_250 : f32 to vector<16x64xf32>
    %383 = arith.mulf %382, %381 : vector<16x64xf32>
    %cst_251 = arith.constant 0.707106769 : f32
    %384 = vector.broadcast %cst_251 : f32 to vector<16x64xf32>
    %385 = arith.mulf %381, %384 : vector<16x64xf32>
    %386 = math.absf %385 : vector<16x64xf32>
    %cst_252 = arith.constant 0.327591091 : f32
    %387 = vector.broadcast %cst_252 : f32 to vector<16x64xf32>
    %388 = arith.mulf %387, %386 : vector<16x64xf32>
    %cst_253 = arith.constant 1.000000e+00 : f32
    %389 = vector.broadcast %cst_253 : f32 to vector<16x64xf32>
    %390 = arith.addf %389, %388 : vector<16x64xf32>
    %cst_254 = arith.constant 1.000000e+00 : f32
    %391 = vector.broadcast %cst_254 : f32 to vector<16x64xf32>
    %392 = arith.divf %391, %390 : vector<16x64xf32>
    %cst_255 = arith.constant 1.06140542 : f32
    %393 = vector.broadcast %cst_255 : f32 to vector<16x64xf32>
    %394 = arith.mulf %393, %392 : vector<16x64xf32>
    %cst_256 = arith.constant -1.45315206 : f32
    %395 = vector.broadcast %cst_256 : f32 to vector<16x64xf32>
    %396 = arith.addf %394, %395 : vector<16x64xf32>
    %397 = arith.mulf %396, %392 : vector<16x64xf32>
    %cst_257 = arith.constant 1.42141378 : f32
    %398 = vector.broadcast %cst_257 : f32 to vector<16x64xf32>
    %399 = arith.addf %397, %398 : vector<16x64xf32>
    %400 = arith.mulf %399, %392 : vector<16x64xf32>
    %cst_258 = arith.constant -0.284496725 : f32
    %401 = vector.broadcast %cst_258 : f32 to vector<16x64xf32>
    %402 = arith.addf %400, %401 : vector<16x64xf32>
    %403 = arith.mulf %402, %392 : vector<16x64xf32>
    %cst_259 = arith.constant 0.254829586 : f32
    %404 = vector.broadcast %cst_259 : f32 to vector<16x64xf32>
    %405 = arith.addf %403, %404 : vector<16x64xf32>
    %406 = arith.mulf %405, %392 : vector<16x64xf32>
    %cst_260 = arith.constant 0.000000e+00 : f32
    %407 = vector.broadcast %cst_260 : f32 to vector<16x64xf32>
    %408 = arith.subf %407, %386 : vector<16x64xf32>
    %409 = arith.mulf %408, %386 : vector<16x64xf32>
    %410 = math.exp %409 : vector<16x64xf32>
    %411 = arith.mulf %406, %410 : vector<16x64xf32>
    %cst_261 = arith.constant 1.000000e+00 : f32
    %412 = vector.broadcast %cst_261 : f32 to vector<16x64xf32>
    %413 = arith.subf %412, %411 : vector<16x64xf32>
    %cst_262 = arith.constant 0.000000e+00 : f32
    %414 = vector.broadcast %cst_262 : f32 to vector<16x64xf32>
    %415 = arith.cmpf oge, %385, %414 : vector<16x64xf32>
    %cst_263 = arith.constant 0.000000e+00 : f32
    %416 = vector.broadcast %cst_263 : f32 to vector<16x64xf32>
    %417 = arith.subf %416, %413 : vector<16x64xf32>
    %418 = arith.select %415, %413, %417 : vector<16x64xi1>, vector<16x64xf32>
    %cst_264 = arith.constant 1.000000e+00 : f32
    %419 = vector.broadcast %cst_264 : f32 to vector<16x64xf32>
    %420 = arith.addf %419, %418 : vector<16x64xf32>
    %421 = arith.mulf %383, %420 : vector<16x64xf32>
    %c1_265 = arith.constant 1 : index
    %c0_266 = arith.constant 0 : index
    %c0_267 = arith.constant 0 : index
    %422 = vector.load %arg19[%c1_265, %c0_266, %c0_267] : memref<2x64x32xf32, #tpu.memory_space<vmem>>, vector<1x64x32xf32>
    %423 = vector.shape_cast %422 : vector<1x64x32xf32> to vector<64x32xf32>
    %cst_268 = arith.constant dense<0.000000e+00> : vector<16x32xf32>
    %424 = tpu.matmul %421, %423, %cst_268 {dimension_numbers = #tpu.dot_dimension_numbers<[1], [0], [0], [1], [0, 0, 1, 1], [], []>} : vector<16x64xf32>, vector<64x32xf32>, vector<16x32xf32> -> vector<16x32xf32>
    %c1_269 = arith.constant 1 : index
    %c0_270 = arith.constant 0 : index
    %c0_271 = arith.constant 0 : index
    %425 = vector.load %arg20[%c1_269, %c0_270, %c0_271] : memref<2x1x32xf32, #tpu.memory_space<vmem>>, vector<1x1x32xf32>
    %426 = vector.shape_cast %425 : vector<1x1x32xf32> to vector<1x32xf32>
    %427 = vector.broadcast %426 : vector<1x32xf32> to vector<16x32xf32>
    %428 = arith.addf %424, %427 : vector<16x32xf32>
    %429 = arith.addf %428, %374 : vector<16x32xf32>
    %c1_272 = arith.constant 1 : index
    %c0_273 = arith.constant 0 : index
    %c0_274 = arith.constant 0 : index
    %430 = vector.load %arg21[%c1_272, %c0_273, %c0_274] : memref<2x1x32xf32, #tpu.memory_space<vmem>>, vector<1x1x32xf32>
    %431 = vector.shape_cast %430 : vector<1x1x32xf32> to vector<1x32xf32>
    %c1_275 = arith.constant 1 : index
    %c0_276 = arith.constant 0 : index
    %c0_277 = arith.constant 0 : index
    %432 = vector.load %arg22[%c1_275, %c0_276, %c0_277] : memref<2x1x32xf32, #tpu.memory_space<vmem>>, vector<1x1x32xf32>
    %433 = vector.shape_cast %432 : vector<1x1x32xf32> to vector<1x32xf32>
    %cst_278 = arith.constant dense<0.000000e+00> : vector<16xf32>
    %434 = vector.multi_reduction <add>, %429, %cst_278 [1] : vector<16x32xf32> to vector<16xf32>
    %435 = vector.shape_cast %434 : vector<16xf32> to vector<16x1xf32>
    %cst_279 = arith.constant 3.200000e+01 : f32
    %436 = vector.broadcast %cst_279 : f32 to vector<16x1xf32>
    %437 = arith.divf %435, %436 : vector<16x1xf32>
    %438 = vector.broadcast %437 : vector<16x1xf32> to vector<16x32xf32>
    %439 = arith.subf %429, %438 : vector<16x32xf32>
    %440 = arith.mulf %439, %439 : vector<16x32xf32>
    %cst_280 = arith.constant dense<0.000000e+00> : vector<16xf32>
    %441 = vector.multi_reduction <add>, %440, %cst_280 [1] : vector<16x32xf32> to vector<16xf32>
    %442 = vector.shape_cast %441 : vector<16xf32> to vector<16x1xf32>
    %cst_281 = arith.constant 3.200000e+01 : f32
    %443 = vector.broadcast %cst_281 : f32 to vector<16x1xf32>
    %444 = arith.divf %442, %443 : vector<16x1xf32>
    %445 = vector.broadcast %437 : vector<16x1xf32> to vector<16x32xf32>
    %446 = arith.subf %429, %445 : vector<16x32xf32>
    %cst_282 = arith.constant 9.99999996E-13 : f32
    %447 = vector.broadcast %cst_282 : f32 to vector<16x1xf32>
    %448 = arith.addf %444, %447 : vector<16x1xf32>
    %449 = math.rsqrt %448 : vector<16x1xf32>
    %450 = vector.broadcast %449 : vector<16x1xf32> to vector<16x32xf32>
    %451 = arith.mulf %446, %450 : vector<16x32xf32>
    %452 = vector.broadcast %431 : vector<1x32xf32> to vector<16x32xf32>
    %453 = arith.mulf %451, %452 : vector<16x32xf32>
    %454 = vector.broadcast %433 : vector<1x32xf32> to vector<16x32xf32>
    %455 = arith.addf %453, %454 : vector<16x32xf32>
    %c0_283 = arith.constant 0 : index
    %c0_284 = arith.constant 0 : index
    %456 = vector.load %arg23[%c0_283, %c0_284] : memref<32x128xf32, #tpu.memory_space<vmem>>, vector<32x128xf32>
    %cst_285 = arith.constant dense<0.000000e+00> : vector<16x128xf32>
    %457 = tpu.matmul %455, %456, %cst_285 {dimension_numbers = #tpu.dot_dimension_numbers<[1], [0], [0], [1], [0, 0, 1, 1], [], []>} : vector<16x32xf32>, vector<32x128xf32>, vector<16x128xf32> -> vector<16x128xf32>
    %c0_286 = arith.constant 0 : index
    %c0_287 = arith.constant 0 : index
    %458 = vector.load %arg24[%c0_286, %c0_287] : memref<1x128xf32, #tpu.memory_space<vmem>>, vector<1x128xf32>
    %459 = vector.broadcast %458 : vector<1x128xf32> to vector<16x128xf32>
    %460 = arith.addf %457, %459 : vector<16x128xf32>
    %c0_288 = arith.constant 0 : index
    %c0_289 = arith.constant 0 : index
    %461 = vector.load %arg25[%c0_288, %c0_289] : memref<16x128xf32, #tpu.memory_space<vmem>>, vector<16x128xf32>
    tpu.vector_store %arg25[%c0_288, %c0_289], %460 {strides = array<i32>} : memref<16x128xf32, #tpu.memory_space<vmem>>, vector<16x128xf32>,
    return
  }
}

</mosaic_0001>

<llo_original>
// kernel: sbert_punc_case_forward.1
$region0: #{sbert_punc_case_forward.1}
  #allocation0 [shape = 'u32[]', space=smem, size = 0x4, offset = 0x4, fixed_abs, tag = 'smem constant byte address 0x4 - core index']
  #allocation1 [shape = 'u32[144,128]{1,0:T(1,128)}', space=vmem, size = 0x12000, scoped, tag = 'internal scratch']
  %s0 = inlined_call_operand.vmem [shape: s32[16,1], index: 0, kind: input, shape index: {}]
  %s1 = inlined_call_operand.vmem [shape: s32[1,16], index: 1, kind: input, shape index: {}]
  %s2 = inlined_call_operand.vmem [shape: f32[128,32], index: 2, kind: input, shape index: {}]
  %s3 = inlined_call_operand.vmem [shape: f32[64,32], index: 3, kind: input, shape index: {}]
  %s4 = inlined_call_operand.vmem [shape: f32[2,32], index: 4, kind: input, shape index: {}]
  %s5 = inlined_call_operand.vmem [shape: f32[1,32], index: 5, kind: input, shape index: {}]
  %s6 = inlined_call_operand.vmem [shape: f32[1,32], index: 6, kind: input, shape index: {}]
  %s7 = inlined_call_operand.vmem [shape: f32[2,2,32,16], index: 7, kind: input, shape index: {}]
  %s8 = inlined_call_operand.vmem [shape: f32[2,2,1,16], index: 8, kind: input, shape index: {}]
  %s9 = inlined_call_operand.vmem [shape: f32[2,2,32,16], index: 9, kind: input, shape index: {}]
  %s10 = inlined_call_operand.vmem [shape: f32[2,2,1,16], index: 10, kind: input, shape index: {}]
  %s11 = inlined_call_operand.vmem [shape: f32[2,2,32,16], index: 11, kind: input, shape index: {}]
  %s12 = inlined_call_operand.vmem [shape: f32[2,2,1,16], index: 12, kind: input, shape index: {}]
  %s13 = inlined_call_operand.vmem [shape: f32[2,2,16,32], index: 13, kind: input, shape index: {}]
  %s14 = inlined_call_operand.vmem [shape: f32[2,1,32], index: 14, kind: input, shape index: {}]
  %s15 = inlined_call_operand.vmem [shape: f32[2,1,32], index: 15, kind: input, shape index: {}]
  %s16 = inlined_call_operand.vmem [shape: f32[2,1,32], index: 16, kind: input, shape index: {}]
  %s17 = inlined_call_operand.vmem [shape: f32[2,32,64], index: 17, kind: input, shape index: {}]
  %s18 = inlined_call_operand.vmem [shape: f32[2,1,64], index: 18, kind: input, shape index: {}]
  %s19 = inlined_call_operand.vmem [shape: f32[2,64,32], index: 19, kind: input, shape index: {}]
  %s20 = inlined_call_operand.vmem [shape: f32[2,1,32], index: 20, kind: input, shape index: {}]
  %s21 = inlined_call_operand.vmem [shape: f32[2,1,32], index: 21, kind: input, shape index: {}]
  %s22 = inlined_call_operand.vmem [shape: f32[2,1,32], index: 22, kind: input, shape index: {}]
  %s23 = inlined_call_operand.vmem [shape: f32[32,128], index: 23, kind: input, shape index: {}]
  %s24 = inlined_call_operand.vmem [shape: f32[1,128], index: 24, kind: input, shape index: {}]
  %s25 = inlined_call_operand.vmem [shape: f32[16,128], index: 25, kind: output, shape index: {}]
  %s26 = sld [smem:[#allocation0]]
  $region110: #{sbert_punc_case_forward.1} parent=0
    _
  %s28 = ssub.s32 1, %s26
  %s29 = scalar_select 0, %s28, %s26
  // Predicated region
  $region2: #{sbert_punc_case_forward.1} parent=0 // pred_check
    _
  $region3: #{sbert_punc_case_forward.1} parent=0 // pred_check_branch
    %31 = sbr.rel (0) target = $region5
  $region4: #{sbert_punc_case_forward.1} parent=0 // pred_region
    _
  $region5: #{sbert_punc_case_forward.1} parent=0 // pred_fallthru
    _
  // Predicated region
  $region6: #{sbert_punc_case_forward.1} parent=0 // pred_check
    _
  $region7: #{sbert_punc_case_forward.1} parent=0 // pred_check_branch
    %33 = sbr.rel (0) target = $region9
  $region8: #{sbert_punc_case_forward.1} parent=0 // pred_region
    _
  $region9: #{sbert_punc_case_forward.1} parent=0 // pred_fallthru
    _
  // Predicated region
  $region10: #{sbert_punc_case_forward.1} parent=0 // pred_check
    _
  $region11: #{sbert_punc_case_forward.1} parent=0 // pred_check_branch
    %35 = sbr.rel (0) target = $region13
  $region12: #{sbert_punc_case_forward.1} parent=0 // pred_region
    _
  $region13: #{sbert_punc_case_forward.1} parent=0 // pred_fallthru
    _
  // Predicated region
  $region14: #{sbert_punc_case_forward.1} parent=0 // pred_check
    _
  $region15: #{sbert_punc_case_forward.1} parent=0 // pred_check_branch
    %37 = sbr.rel (0) target = $region17
  $region16: #{sbert_punc_case_forward.1} parent=0 // pred_region
    _
  $region17: #{sbert_punc_case_forward.1} parent=0 // pred_fallthru
    _
  // Predicated region
  $region18: #{sbert_punc_case_forward.1} parent=0 // pred_check
    _
  $region19: #{sbert_punc_case_forward.1} parent=0 // pred_check_branch
    %39 = sbr.rel (0) target = $region21
  $region20: #{sbert_punc_case_forward.1} parent=0 // pred_region
    _
  $region21: #{sbert_punc_case_forward.1} parent=0 // pred_fallthru
    _
  // Predicated region
  $region22: #{sbert_punc_case_forward.1} parent=0 // pred_check
    _
  $region23: #{sbert_punc_case_forward.1} parent=0 // pred_check_branch
    %41 = sbr.rel (0) target = $region25
  $region24: #{sbert_punc_case_forward.1} parent=0 // pred_region
    _
  $region25: #{sbert_punc_case_forward.1} parent=0 // pred_fallthru
    _
  // Predicated region
  $region26: #{sbert_punc_case_forward.1} parent=0 // pred_check
    _
  $region27: #{sbert_punc_case_forward.1} parent=0 // pred_check_branch
    %43 = sbr.rel (0) target = $region29
  $region28: #{sbert_punc_case_forward.1} parent=0 // pred_region
    _
  $region29: #{sbert_punc_case_forward.1} parent=0 // pred_fallthru
    _
  // Predicated region
  $region30: #{sbert_punc_case_forward.1} parent=0 // pred_check
    _
  $region31: #{sbert_punc_case_forward.1} parent=0 // pred_check_branch
    %45 = sbr.rel (0) target = $region33
  $region32: #{sbert_punc_case_forward.1} parent=0 // pred_region
    _
  $region33: #{sbert_punc_case_forward.1} parent=0 // pred_fallthru
    _
  // Predicated region
  $region34: #{sbert_punc_case_forward.1} parent=0 // pred_check
    _
  $region35: #{sbert_punc_case_forward.1} parent=0 // pred_check_branch
    %47 = sbr.rel (0) target = $region37
  $region36: #{sbert_punc_case_forward.1} parent=0 // pred_region
    _
  $region37: #{sbert_punc_case_forward.1} parent=0 // pred_fallthru
    _
  // Predicated region
  $region38: #{sbert_punc_case_forward.1} parent=0 // pred_check
    _
  $region39: #{sbert_punc_case_forward.1} parent=0 // pred_check_branch
    %49 = sbr.rel (0) target = $region41
  $region40: #{sbert_punc_case_forward.1} parent=0 // pred_region
    _
  $region41: #{sbert_punc_case_forward.1} parent=0 // pred_fallthru
    _
  // Predicated region
  $region42: #{sbert_punc_case_forward.1} parent=0 // pred_check
    _
  $region43: #{sbert_punc_case_forward.1} parent=0 // pred_check_branch
    %51 = sbr.rel (0) target = $region45
  $region44: #{sbert_punc_case_forward.1} parent=0 // pred_region
    _
  $region45: #{sbert_punc_case_forward.1} parent=0 // pred_fallthru
    _
  // Predicated region
  $region46: #{sbert_punc_case_forward.1} parent=0 // pred_check
    _
  $region47: #{sbert_punc_case_forward.1} parent=0 // pred_check_branch
    %53 = sbr.rel (0) target = $region49
  $region48: #{sbert_punc_case_forward.1} parent=0 // pred_region
    _
  $region49: #{sbert_punc_case_forward.1} parent=0 // pred_fallthru
    _
  // Predicated region
  $region50: #{sbert_punc_case_forward.1} parent=0 // pred_check
    _
  $region51: #{sbert_punc_case_forward.1} parent=0 // pred_check_branch
    %55 = sbr.rel (0) target = $region53
  $region52: #{sbert_punc_case_forward.1} parent=0 // pred_region
    _
  $region53: #{sbert_punc_case_forward.1} parent=0 // pred_fallthru
    _
  // Predicated region
  $region54: #{sbert_punc_case_forward.1} parent=0 // pred_check
    _
  $region55: #{sbert_punc_case_forward.1} parent=0 // pred_check_branch
    %57 = sbr.rel (0) target = $region57
  $region56: #{sbert_punc_case_forward.1} parent=0 // pred_region
    _
  $region57: #{sbert_punc_case_forward.1} parent=0 // pred_fallthru
    _
  // Predicated region
  $region58: #{sbert_punc_case_forward.1} parent=0 // pred_check
    _
  $region59: #{sbert_punc_case_forward.1} parent=0 // pred_check_branch
    %59 = sbr.rel (0) target = $region61
  $region60: #{sbert_punc_case_forward.1} parent=0 // pred_region
    _
  $region61: #{sbert_punc_case_forward.1} parent=0 // pred_fallthru
    _
  // Predicated region
  $region62: #{sbert_punc_case_forward.1} parent=0 // pred_check
    _
  $region63: #{sbert_punc_case_forward.1} parent=0 // pred_check_branch
    %61 = sbr.rel (0) target = $region65
  $region64: #{sbert_punc_case_forward.1} parent=0 // pred_region
    _
  $region65: #{sbert_punc_case_forward.1} parent=0 // pred_fallthru
    _
  // Predicated region
  $region66: #{sbert_punc_case_forward.1} parent=0 // pred_check
    _
  $region67: #{sbert_punc_case_forward.1} parent=0 // pred_check_branch
    %63 = sbr.rel (0) target = $region69
  $region68: #{sbert_punc_case_forward.1} parent=0 // pred_region
    _
  $region69: #{sbert_punc_case_forward.1} parent=0 // pred_fallthru
    _
  // Predicated region
  $region70: #{sbert_punc_case_forward.1} parent=0 // pred_check
    _
  $region71: #{sbert_punc_case_forward.1} parent=0 // pred_check_branch
    %65 = sbr.rel (0) target = $region73
  $region72: #{sbert_punc_case_forward.1} parent=0 // pred_region
    _
  $region73: #{sbert_punc_case_forward.1} parent=0 // pred_fallthru
    _
  // Predicated region
  $region74: #{sbert_punc_case_forward.1} parent=0 // pred_check
    _
  $region75: #{sbert_punc_case_forward.1} parent=0 // pred_check_branch
    %67 = sbr.rel (0) target = $region77
  $region76: #{sbert_punc_case_forward.1} parent=0 // pred_region
    _
  $region77: #{sbert_punc_case_forward.1} parent=0 // pred_fallthru
    _
  // Predicated region
  $region78: #{sbert_punc_case_forward.1} parent=0 // pred_check
    _
  $region79: #{sbert_punc_case_forward.1} parent=0 // pred_check_branch
    %69 = sbr.rel (0) target = $region81
  $region80: #{sbert_punc_case_forward.1} parent=0 // pred_region
    _
  $region81: #{sbert_punc_case_forward.1} parent=0 // pred_fallthru
    _
  // Predicated region
  $region82: #{sbert_punc_case_forward.1} parent=0 // pred_check
    _
  $region83: #{sbert_punc_case_forward.1} parent=0 // pred_check_branch
    %71 = sbr.rel (0) target = $region85
  $region84: #{sbert_punc_case_forward.1} parent=0 // pred_region
    _
  $region85: #{sbert_punc_case_forward.1} parent=0 // pred_fallthru
    _
  // Predicated region
  $region86: #{sbert_punc_case_forward.1} parent=0 // pred_check
    _
  $region87: #{sbert_punc_case_forward.1} parent=0 // pred_check_branch
    %73 = sbr.rel (0) target = $region89
  $region88: #{sbert_punc_case_forward.1} parent=0 // pred_region
    _
  $region89: #{sbert_punc_case_forward.1} parent=0 // pred_fallthru
    _
  // Predicated region
  $region90: #{sbert_punc_case_forward.1} parent=0 // pred_check
    _
  $region91: #{sbert_punc_case_forward.1} parent=0 // pred_check_branch
    %75 = sbr.rel (0) target = $region93
  $region92: #{sbert_punc_case_forward.1} parent=0 // pred_region
    _
  $region93: #{sbert_punc_case_forward.1} parent=0 // pred_fallthru
    _
  // Predicated region
  $region94: #{sbert_punc_case_forward.1} parent=0 // pred_check
    _
  $region95: #{sbert_punc_case_forward.1} parent=0 // pred_check_branch
    %77 = sbr.rel (0) target = $region97
  $region96: #{sbert_punc_case_forward.1} parent=0 // pred_region
    _
  $region97: #{sbert_punc_case_forward.1} parent=0 // pred_fallthru
    _
  // Predicated region
  $region98: #{sbert_punc_case_forward.1} parent=0 // pred_check
    _
  $region99: #{sbert_punc_case_forward.1} parent=0 // pred_check_branch
    %79 = sbr.rel (0) target = $region101
  $region100: #{sbert_punc_case_forward.1} parent=0 // pred_region
    _
  $region101: #{sbert_punc_case_forward.1} parent=0 // pred_fallthru
    _
  %v80 = vld [vmem:[%s0] sm:$0xff]
  %v81 = vld [vmem:[%s0 + $0x8] sm:$0xff]
  %82 = vset.pattern.permute.xlu0 0
  %83 = vperm.xlu0 %82, %v80
  %v84 = vpop.permute.xlu0 %83
  %85 = vset.pattern.permute.xlu0 0
  %86 = vperm.xlu0 %85, %v81
  %v87 = vpop.permute.xlu0 %86
  %v88 = vlaneseq
  %v89 = vand.u32 %v88, 127
  %vm90 = vcmp.eq.s32.totalorder %v84, %v89
  %vm91 = vcmp.eq.s32.totalorder %v87, %v89
  %v92 = vsel %vm90, 1, 0
  %v93 = vsel %vm91, 1, 0
  %v94 = vcvt.s32.f32 %v92
  %v95 = vcvt.s32.f32 %v93
  %v96 = vld [vmem:[%s3] sm:$0xff]
  %v97 = vld [vmem:[%s2] sm:$0xff]
  %v98 = vld [vmem:[%s2 + $0x8] sm:$0xff]
  %v99 = vld [vmem:[%s2 + $0x10] sm:$0xff]
  %v100 = vld [vmem:[%s2 + $0x18] sm:$0xff]
  %v101 = vld [vmem:[%s2 + $0x20] sm:$0xff]
  %v102 = vld [vmem:[%s2 + $0x28] sm:$0xff]
  %v103 = vld [vmem:[%s2 + $0x30] sm:$0xff]
  %v104 = vld [vmem:[%s2 + $0x38] sm:$0xff]
  %v105 = vld [vmem:[%s2 + $0x40] sm:$0xff]
  %v106 = vld [vmem:[%s2 + $0x48] sm:$0xff]
  %v107 = vld [vmem:[%s2 + $0x50] sm:$0xff]
  %v108 = vld [vmem:[%s2 + $0x58] sm:$0xff]
  %v109 = vld [vmem:[%s2 + $0x60] sm:$0xff]
  %v110 = vld [vmem:[%s2 + $0x68] sm:$0xff]
  %v111 = vld [vmem:[%s2 + $0x70] sm:$0xff]
  %v112 = vld [vmem:[%s2 + $0x78] sm:$0xff]
  %113 = vmatprep.subr.mxu0 0.0
  %114 = vmatpush1.msra.mxu0 %v97
  %115 = vmatprep.subr.mxu0 0.0
  %116 = vmatpush1.msra.mxu0 %v98
  %117 = vmatprep.subr.mxu0 0.0
  %118 = vmatpush1.msra.mxu0 %v99
  %119 = vmatprep.subr.mxu0 0.0
  %120 = vmatpush1.msra.mxu0 %v100
  %121 = vmatprep.subr.mxu0 0.0
  %122 = vmatpush1.msra.mxu0 %v101
  %123 = vmatprep.subr.mxu0 0.0
  %124 = vmatpush1.msra.mxu0 %v102
  %125 = vmatprep.subr.mxu0 0.0
  %126 = vmatpush1.msra.mxu0 %v103
  %127 = vmatprep.subr.mxu0 0.0
  %128 = vmatpush1.msra.mxu0 %v104
  %129 = vmatprep.subr.mxu0 0.0
  %130 = vmatpush1.msra.mxu0 %v105
  %131 = vmatprep.subr.mxu0 0.0
  %132 = vmatpush1.msra.mxu0 %v106
  %133 = vmatprep.subr.mxu0 0.0
  %134 = vmatpush1.msra.mxu0 %v107
  %135 = vmatprep.subr.mxu0 0.0
  %136 = vmatpush1.msra.mxu0 %v108
  %137 = vmatprep.subr.mxu0 0.0
  %138 = vmatpush1.msra.mxu0 %v109
  %139 = vmatprep.subr.mxu0 0.0
  %140 = vmatpush1.msra.mxu0 %v110
  %141 = vmatprep.subr.mxu0 0.0
  %142 = vmatpush1.msra.mxu0 %v111
  %143 = vmatprep.subr.mxu0 0.0
  %144 = vmatpush1.msra.mxu0 %v112
  %145 = vmatprep.subr.mxu0 0.0
  %146 = vmatpush1.msra.mxu0 0.0
  %147 = vmatprep.subr.mxu0 0.0
  %148 = vmatpush1.msra.mxu0 0.0
  %149 = vmatprep.subr.mxu0 0.0
  %150 = vmatpush1.msra.mxu0 0.0
  %151 = vmatprep.subr.mxu0 0.0
  %152 = vmatpush1.msra.mxu0 0.0
  %153 = vmatprep.subr.mxu0 0.0
  %154 = vmatpush1.msra.mxu0 0.0
  %155 = vmatprep.subr.mxu0 0.0
  %156 = vmatpush1.msra.mxu0 0.0
  %157 = vmatprep.subr.mxu0 0.0
  %158 = vmatpush1.msra.mxu0 0.0
  %159 = vmatprep.subr.mxu0 0.0
  %160 = vmatpush1.msra.mxu0 0.0
  %161 = vmatprep.subr.mxu0 0.0
  %162 = vmatpush1.msra.mxu0 0.0
  %163 = vmatprep.subr.mxu0 0.0
  %164 = vmatpush1.msra.mxu0 0.0
  %165 = vmatprep.subr.mxu0 0.0
  %166 = vmatpush1.msra.mxu0 0.0
  %167 = vmatprep.subr.mxu0 0.0
  %168 = vmatpush1.msra.mxu0 0.0
  %169 = vmatprep.subr.mxu0 0.0
  %170 = vmatpush1.msra.mxu0 0.0
  %171 = vmatprep.subr.mxu0 0.0
  %172 = vmatpush1.msra.mxu0 0.0
  %173 = vmatprep.subr.mxu0 0.0
  %174 = vmatpush1.msra.mxu0 0.0
  %175 = vmatprep.subr.mxu0 0.0
  %176 = vmatpush1.msra.mxu0 0.0
  %177 = vmatprep.mubr.f32.mxu0 0.0
  %178 = vmatmul.mubr.f32.gmra.mrb[0].mxu0 %v94
  %v179 = vpop.f32.mrb[0].mxu0
  %v180 = vadd.f32 %v96, %v179
  %v181 = vpop.f32.mrb[0].mxu0
  %182 = vmatprep.mubr.f32.mxu0 0.0
  %183 = vmatmul.mubr.f32.gmra.mrb[0].mxu0 %v95
  %v184 = vpop.f32.mrb[0].mxu0
  %v185 = vadd.f32 %v96, %v184
  %v186 = vpop.f32.mrb[0].mxu0
  %187 = vdwg.mxu0
  %v188 = vld [vmem:[%s4] sm:$0x1]
  %v189 = vlaneseq
  %v190 = vshrl.u32 %v189, 7
  %v191 = vsub.s32 0, %v190
  %v192 = vrot.slane %v188, %v191
  %v193 = vadd.f32 %v180, %v192
  %v194 = vadd.f32 %v185, %v192
  %v195 = vld [vmem:[%s5] sm:$0x1]
  %v196 = vld [vmem:[%s6] sm:$0x1]
  %vm197 = vcmask 261120
  %v198 = vsel %vm197, %v193, 0.0
  %199 = vadd.xlane.f32.xlu0 %v198
  %v200 = vpop.xlane.xlu0 %199
  %v201 = vsel %vm197, %v194, 0.0
  %202 = vadd.xlane.f32.xlu0 %v201
  %v203 = vpop.xlane.xlu0 %202
  %v204 = vrcp.pop 32.0
  %v205 = vmul.f32 %v200, %v204
  %v206 = vmul.f32 %v203, %v204
  %v207 = vsub.f32 %v193, %v205
  %v208 = vsub.f32 %v194, %v206
  %v209 = vmul.f32 %v207, %v207
  %v210 = vmul.f32 %v208, %v208
  %v211 = vsel %vm197, %v209, 0.0
  %212 = vadd.xlane.f32.xlu0 %v211
  %v213 = vpop.xlane.xlu0 %212
  %v214 = vsel %vm197, %v210, 0.0
  %215 = vadd.xlane.f32.xlu0 %v214
  %v216 = vpop.xlane.xlu0 %215
  %v217 = vmul.f32 %v213, %v204
  %v218 = vmul.f32 %v216, %v204
  %v219 = vadd.f32 %v217, 1e-12
  %v220 = vadd.f32 %v218, 1e-12
  %v221 = vrsqrt.pop %v219
  %v222 = vrsqrt.pop %v220
  %v223 = vmul.f32 %v207, %v221
  %v224 = vmul.f32 %v208, %v222
  %v226 = vlaneseq
  %v227 = vshrl.u32 %v226, 7
  %v228 = vsub.s32 0, %v227
  %v229 = vrot.slane %v195, %v228
  %v231 = vmul.f32 %v223, %v229
  %v232 = vmul.f32 %v224, %v229
  %v234 = vlaneseq
  %v235 = vshrl.u32 %v234, 7
  %v236 = vsub.s32 0, %v235
  %v237 = vrot.slane %v196, %v236
  %v239 = vadd.f32 %v231, %v237
  %v240 = vadd.f32 %v232, %v237
  %v241 = vld [vmem:[%s1] sm:$0x1]
  %v242 = vcvt.s32.f32 %v241
  %v243 = vlaneseq
  %v244 = vshrl.u32 %v243, 7
  %v245 = vadd.s32 %v244, 8
  %vm246 = vcmp.ge.s32.totalorder %v244, 0
  %vm247 = vcmp.ge.s32.totalorder %v245, 0
  %vm248 = vcmp.lt.s32.totalorder %v244, 8
  %vm249 = vcmp.lt.s32.totalorder %v245, 8
  %vm250 = vmand %vm246, %vm248
  %vm251 = vmand %vm247, %vm249
  %vm252 = vcmp.ge.s32.totalorder %v89, 0
  %vm253 = vcmp.lt.s32.totalorder %v89, 8
  %vm254 = vmand %vm252, %vm253
  %vm255 = vmand %vm250, %vm254
  %vm256 = vmand %vm251, %vm254
  %vm257 = vcmp.ge.s32.totalorder %v244, 8
  %vm258 = vcmp.ge.s32.totalorder %v245, 8
  %vm259 = vcmp.lt.s32.totalorder %v244, 16
  %vm260 = vcmp.lt.s32.totalorder %v245, 16
  %vm261 = vmand %vm257, %vm259
  %vm262 = vmand %vm258, %vm260
  %vm263 = vcmp.ge.s32.totalorder %v89, 8
  %vm264 = vcmp.lt.s32.totalorder %v89, 16
  %vm265 = vmand %vm263, %vm264
  %vm266 = vmand %vm261, %vm265
  %vm267 = vmand %vm262, %vm265
  %vm268 = vmor %vm255, %vm266
  %vm269 = vmor %vm256, %vm267
  %v271 = vlaneseq
  %v272 = vshrl.u32 %v271, 7
  %v273 = vsub.s32 0, %v272
  %v274 = vrot.slane %v242, %v273
  %v276 = vsel %vm268, %v274, 0.0
  %v277 = vsel %vm269, %v274, 0.0
  %v278 = vsub.f32 1.0, %v276
  %v279 = vsub.f32 1.0, %v277
  %v280 = vmul.f32 %v278, -10000.0
  %v281 = vmul.f32 %v279, -10000.0
  %v282 = vld [vmem:[%s7] sm:$0xff]
  %v283 = vld [vmem:[%s7 + $0x8] sm:$0xff]
  %v284 = vld [vmem:[%s7 + $0x10] sm:$0xff]
  %v285 = vld [vmem:[%s7 + $0x18] sm:$0xff]
  %v286 = vld [vmem:[%s8] sm:$0x1]
  %v288 = vlaneseq
  %v289 = vshrl.u32 %v288, 7
  %v290 = vsub.s32 0, %v289
  %v291 = vrot.slane %v286, %v290
  %v294 = vsel %vm197, %v239, 0
  %v297 = vsel %vm197, %v240, 0
  %299 = vmatprep.subr.mxu0 0.0
  %300 = vmatpush1.msra.mxu0 %v282
  %301 = vmatprep.subr.mxu0 0.0
  %302 = vmatpush1.msra.mxu0 %v283
  %303 = vmatprep.subr.mxu0 0.0
  %304 = vmatpush1.msra.mxu0 %v284
  %305 = vmatprep.subr.mxu0 0.0
  %306 = vmatpush1.msra.mxu0 %v285
  %307 = vmatprep.subr.mxu0 0.0
  %308 = vmatpush1.msra.mxu0 0.0
  %309 = vmatprep.subr.mxu0 0.0
  %310 = vmatpush1.msra.mxu0 0.0
  %311 = vmatprep.subr.mxu0 0.0
  %312 = vmatpush1.msra.mxu0 0.0
  %313 = vmatprep.subr.mxu0 0.0
  %314 = vmatpush1.msra.mxu0 0.0
  %315 = vmatprep.subr.mxu0 0.0
  %316 = vmatpush1.msra.mxu0 0.0
  %317 = vmatprep.subr.mxu0 0.0
  %318 = vmatpush1.msra.mxu0 0.0
  %319 = vmatprep.subr.mxu0 0.0
  %320 = vmatpush1.msra.mxu0 0.0
  %321 = vmatprep.subr.mxu0 0.0
  %322 = vmatpush1.msra.mxu0 0.0
  %323 = vmatprep.subr.mxu0 0.0
  %324 = vmatpush1.msra.mxu0 0.0
  %325 = vmatprep.subr.mxu0 0.0
  %326 = vmatpush1.msra.mxu0 0.0
  %327 = vmatprep.subr.mxu0 0.0
  %328 = vmatpush1.msra.mxu0 0.0
  %329 = vmatprep.subr.mxu0 0.0
  %330 = vmatpush1.msra.mxu0 0.0
  %331 = vmatprep.subr.mxu0 0.0
  %332 = vmatpush1.msra.mxu0 0.0
  %333 = vmatprep.subr.mxu0 0.0
  %334 = vmatpush1.msra.mxu0 0.0
  %335 = vmatprep.subr.mxu0 0.0
  %336 = vmatpush1.msra.mxu0 0.0
  %337 = vmatprep.subr.mxu0 0.0
  %338 = vmatpush1.msra.mxu0 0.0
  %339 = vmatprep.subr.mxu0 0.0
  %340 = vmatpush1.msra.mxu0 0.0
  %341 = vmatprep.subr.mxu0 0.0
  %342 = vmatpush1.msra.mxu0 0.0
  %343 = vmatprep.subr.mxu0 0.0
  %344 = vmatpush1.msra.mxu0 0.0
  %345 = vmatprep.subr.mxu0 0.0
  %346 = vmatpush1.msra.mxu0 0.0
  %347 = vmatprep.subr.mxu0 0.0
  %348 = vmatpush1.msra.mxu0 0.0
  %349 = vmatprep.subr.mxu0 0.0
  %350 = vmatpush1.msra.mxu0 0.0
  %351 = vmatprep.subr.mxu0 0.0
  %352 = vmatpush1.msra.mxu0 0.0
  %353 = vmatprep.subr.mxu0 0.0
  %354 = vmatpush1.msra.mxu0 0.0
  %355 = vmatprep.subr.mxu0 0.0
  %356 = vmatpush1.msra.mxu0 0.0
  %357 = vmatprep.subr.mxu0 0.0
  %358 = vmatpush1.msra.mxu0 0.0
  %359 = vmatprep.subr.mxu0 0.0
  %360 = vmatpush1.msra.mxu0 0.0
  %361 = vmatprep.subr.mxu0 0.0
  %362 = vmatpush1.msra.mxu0 0.0
  %363 = vmatprep.mubr.f32.mxu0 0.0
  %364 = vmatmul.mubr.f32.gmra.mrb[0].mxu0 %v294
  %v365 = vpop.f32.mrb[0].mxu0
  %v366 = vadd.f32 %v291, %v365
  %v367 = vpop.f32.mrb[0].mxu0
  %368 = vmatprep.mubr.f32.mxu0 0.0
  %369 = vmatmul.mubr.f32.gmra.mrb[0].mxu0 %v297
  %v370 = vpop.f32.mrb[0].mxu0
  %v371 = vadd.f32 %v291, %v370
  %v372 = vpop.f32.mrb[0].mxu0
  %373 = vdwg.mxu0
  %v374 = vld [vmem:[%s9] sm:$0xff]
  %v375 = vld [vmem:[%s9 + $0x8] sm:$0xff]
  %v376 = vld [vmem:[%s9 + $0x10] sm:$0xff]
  %v377 = vld [vmem:[%s9 + $0x18] sm:$0xff]
  %v378 = vld [vmem:[%s10] sm:$0x1]
  %v380 = vlaneseq
  %v381 = vshrl.u32 %v380, 7
  %v382 = vsub.s32 0, %v381
  %v383 = vrot.slane %v378, %v382
  %385 = vmatprep.subr.mxu0 0.0
  %386 = vmatpush1.msra.mxu0 %v374
  %387 = vmatprep.subr.mxu0 0.0
  %388 = vmatpush1.msra.mxu0 %v375
  %389 = vmatprep.subr.mxu0 0.0
  %390 = vmatpush1.msra.mxu0 %v376
  %391 = vmatprep.subr.mxu0 0.0
  %392 = vmatpush1.msra.mxu0 %v377
  %393 = vmatprep.subr.mxu0 0.0
  %394 = vmatpush1.msra.mxu0 0.0
  %395 = vmatprep.subr.mxu0 0.0
  %396 = vmatpush1.msra.mxu0 0.0
  %397 = vmatprep.subr.mxu0 0.0
  %398 = vmatpush1.msra.mxu0 0.0
  %399 = vmatprep.subr.mxu0 0.0
  %400 = vmatpush1.msra.mxu0 0.0
  %401 = vmatprep.subr.mxu0 0.0
  %402 = vmatpush1.msra.mxu0 0.0
  %403 = vmatprep.subr.mxu0 0.0
  %404 = vmatpush1.msra.mxu0 0.0
  %405 = vmatprep.subr.mxu0 0.0
  %406 = vmatpush1.msra.mxu0 0.0
  %407 = vmatprep.subr.mxu0 0.0
  %408 = vmatpush1.msra.mxu0 0.0
  %409 = vmatprep.subr.mxu0 0.0
  %410 = vmatpush1.msra.mxu0 0.0
  %411 = vmatprep.subr.mxu0 0.0
  %412 = vmatpush1.msra.mxu0 0.0
  %413 = vmatprep.subr.mxu0 0.0
  %414 = vmatpush1.msra.mxu0 0.0
  %415 = vmatprep.subr.mxu0 0.0
  %416 = vmatpush1.msra.mxu0 0.0
  %417 = vmatprep.subr.mxu0 0.0
  %418 = vmatpush1.msra.mxu0 0.0
  %419 = vmatprep.subr.mxu0 0.0
  %420 = vmatpush1.msra.mxu0 0.0
  %421 = vmatprep.subr.mxu0 0.0
  %422 = vmatpush1.msra.mxu0 0.0
  %423 = vmatprep.subr.mxu0 0.0
  %424 = vmatpush1.msra.mxu0 0.0
  %425 = vmatprep.subr.mxu0 0.0
  %426 = vmatpush1.msra.mxu0 0.0
  %427 = vmatprep.subr.mxu0 0.0
  %428 = vmatpush1.msra.mxu0 0.0
  %429 = vmatprep.subr.mxu0 0.0
  %430 = vmatpush1.msra.mxu0 0.0
  %431 = vmatprep.subr.mxu0 0.0
  %432 = vmatpush1.msra.mxu0 0.0
  %433 = vmatprep.subr.mxu0 0.0
  %434 = vmatpush1.msra.mxu0 0.0
  %435 = vmatprep.subr.mxu0 0.0
  %436 = vmatpush1.msra.mxu0 0.0
  %437 = vmatprep.subr.mxu0 0.0
  %438 = vmatpush1.msra.mxu0 0.0
  %439 = vmatprep.subr.mxu0 0.0
  %440 = vmatpush1.msra.mxu0 0.0
  %441 = vmatprep.subr.mxu0 0.0
  %442 = vmatpush1.msra.mxu0 0.0
  %443 = vmatprep.subr.mxu0 0.0
  %444 = vmatpush1.msra.mxu0 0.0
  %445 = vmatprep.subr.mxu0 0.0
  %446 = vmatpush1.msra.mxu0 0.0
  %447 = vmatprep.subr.mxu0 0.0
  %448 = vmatpush1.msra.mxu0 0.0
  %449 = vmatprep.mubr.f32.mxu0 0.0
  %450 = vmatmul.mubr.f32.gmra.mrb[0].mxu0 %v294
  %v451 = vpop.f32.mrb[0].mxu0
  %v452 = vadd.f32 %v383, %v451
  %v453 = vpop.f32.mrb[0].mxu0
  %454 = vmatprep.mubr.f32.mxu0 0.0
  %455 = vmatmul.mubr.f32.gmra.mrb[0].mxu0 %v297
  %v456 = vpop.f32.mrb[0].mxu0
  %v457 = vadd.f32 %v383, %v456
  %v458 = vpop.f32.mrb[0].mxu0
  %459 = vdwg.mxu0
  %v460 = vld [vmem:[%s11] sm:$0xff]
  %v461 = vld [vmem:[%s11 + $0x8] sm:$0xff]
  %v462 = vld [vmem:[%s11 + $0x10] sm:$0xff]
  %v463 = vld [vmem:[%s11 + $0x18] sm:$0xff]
  %v464 = vld [vmem:[%s12] sm:$0x1]
  %v466 = vlaneseq
  %v467 = vshrl.u32 %v466, 7
  %v468 = vsub.s32 0, %v467
  %v469 = vrot.slane %v464, %v468
  %471 = vmatprep.subr.mxu0 0.0
  %472 = vmatpush1.msra.mxu0 %v460
  %473 = vmatprep.subr.mxu0 0.0
  %474 = vmatpush1.msra.mxu0 %v461
  %475 = vmatprep.subr.mxu0 0.0
  %476 = vmatpush1.msra.mxu0 %v462
  %477 = vmatprep.subr.mxu0 0.0
  %478 = vmatpush1.msra.mxu0 %v463
  %479 = vmatprep.subr.mxu0 0.0
  %480 = vmatpush1.msra.mxu0 0.0
  %481 = vmatprep.subr.mxu0 0.0
  %482 = vmatpush1.msra.mxu0 0.0
  %483 = vmatprep.subr.mxu0 0.0
  %484 = vmatpush1.msra.mxu0 0.0
  %485 = vmatprep.subr.mxu0 0.0
  %486 = vmatpush1.msra.mxu0 0.0
  %487 = vmatprep.subr.mxu0 0.0
  %488 = vmatpush1.msra.mxu0 0.0
  %489 = vmatprep.subr.mxu0 0.0
  %490 = vmatpush1.msra.mxu0 0.0
  %491 = vmatprep.subr.mxu0 0.0
  %492 = vmatpush1.msra.mxu0 0.0
  %493 = vmatprep.subr.mxu0 0.0
  %494 = vmatpush1.msra.mxu0 0.0
  %495 = vmatprep.subr.mxu0 0.0
  %496 = vmatpush1.msra.mxu0 0.0
  %497 = vmatprep.subr.mxu0 0.0
  %498 = vmatpush1.msra.mxu0 0.0
  %499 = vmatprep.subr.mxu0 0.0
  %500 = vmatpush1.msra.mxu0 0.0
  %501 = vmatprep.subr.mxu0 0.0
  %502 = vmatpush1.msra.mxu0 0.0
  %503 = vmatprep.subr.mxu0 0.0
  %504 = vmatpush1.msra.mxu0 0.0
  %505 = vmatprep.subr.mxu0 0.0
  %506 = vmatpush1.msra.mxu0 0.0
  %507 = vmatprep.subr.mxu0 0.0
  %508 = vmatpush1.msra.mxu0 0.0
  %509 = vmatprep.subr.mxu0 0.0
  %510 = vmatpush1.msra.mxu0 0.0
  %511 = vmatprep.subr.mxu0 0.0
  %512 = vmatpush1.msra.mxu0 0.0
  %513 = vmatprep.subr.mxu0 0.0
  %514 = vmatpush1.msra.mxu0 0.0
  %515 = vmatprep.subr.mxu0 0.0
  %516 = vmatpush1.msra.mxu0 0.0
  %517 = vmatprep.subr.mxu0 0.0
  %518 = vmatpush1.msra.mxu0 0.0
  %519 = vmatprep.subr.mxu0 0.0
  %520 = vmatpush1.msra.mxu0 0.0
  %521 = vmatprep.subr.mxu0 0.0
  %522 = vmatpush1.msra.mxu0 0.0
  %523 = vmatprep.subr.mxu0 0.0
  %524 = vmatpush1.msra.mxu0 0.0
  %525 = vmatprep.subr.mxu0 0.0
  %526 = vmatpush1.msra.mxu0 0.0
  %527 = vmatprep.subr.mxu0 0.0
  %528 = vmatpush1.msra.mxu0 0.0
  %529 = vmatprep.subr.mxu0 0.0
  %530 = vmatpush1.msra.mxu0 0.0
  %531 = vmatprep.subr.mxu0 0.0
  %532 = vmatpush1.msra.mxu0 0.0
  %533 = vmatprep.subr.mxu0 0.0
  %534 = vmatpush1.msra.mxu0 0.0
  %535 = vmatprep.mubr.f32.mxu0 0.0
  %536 = vmatmul.mubr.f32.gmra.mrb[0].mxu0 %v294
  %v537 = vpop.f32.mrb[0].mxu0
  %v538 = vadd.f32 %v469, %v537
  %v539 = vpop.f32.mrb[0].mxu0
  %540 = vmatprep.mubr.f32.mxu0 0.0
  %541 = vmatmul.mubr.f32.gmra.mrb[0].mxu0 %v297
  %v542 = vpop.f32.mrb[0].mxu0
  %v543 = vadd.f32 %v469, %v542
  %v544 = vpop.f32.mrb[0].mxu0
  %545 = vdwg.mxu0
  %vm546 = vcmask 130048
  %v548 = vsel %vm546, %v366, 0
  %v551 = vsel %vm546, %v371, 0
  %v554 = vsel %vm546, %v452, 0
  %v557 = vsel %vm546, %v457, 0
  %559 = vmatprep.subr.mxu0 0.0
  %560 = vmatpush1.xpose.msra.mxu0 %v554
  %561 = vmatprep.subr.mxu0 0.0
  %562 = vmatpush1.xpose.msra.mxu0 %v557
  %563 = vmatprep.subr.mxu0 0.0
  %564 = vmatpush1.xpose.msra.mxu0 0.0
  %565 = vmatprep.subr.mxu0 0.0
  %566 = vmatpush1.xpose.msra.mxu0 0.0
  %567 = vmatprep.subr.mxu0 0.0
  %568 = vmatpush1.xpose.msra.mxu0 0.0
  %569 = vmatprep.subr.mxu0 0.0
  %570 = vmatpush1.xpose.msra.mxu0 0.0
  %571 = vmatprep.subr.mxu0 0.0
  %572 = vmatpush1.xpose.msra.mxu0 0.0
  %573 = vmatprep.subr.mxu0 0.0
  %574 = vmatpush1.xpose.msra.mxu0 0.0
  %575 = vmatprep.subr.mxu0 0.0
  %576 = vmatpush1.xpose.msra.mxu0 0.0
  %577 = vmatprep.subr.mxu0 0.0
  %578 = vmatpush1.xpose.msra.mxu0 0.0
  %579 = vmatprep.subr.mxu0 0.0
  %580 = vmatpush1.xpose.msra.mxu0 0.0
  %581 = vmatprep.subr.mxu0 0.0
  %582 = vmatpush1.xpose.msra.mxu0 0.0
  %583 = vmatprep.subr.mxu0 0.0
  %584 = vmatpush1.xpose.msra.mxu0 0.0
  %585 = vmatprep.subr.mxu0 0.0
  %586 = vmatpush1.xpose.msra.mxu0 0.0
  %587 = vmatprep.subr.mxu0 0.0
  %588 = vmatpush1.xpose.msra.mxu0 0.0
  %589 = vmatprep.subr.mxu0 0.0
  %590 = vmatpush1.xpose.msra.mxu0 0.0
  %591 = vmatprep.subr.mxu0 0.0
  %592 = vmatpush1.xpose.msra.mxu0 0.0
  %593 = vmatprep.subr.mxu0 0.0
  %594 = vmatpush1.xpose.msra.mxu0 0.0
  %595 = vmatprep.subr.mxu0 0.0
  %596 = vmatpush1.xpose.msra.mxu0 0.0
  %597 = vmatprep.subr.mxu0 0.0
  %598 = vmatpush1.xpose.msra.mxu0 0.0
  %599 = vmatprep.subr.mxu0 0.0
  %600 = vmatpush1.xpose.msra.mxu0 0.0
  %601 = vmatprep.subr.mxu0 0.0
  %602 = vmatpush1.xpose.msra.mxu0 0.0
  %603 = vmatprep.subr.mxu0 0.0
  %604 = vmatpush1.xpose.msra.mxu0 0.0
  %605 = vmatprep.subr.mxu0 0.0
  %606 = vmatpush1.xpose.msra.mxu0 0.0
  %607 = vmatprep.subr.mxu0 0.0
  %608 = vmatpush1.xpose.msra.mxu0 0.0
  %609 = vmatprep.subr.mxu0 0.0
  %610 = vmatpush1.xpose.msra.mxu0 0.0
  %611 = vmatprep.subr.mxu0 0.0
  %612 = vmatpush1.xpose.msra.mxu0 0.0
  %613 = vmatprep.subr.mxu0 0.0
  %614 = vmatpush1.xpose.msra.mxu0 0.0
  %615 = vmatprep.subr.mxu0 0.0
  %616 = vmatpush1.xpose.msra.mxu0 0.0
  %617 = vmatprep.subr.mxu0 0.0
  %618 = vmatpush1.xpose.msra.mxu0 0.0
  %619 = vmatprep.subr.mxu0 0.0
  %620 = vmatpush1.xpose.msra.mxu0 0.0
  %621 = vmatprep.subr.mxu0 0.0
  %622 = vmatpush1.xpose.msra.mxu0 0.0
  %623 = vmatprep.mubr.f32.mxu0 0.0
  %624 = vmatmul.mubr.f32.gmra.mrb[0].mxu0 %v548
  %v625 = vpop.f32.mrb[0].mxu0
  %v626 = vadd.f32 0.0, %v625
  %v627 = vpop.f32.mrb[0].mxu0
  %628 = vmatprep.mubr.f32.mxu0 0.0
  %629 = vmatmul.mubr.f32.gmra.mrb[0].mxu0 %v551
  %v630 = vpop.f32.mrb[0].mxu0
  %v631 = vadd.f32 0.0, %v630
  %v632 = vpop.f32.mrb[0].mxu0
  %633 = vdwg.mxu0
  %v634 = vmul.f32 %v626, 0.25
  %v635 = vmul.f32 %v631, 0.25
  %v636 = vadd.f32 %v634, %v280
  %v637 = vadd.f32 %v635, %v281
  %v638 = vsel %vm546, %v636, -inf
  %639 = vmax.xlane.f32.xlu0 %v638
  %v640 = vpop.xlane.xlu0 %639
  %v641 = vsel %vm546, %v637, -inf
  %642 = vmax.xlane.f32.xlu0 %v641
  %v643 = vpop.xlane.xlu0 %642
  %v644 = vsub.f32 %v636, %v640
  %v645 = vsub.f32 %v637, %v643
  %v646 = vmul.f32 %v644, 1.442695
  %v647 = vpow.pop %v646
  %v648 = vmul.f32 %v645, 1.442695
  %v649 = vpow.pop %v648
  %v650 = vsel %vm546, %v647, 0.0
  %651 = vadd.xlane.f32.xlu0 %v650
  %v652 = vpop.xlane.xlu0 %651
  %v653 = vsel %vm546, %v649, 0.0
  %654 = vadd.xlane.f32.xlu0 %v653
  %v655 = vpop.xlane.xlu0 %654
  %v656 = vrcp.pop %v652
  %v657 = vmul.f32 %v647, %v656
  %v658 = vrcp.pop %v655
  %v659 = vmul.f32 %v649, %v658
  %v661 = vsel %vm546, %v657, 0
  %v664 = vsel %vm546, %v659, 0
  %666 = vmatprep.subr.mxu0 0.0
  %667 = vmatpush1.msra.mxu0 %v538
  %668 = vmatprep.subr.mxu0 0.0
  %669 = vmatpush1.msra.mxu0 %v543
  %670 = vmatprep.subr.mxu0 0.0
  %671 = vmatpush1.msra.mxu0 0.0
  %672 = vmatprep.subr.mxu0 0.0
  %673 = vmatpush1.msra.mxu0 0.0
  %674 = vmatprep.subr.mxu0 0.0
  %675 = vmatpush1.msra.mxu0 0.0
  %676 = vmatprep.subr.mxu0 0.0
  %677 = vmatpush1.msra.mxu0 0.0
  %678 = vmatprep.subr.mxu0 0.0
  %679 = vmatpush1.msra.mxu0 0.0
  %680 = vmatprep.subr.mxu0 0.0
  %681 = vmatpush1.msra.mxu0 0.0
  %682 = vmatprep.subr.mxu0 0.0
  %683 = vmatpush1.msra.mxu0 0.0
  %684 = vmatprep.subr.mxu0 0.0
  %685 = vmatpush1.msra.mxu0 0.0
  %686 = vmatprep.subr.mxu0 0.0
  %687 = vmatpush1.msra.mxu0 0.0
  %688 = vmatprep.subr.mxu0 0.0
  %689 = vmatpush1.msra.mxu0 0.0
  %690 = vmatprep.subr.mxu0 0.0
  %691 = vmatpush1.msra.mxu0 0.0
  %692 = vmatprep.subr.mxu0 0.0
  %693 = vmatpush1.msra.mxu0 0.0
  %694 = vmatprep.subr.mxu0 0.0
  %695 = vmatpush1.msra.mxu0 0.0
  %696 = vmatprep.subr.mxu0 0.0
  %697 = vmatpush1.msra.mxu0 0.0
  %698 = vmatprep.subr.mxu0 0.0
  %699 = vmatpush1.msra.mxu0 0.0
  %700 = vmatprep.subr.mxu0 0.0
  %701 = vmatpush1.msra.mxu0 0.0
  %702 = vmatprep.subr.mxu0 0.0
  %703 = vmatpush1.msra.mxu0 0.0
  %704 = vmatprep.subr.mxu0 0.0
  %705 = vmatpush1.msra.mxu0 0.0
  %706 = vmatprep.subr.mxu0 0.0
  %707 = vmatpush1.msra.mxu0 0.0
  %708 = vmatprep.subr.mxu0 0.0
  %709 = vmatpush1.msra.mxu0 0.0
  %710 = vmatprep.subr.mxu0 0.0
  %711 = vmatpush1.msra.mxu0 0.0
  %712 = vmatprep.subr.mxu0 0.0
  %713 = vmatpush1.msra.mxu0 0.0
  %714 = vmatprep.subr.mxu0 0.0
  %715 = vmatpush1.msra.mxu0 0.0
  %716 = vmatprep.subr.mxu0 0.0
  %717 = vmatpush1.msra.mxu0 0.0
  %718 = vmatprep.subr.mxu0 0.0
  %719 = vmatpush1.msra.mxu0 0.0
  %720 = vmatprep.subr.mxu0 0.0
  %721 = vmatpush1.msra.mxu0 0.0
  %722 = vmatprep.subr.mxu0 0.0
  %723 = vmatpush1.msra.mxu0 0.0
  %724 = vmatprep.subr.mxu0 0.0
  %725 = vmatpush1.msra.mxu0 0.0
  %726 = vmatprep.subr.mxu0 0.0
  %727 = vmatpush1.msra.mxu0 0.0
  %728 = vmatprep.subr.mxu0 0.0
  %729 = vmatpush1.msra.mxu0 0.0
  %730 = vmatprep.mubr.f32.mxu0 0.0
  %731 = vmatmul.mubr.f32.gmra.mrb[0].mxu0 %v661
  %v732 = vpop.f32.mrb[0].mxu0
  %v733 = vadd.f32 0.0, %v732
  %v734 = vpop.f32.mrb[0].mxu0
  %735 = vmatprep.mubr.f32.mxu0 0.0
  %736 = vmatmul.mubr.f32.gmra.mrb[0].mxu0 %v664
  %v737 = vpop.f32.mrb[0].mxu0
  %v738 = vadd.f32 0.0, %v737
  %v739 = vpop.f32.mrb[0].mxu0
  %740 = vdwg.mxu0
  %v741 = vld [vmem:[%s13] sm:$0xff]
  %v742 = vld [vmem:[%s13 + $0x8] sm:$0xff]
  %s743 = scalar_lea.vmem %s7, 32
  %v744 = vld [vmem:[%s743] sm:$0xff]
  %v745 = vld [vmem:[%s743 + $0x8] sm:$0xff]
  %v746 = vld [vmem:[%s743 + $0x10] sm:$0xff]
  %v747 = vld [vmem:[%s743 + $0x18] sm:$0xff]
  %s748 = scalar_lea.vmem %s8, 1
  %v749 = vld [vmem:[%s748] sm:$0x1]
  %v751 = vlaneseq
  %v752 = vshrl.u32 %v751, 7
  %v753 = vsub.s32 0, %v752
  %v754 = vrot.slane %v749, %v753
  %756 = vmatprep.subr.mxu0 0.0
  %757 = vmatpush1.msra.mxu0 %v744
  %758 = vmatprep.subr.mxu0 0.0
  %759 = vmatpush1.msra.mxu0 %v745
  %760 = vmatprep.subr.mxu0 0.0
  %761 = vmatpush1.msra.mxu0 %v746
  %762 = vmatprep.subr.mxu0 0.0
  %763 = vmatpush1.msra.mxu0 %v747
  %764 = vmatprep.subr.mxu0 0.0
  %765 = vmatpush1.msra.mxu0 0.0
  %766 = vmatprep.subr.mxu0 0.0
  %767 = vmatpush1.msra.mxu0 0.0
  %768 = vmatprep.subr.mxu0 0.0
  %769 = vmatpush1.msra.mxu0 0.0
  %770 = vmatprep.subr.mxu0 0.0
  %771 = vmatpush1.msra.mxu0 0.0
  %772 = vmatprep.subr.mxu0 0.0
  %773 = vmatpush1.msra.mxu0 0.0
  %774 = vmatprep.subr.mxu0 0.0
  %775 = vmatpush1.msra.mxu0 0.0
  %776 = vmatprep.subr.mxu0 0.0
  %777 = vmatpush1.msra.mxu0 0.0
  %778 = vmatprep.subr.mxu0 0.0
  %779 = vmatpush1.msra.mxu0 0.0
  %780 = vmatprep.subr.mxu0 0.0
  %781 = vmatpush1.msra.mxu0 0.0
  %782 = vmatprep.subr.mxu0 0.0
  %783 = vmatpush1.msra.mxu0 0.0
  %784 = vmatprep.subr.mxu0 0.0
  %785 = vmatpush1.msra.mxu0 0.0
  %786 = vmatprep.subr.mxu0 0.0
  %787 = vmatpush1.msra.mxu0 0.0
  %788 = vmatprep.subr.mxu0 0.0
  %789 = vmatpush1.msra.mxu0 0.0
  %790 = vmatprep.subr.mxu0 0.0
  %791 = vmatpush1.msra.mxu0 0.0
  %792 = vmatprep.subr.mxu0 0.0
  %793 = vmatpush1.msra.mxu0 0.0
  %794 = vmatprep.subr.mxu0 0.0
  %795 = vmatpush1.msra.mxu0 0.0
  %796 = vmatprep.subr.mxu0 0.0
  %797 = vmatpush1.msra.mxu0 0.0
  %798 = vmatprep.subr.mxu0 0.0
  %799 = vmatpush1.msra.mxu0 0.0
  %800 = vmatprep.subr.mxu0 0.0
  %801 = vmatpush1.msra.mxu0 0.0
  %802 = vmatprep.subr.mxu0 0.0
  %803 = vmatpush1.msra.mxu0 0.0
  %804 = vmatprep.subr.mxu0 0.0
  %805 = vmatpush1.msra.mxu0 0.0
  %806 = vmatprep.subr.mxu0 0.0
  %807 = vmatpush1.msra.mxu0 0.0
  %808 = vmatprep.subr.mxu0 0.0
  %809 = vmatpush1.msra.mxu0 0.0
  %810 = vmatprep.subr.mxu0 0.0
  %811 = vmatpush1.msra.mxu0 0.0
  %812 = vmatprep.subr.mxu0 0.0
  %813 = vmatpush1.msra.mxu0 0.0
  %814 = vmatprep.subr.mxu0 0.0
  %815 = vmatpush1.msra.mxu0 0.0
  %816 = vmatprep.subr.mxu0 0.0
  %817 = vmatpush1.msra.mxu0 0.0
  %818 = vmatprep.subr.mxu0 0.0
  %819 = vmatpush1.msra.mxu0 0.0
  %820 = vmatprep.mubr.f32.mxu0 0.0
  %821 = vmatmul.mubr.f32.gmra.mrb[0].mxu0 %v294
  %v822 = vpop.f32.mrb[0].mxu0
  %v823 = vadd.f32 %v754, %v822
  %v824 = vpop.f32.mrb[0].mxu0
  %825 = vmatprep.mubr.f32.mxu0 0.0
  %826 = vmatmul.mubr.f32.gmra.mrb[0].mxu0 %v297
  %v827 = vpop.f32.mrb[0].mxu0
  %v828 = vadd.f32 %v754, %v827
  %v829 = vpop.f32.mrb[0].mxu0
  %830 = vdwg.mxu0
  %s831 = scalar_lea.vmem %s9, 32
  %v832 = vld [vmem:[%s831] sm:$0xff]
  %v833 = vld [vmem:[%s831 + $0x8] sm:$0xff]
  %v834 = vld [vmem:[%s831 + $0x10] sm:$0xff]
  %v835 = vld [vmem:[%s831 + $0x18] sm:$0xff]
  %s836 = scalar_lea.vmem %s10, 1
  %v837 = vld [vmem:[%s836] sm:$0x1]
  %v839 = vlaneseq
  %v840 = vshrl.u32 %v839, 7
  %v841 = vsub.s32 0, %v840
  %v842 = vrot.slane %v837, %v841
  %844 = vmatprep.subr.mxu0 0.0
  %845 = vmatpush1.msra.mxu0 %v832
  %846 = vmatprep.subr.mxu0 0.0
  %847 = vmatpush1.msra.mxu0 %v833
  %848 = vmatprep.subr.mxu0 0.0
  %849 = vmatpush1.msra.mxu0 %v834
  %850 = vmatprep.subr.mxu0 0.0
  %851 = vmatpush1.msra.mxu0 %v835
  %852 = vmatprep.subr.mxu0 0.0
  %853 = vmatpush1.msra.mxu0 0.0
  %854 = vmatprep.subr.mxu0 0.0
  %855 = vmatpush1.msra.mxu0 0.0
  %856 = vmatprep.subr.mxu0 0.0
  %857 = vmatpush1.msra.mxu0 0.0
  %858 = vmatprep.subr.mxu0 0.0
  %859 = vmatpush1.msra.mxu0 0.0
  %860 = vmatprep.subr.mxu0 0.0
  %861 = vmatpush1.msra.mxu0 0.0
  %862 = vmatprep.subr.mxu0 0.0
  %863 = vmatpush1.msra.mxu0 0.0
  %864 = vmatprep.subr.mxu0 0.0
  %865 = vmatpush1.msra.mxu0 0.0
  %866 = vmatprep.subr.mxu0 0.0
  %867 = vmatpush1.msra.mxu0 0.0
  %868 = vmatprep.subr.mxu0 0.0
  %869 = vmatpush1.msra.mxu0 0.0
  %870 = vmatprep.subr.mxu0 0.0
  %871 = vmatpush1.msra.mxu0 0.0
  %872 = vmatprep.subr.mxu0 0.0
  %873 = vmatpush1.msra.mxu0 0.0
  %874 = vmatprep.subr.mxu0 0.0
  %875 = vmatpush1.msra.mxu0 0.0
  %876 = vmatprep.subr.mxu0 0.0
  %877 = vmatpush1.msra.mxu0 0.0
  %878 = vmatprep.subr.mxu0 0.0
  %879 = vmatpush1.msra.mxu0 0.0
  %880 = vmatprep.subr.mxu0 0.0
  %881 = vmatpush1.msra.mxu0 0.0
  %882 = vmatprep.subr.mxu0 0.0
  %883 = vmatpush1.msra.mxu0 0.0
  %884 = vmatprep.subr.mxu0 0.0
  %885 = vmatpush1.msra.mxu0 0.0
  %886 = vmatprep.subr.mxu0 0.0
  %887 = vmatpush1.msra.mxu0 0.0
  %888 = vmatprep.subr.mxu0 0.0
  %889 = vmatpush1.msra.mxu0 0.0
  %890 = vmatprep.subr.mxu0 0.0
  %891 = vmatpush1.msra.mxu0 0.0
  %892 = vmatprep.subr.mxu0 0.0
  %893 = vmatpush1.msra.mxu0 0.0
  %894 = vmatprep.subr.mxu0 0.0
  %895 = vmatpush1.msra.mxu0 0.0
  %896 = vmatprep.subr.mxu0 0.0
  %897 = vmatpush1.msra.mxu0 0.0
  %898 = vmatprep.subr.mxu0 0.0
  %899 = vmatpush1.msra.mxu0 0.0
  %900 = vmatprep.subr.mxu0 0.0
  %901 = vmatpush1.msra.mxu0 0.0
  %902 = vmatprep.subr.mxu0 0.0
  %903 = vmatpush1.msra.mxu0 0.0
  %904 = vmatprep.subr.mxu0 0.0
  %905 = vmatpush1.msra.mxu0 0.0
  %906 = vmatprep.subr.mxu0 0.0
  %907 = vmatpush1.msra.mxu0 0.0
  %908 = vmatprep.mubr.f32.mxu0 0.0
  %909 = vmatmul.mubr.f32.gmra.mrb[0].mxu0 %v294
  %v910 = vpop.f32.mrb[0].mxu0
  %v911 = vadd.f32 %v842, %v910
  %v912 = vpop.f32.mrb[0].mxu0
  %913 = vmatprep.mubr.f32.mxu0 0.0
  %914 = vmatmul.mubr.f32.gmra.mrb[0].mxu0 %v297
  %v915 = vpop.f32.mrb[0].mxu0
  %v916 = vadd.f32 %v842, %v915
  %v917 = vpop.f32.mrb[0].mxu0
  %918 = vdwg.mxu0
  %s919 = scalar_lea.vmem %s11, 32
  %v920 = vld [vmem:[%s919] sm:$0xff]
  %v921 = vld [vmem:[%s919 + $0x8] sm:$0xff]
  %v922 = vld [vmem:[%s919 + $0x10] sm:$0xff]
  %v923 = vld [vmem:[%s919 + $0x18] sm:$0xff]
  %s924 = scalar_lea.vmem %s12, 1
  %v925 = vld [vmem:[%s924] sm:$0x1]
  %v927 = vlaneseq
  %v928 = vshrl.u32 %v927, 7
  %v929 = vsub.s32 0, %v928
  %v930 = vrot.slane %v925, %v929
  %932 = vmatprep.subr.mxu0 0.0
  %933 = vmatpush1.msra.mxu0 %v920
  %934 = vmatprep.subr.mxu0 0.0
  %935 = vmatpush1.msra.mxu0 %v921
  %936 = vmatprep.subr.mxu0 0.0
  %937 = vmatpush1.msra.mxu0 %v922
  %938 = vmatprep.subr.mxu0 0.0
  %939 = vmatpush1.msra.mxu0 %v923
  %940 = vmatprep.subr.mxu0 0.0
  %941 = vmatpush1.msra.mxu0 0.0
  %942 = vmatprep.subr.mxu0 0.0
  %943 = vmatpush1.msra.mxu0 0.0
  %944 = vmatprep.subr.mxu0 0.0
  %945 = vmatpush1.msra.mxu0 0.0
  %946 = vmatprep.subr.mxu0 0.0
  %947 = vmatpush1.msra.mxu0 0.0
  %948 = vmatprep.subr.mxu0 0.0
  %949 = vmatpush1.msra.mxu0 0.0
  %950 = vmatprep.subr.mxu0 0.0
  %951 = vmatpush1.msra.mxu0 0.0
  %952 = vmatprep.subr.mxu0 0.0
  %953 = vmatpush1.msra.mxu0 0.0
  %954 = vmatprep.subr.mxu0 0.0
  %955 = vmatpush1.msra.mxu0 0.0
  %956 = vmatprep.subr.mxu0 0.0
  %957 = vmatpush1.msra.mxu0 0.0
  %958 = vmatprep.subr.mxu0 0.0
  %959 = vmatpush1.msra.mxu0 0.0
  %960 = vmatprep.subr.mxu0 0.0
  %961 = vmatpush1.msra.mxu0 0.0
  %962 = vmatprep.subr.mxu0 0.0
  %963 = vmatpush1.msra.mxu0 0.0
  %964 = vmatprep.subr.mxu0 0.0
  %965 = vmatpush1.msra.mxu0 0.0
  %966 = vmatprep.subr.mxu0 0.0
  %967 = vmatpush1.msra.mxu0 0.0
  %968 = vmatprep.subr.mxu0 0.0
  %969 = vmatpush1.msra.mxu0 0.0
  %970 = vmatprep.subr.mxu0 0.0
  %971 = vmatpush1.msra.mxu0 0.0
  %972 = vmatprep.subr.mxu0 0.0
  %973 = vmatpush1.msra.mxu0 0.0
  %974 = vmatprep.subr.mxu0 0.0
  %975 = vmatpush1.msra.mxu0 0.0
  %976 = vmatprep.subr.mxu0 0.0
  %977 = vmatpush1.msra.mxu0 0.0
  %978 = vmatprep.subr.mxu0 0.0
  %979 = vmatpush1.msra.mxu0 0.0
  %980 = vmatprep.subr.mxu0 0.0
  %981 = vmatpush1.msra.mxu0 0.0
  %982 = vmatprep.subr.mxu0 0.0
  %983 = vmatpush1.msra.mxu0 0.0
  %984 = vmatprep.subr.mxu0 0.0
  %985 = vmatpush1.msra.mxu0 0.0
  %986 = vmatprep.subr.mxu0 0.0
  %987 = vmatpush1.msra.mxu0 0.0
  %988 = vmatprep.subr.mxu0 0.0
  %989 = vmatpush1.msra.mxu0 0.0
  %990 = vmatprep.subr.mxu0 0.0
  %991 = vmatpush1.msra.mxu0 0.0
  %992 = vmatprep.subr.mxu0 0.0
  %993 = vmatpush1.msra.mxu0 0.0
  %994 = vmatprep.subr.mxu0 0.0
  %995 = vmatpush1.msra.mxu0 0.0
  %996 = vmatprep.mubr.f32.mxu0 0.0
  %997 = vmatmul.mubr.f32.gmra.mrb[0].mxu0 %v294
  %v998 = vpop.f32.mrb[0].mxu0
  %v999 = vadd.f32 %v930, %v998
  %v1000 = vpop.f32.mrb[0].mxu0
  %1001 = vmatprep.mubr.f32.mxu0 0.0
  %1002 = vmatmul.mubr.f32.gmra.mrb[0].mxu0 %v297
  %v1003 = vpop.f32.mrb[0].mxu0
  %v1004 = vadd.f32 %v930, %v1003
  %v1005 = vpop.f32.mrb[0].mxu0
  %1006 = vdwg.mxu0
  %v1008 = vsel %vm546, %v823, 0
  %v1011 = vsel %vm546, %v828, 0
  %v1014 = vsel %vm546, %v911, 0
  %v1017 = vsel %vm546, %v916, 0
  %1019 = vmatprep.subr.mxu0 0.0
  %1020 = vmatpush1.xpose.msra.mxu0 %v1014
  %1021 = vmatprep.subr.mxu0 0.0
  %1022 = vmatpush1.xpose.msra.mxu0 %v1017
  %1023 = vmatprep.subr.mxu0 0.0
  %1024 = vmatpush1.xpose.msra.mxu0 0.0
  %1025 = vmatprep.subr.mxu0 0.0
  %1026 = vmatpush1.xpose.msra.mxu0 0.0
  %1027 = vmatprep.subr.mxu0 0.0
  %1028 = vmatpush1.xpose.msra.mxu0 0.0
  %1029 = vmatprep.subr.mxu0 0.0
  %1030 = vmatpush1.xpose.msra.mxu0 0.0
  %1031 = vmatprep.subr.mxu0 0.0
  %1032 = vmatpush1.xpose.msra.mxu0 0.0
  %1033 = vmatprep.subr.mxu0 0.0
  %1034 = vmatpush1.xpose.msra.mxu0 0.0
  %1035 = vmatprep.subr.mxu0 0.0
  %1036 = vmatpush1.xpose.msra.mxu0 0.0
  %1037 = vmatprep.subr.mxu0 0.0
  %1038 = vmatpush1.xpose.msra.mxu0 0.0
  %1039 = vmatprep.subr.mxu0 0.0
  %1040 = vmatpush1.xpose.msra.mxu0 0.0
  %1041 = vmatprep.subr.mxu0 0.0
  %1042 = vmatpush1.xpose.msra.mxu0 0.0
  %1043 = vmatprep.subr.mxu0 0.0
  %1044 = vmatpush1.xpose.msra.mxu0 0.0
  %1045 = vmatprep.subr.mxu0 0.0
  %1046 = vmatpush1.xpose.msra.mxu0 0.0
  %1047 = vmatprep.subr.mxu0 0.0
  %1048 = vmatpush1.xpose.msra.mxu0 0.0
  %1049 = vmatprep.subr.mxu0 0.0
  %1050 = vmatpush1.xpose.msra.mxu0 0.0
  %1051 = vmatprep.subr.mxu0 0.0
  %1052 = vmatpush1.xpose.msra.mxu0 0.0
  %1053 = vmatprep.subr.mxu0 0.0
  %1054 = vmatpush1.xpose.msra.mxu0 0.0
  %1055 = vmatprep.subr.mxu0 0.0
  %1056 = vmatpush1.xpose.msra.mxu0 0.0
  %1057 = vmatprep.subr.mxu0 0.0
  %1058 = vmatpush1.xpose.msra.mxu0 0.0
  %1059 = vmatprep.subr.mxu0 0.0
  %1060 = vmatpush1.xpose.msra.mxu0 0.0
  %1061 = vmatprep.subr.mxu0 0.0
  %1062 = vmatpush1.xpose.msra.mxu0 0.0
  %1063 = vmatprep.subr.mxu0 0.0
  %1064 = vmatpush1.xpose.msra.mxu0 0.0
  %1065 = vmatprep.subr.mxu0 0.0
  %1066 = vmatpush1.xpose.msra.mxu0 0.0
  %1067 = vmatprep.subr.mxu0 0.0
  %1068 = vmatpush1.xpose.msra.mxu0 0.0
  %1069 = vmatprep.subr.mxu0 0.0
  %1070 = vmatpush1.xpose.msra.mxu0 0.0
  %1071 = vmatprep.subr.mxu0 0.0
  %1072 = vmatpush1.xpose.msra.mxu0 0.0
  %1073 = vmatprep.subr.mxu0 0.0
  %1074 = vmatpush1.xpose.msra.mxu0 0.0
  %1075 = vmatprep.subr.mxu0 0.0
  %1076 = vmatpush1.xpose.msra.mxu0 0.0
  %1077 = vmatprep.subr.mxu0 0.0
  %1078 = vmatpush1.xpose.msra.mxu0 0.0
  %1079 = vmatprep.subr.mxu0 0.0
  %1080 = vmatpush1.xpose.msra.mxu0 0.0
  %1081 = vmatprep.subr.mxu0 0.0
  %1082 = vmatpush1.xpose.msra.mxu0 0.0
  %1083 = vmatprep.mubr.f32.mxu0 0.0
  %1084 = vmatmul.mubr.f32.gmra.mrb[0].mxu0 %v1008
  %v1085 = vpop.f32.mrb[0].mxu0
  %v1086 = vadd.f32 0.0, %v1085
  %v1087 = vpop.f32.mrb[0].mxu0
  %1088 = vmatprep.mubr.f32.mxu0 0.0
  %1089 = vmatmul.mubr.f32.gmra.mrb[0].mxu0 %v1011
  %v1090 = vpop.f32.mrb[0].mxu0
  %v1091 = vadd.f32 0.0, %v1090
  %v1092 = vpop.f32.mrb[0].mxu0
  %1093 = vdwg.mxu0
  %v1094 = vmul.f32 %v1086, 0.25
  %v1095 = vmul.f32 %v1091, 0.25
  %v1096 = vadd.f32 %v1094, %v280
  %v1097 = vadd.f32 %v1095, %v281
  %v1098 = vsel %vm546, %v1096, -inf
  %1099 = vmax.xlane.f32.xlu0 %v1098
  %v1100 = vpop.xlane.xlu0 %1099
  %v1101 = vsel %vm546, %v1097, -inf
  %1102 = vmax.xlane.f32.xlu0 %v1101
  %v1103 = vpop.xlane.xlu0 %1102
  %v1104 = vsub.f32 %v1096, %v1100
  %v1105 = vsub.f32 %v1097, %v1103
  %v1106 = vmul.f32 %v1104, 1.442695
  %v1107 = vpow.pop %v1106
  %v1108 = vmul.f32 %v1105, 1.442695
  %v1109 = vpow.pop %v1108
  %v1110 = vsel %vm546, %v1107, 0.0
  %1111 = vadd.xlane.f32.xlu0 %v1110
  %v1112 = vpop.xlane.xlu0 %1111
  %v1113 = vsel %vm546, %v1109, 0.0
  %1114 = vadd.xlane.f32.xlu0 %v1113
  %v1115 = vpop.xlane.xlu0 %1114
  %v1116 = vrcp.pop %v1112
  %v1117 = vmul.f32 %v1107, %v1116
  %v1118 = vrcp.pop %v1115
  %v1119 = vmul.f32 %v1109, %v1118
  %v1121 = vsel %vm546, %v1117, 0
  %v1124 = vsel %vm546, %v1119, 0
  %1126 = vmatprep.subr.mxu0 0.0
  %1127 = vmatpush1.msra.mxu0 %v999
  %1128 = vmatprep.subr.mxu0 0.0
  %1129 = vmatpush1.msra.mxu0 %v1004
  %1130 = vmatprep.subr.mxu0 0.0
  %1131 = vmatpush1.msra.mxu0 0.0
  %1132 = vmatprep.subr.mxu0 0.0
  %1133 = vmatpush1.msra.mxu0 0.0
  %1134 = vmatprep.subr.mxu0 0.0
  %1135 = vmatpush1.msra.mxu0 0.0
  %1136 = vmatprep.subr.mxu0 0.0
  %1137 = vmatpush1.msra.mxu0 0.0
  %1138 = vmatprep.subr.mxu0 0.0
  %1139 = vmatpush1.msra.mxu0 0.0
  %1140 = vmatprep.subr.mxu0 0.0
  %1141 = vmatpush1.msra.mxu0 0.0
  %1142 = vmatprep.subr.mxu0 0.0
  %1143 = vmatpush1.msra.mxu0 0.0
  %1144 = vmatprep.subr.mxu0 0.0
  %1145 = vmatpush1.msra.mxu0 0.0
  %1146 = vmatprep.subr.mxu0 0.0
  %1147 = vmatpush1.msra.mxu0 0.0
  %1148 = vmatprep.subr.mxu0 0.0
  %1149 = vmatpush1.msra.mxu0 0.0
  %1150 = vmatprep.subr.mxu0 0.0
  %1151 = vmatpush1.msra.mxu0 0.0
  %1152 = vmatprep.subr.mxu0 0.0
  %1153 = vmatpush1.msra.mxu0 0.0
  %1154 = vmatprep.subr.mxu0 0.0
  %1155 = vmatpush1.msra.mxu0 0.0
  %1156 = vmatprep.subr.mxu0 0.0
  %1157 = vmatpush1.msra.mxu0 0.0
  %1158 = vmatprep.subr.mxu0 0.0
  %1159 = vmatpush1.msra.mxu0 0.0
  %1160 = vmatprep.subr.mxu0 0.0
  %1161 = vmatpush1.msra.mxu0 0.0
  %1162 = vmatprep.subr.mxu0 0.0
  %1163 = vmatpush1.msra.mxu0 0.0
  %1164 = vmatprep.subr.mxu0 0.0
  %1165 = vmatpush1.msra.mxu0 0.0
  %1166 = vmatprep.subr.mxu0 0.0
  %1167 = vmatpush1.msra.mxu0 0.0
  %1168 = vmatprep.subr.mxu0 0.0
  %1169 = vmatpush1.msra.mxu0 0.0
  %1170 = vmatprep.subr.mxu0 0.0
  %1171 = vmatpush1.msra.mxu0 0.0
  %1172 = vmatprep.subr.mxu0 0.0
  %1173 = vmatpush1.msra.mxu0 0.0
  %1174 = vmatprep.subr.mxu0 0.0
  %1175 = vmatpush1.msra.mxu0 0.0
  %1176 = vmatprep.subr.mxu0 0.0
  %1177 = vmatpush1.msra.mxu0 0.0
  %1178 = vmatprep.subr.mxu0 0.0
  %1179 = vmatpush1.msra.mxu0 0.0
  %1180 = vmatprep.subr.mxu0 0.0
  %1181 = vmatpush1.msra.mxu0 0.0
  %1182 = vmatprep.subr.mxu0 0.0
  %1183 = vmatpush1.msra.mxu0 0.0
  %1184 = vmatprep.subr.mxu0 0.0
  %1185 = vmatpush1.msra.mxu0 0.0
  %1186 = vmatprep.subr.mxu0 0.0
  %1187 = vmatpush1.msra.mxu0 0.0
  %1188 = vmatprep.subr.mxu0 0.0
  %1189 = vmatpush1.msra.mxu0 0.0
  %1190 = vmatprep.mubr.f32.mxu0 0.0
  %1191 = vmatmul.mubr.f32.gmra.mrb[0].mxu0 %v1121
  %v1192 = vpop.f32.mrb[0].mxu0
  %v1193 = vadd.f32 0.0, %v1192
  %v1194 = vpop.f32.mrb[0].mxu0
  %1195 = vmatprep.mubr.f32.mxu0 0.0
  %1196 = vmatmul.mubr.f32.gmra.mrb[0].mxu0 %v1124
  %v1197 = vpop.f32.mrb[0].mxu0
  %v1198 = vadd.f32 0.0, %v1197
  %v1199 = vpop.f32.mrb[0].mxu0
  %1200 = vdwg.mxu0
  %s1201 = scalar_lea.vmem %s13, 16
  %v1202 = vld [vmem:[%s1201] sm:$0xff]
  %v1203 = vld [vmem:[%s1201 + $0x8] sm:$0xff]
  %v1205 = vsel %vm546, %v1193, 0
  %v1208 = vsel %vm546, %v1198, 0
  %1210 = vmatprep.subr.mxu0 0.0
  %1211 = vmatpush1.msra.mxu0 %v1202
  %1212 = vmatprep.subr.mxu0 0.0
  %1213 = vmatpush1.msra.mxu0 %v1203
  %1214 = vmatprep.subr.mxu0 0.0
  %1215 = vmatpush1.msra.mxu0 0.0
  %1216 = vmatprep.subr.mxu0 0.0
  %1217 = vmatpush1.msra.mxu0 0.0
  %1218 = vmatprep.subr.mxu0 0.0
  %1219 = vmatpush1.msra.mxu0 0.0
  %1220 = vmatprep.subr.mxu0 0.0
  %1221 = vmatpush1.msra.mxu0 0.0
  %1222 = vmatprep.subr.mxu0 0.0
  %1223 = vmatpush1.msra.mxu0 0.0
  %1224 = vmatprep.subr.mxu0 0.0
  %1225 = vmatpush1.msra.mxu0 0.0
  %1226 = vmatprep.subr.mxu0 0.0
  %1227 = vmatpush1.msra.mxu0 0.0
  %1228 = vmatprep.subr.mxu0 0.0
  %1229 = vmatpush1.msra.mxu0 0.0
  %1230 = vmatprep.subr.mxu0 0.0
  %1231 = vmatpush1.msra.mxu0 0.0
  %1232 = vmatprep.subr.mxu0 0.0
  %1233 = vmatpush1.msra.mxu0 0.0
  %1234 = vmatprep.subr.mxu0 0.0
  %1235 = vmatpush1.msra.mxu0 0.0
  %1236 = vmatprep.subr.mxu0 0.0
  %1237 = vmatpush1.msra.mxu0 0.0
  %1238 = vmatprep.subr.mxu0 0.0
  %1239 = vmatpush1.msra.mxu0 0.0
  %1240 = vmatprep.subr.mxu0 0.0
  %1241 = vmatpush1.msra.mxu0 0.0
  %1242 = vmatprep.subr.mxu0 0.0
  %1243 = vmatpush1.msra.mxu0 0.0
  %1244 = vmatprep.subr.mxu0 0.0
  %1245 = vmatpush1.msra.mxu0 0.0
  %1246 = vmatprep.subr.mxu0 0.0
  %1247 = vmatpush1.msra.mxu0 0.0
  %1248 = vmatprep.subr.mxu0 0.0
  %1249 = vmatpush1.msra.mxu0 0.0
  %1250 = vmatprep.subr.mxu0 0.0
  %1251 = vmatpush1.msra.mxu0 0.0
  %1252 = vmatprep.subr.mxu0 0.0
  %1253 = vmatpush1.msra.mxu0 0.0
  %1254 = vmatprep.subr.mxu0 0.0
  %1255 = vmatpush1.msra.mxu0 0.0
  %1256 = vmatprep.subr.mxu0 0.0
  %1257 = vmatpush1.msra.mxu0 0.0
  %1258 = vmatprep.subr.mxu0 0.0
  %1259 = vmatpush1.msra.mxu0 0.0
  %1260 = vmatprep.subr.mxu0 0.0
  %1261 = vmatpush1.msra.mxu0 0.0
  %1262 = vmatprep.subr.mxu0 0.0
  %1263 = vmatpush1.msra.mxu0 0.0
  %1264 = vmatprep.subr.mxu0 0.0
  %1265 = vmatpush1.msra.mxu0 0.0
  %1266 = vmatprep.subr.mxu0 0.0
  %1267 = vmatpush1.msra.mxu0 0.0
  %1268 = vmatprep.subr.mxu0 0.0
  %1269 = vmatpush1.msra.mxu0 0.0
  %1270 = vmatprep.subr.mxu0 0.0
  %1271 = vmatpush1.msra.mxu0 0.0
  %1272 = vmatprep.subr.mxu0 0.0
  %1273 = vmatpush1.msra.mxu0 0.0
  %1274 = vmatprep.mubr.f32.mxu0 0.0
  %1275 = vmatmul.mubr.f32.gmra.mrb[0].mxu0 %v1205
  %v1276 = vpop.f32.mrb[0].mxu0
  %v1277 = vadd.f32 0.0, %v1276
  %v1278 = vpop.f32.mrb[0].mxu0
  %1279 = vmatprep.mubr.f32.mxu0 0.0
  %1280 = vmatmul.mubr.f32.gmra.mrb[0].mxu0 %v1208
  %v1281 = vpop.f32.mrb[0].mxu0
  %v1282 = vadd.f32 0.0, %v1281
  %v1283 = vpop.f32.mrb[0].mxu0
  %1284 = vdwg.mxu0
  %v1286 = vsel %vm546, %v733, 0
  %v1289 = vsel %vm546, %v738, 0
  %1291 = vmatprep.subr.mxu0 0.0
  %1292 = vmatpush1.msra.mxu0 %v741
  %1293 = vmatprep.subr.mxu0 0.0
  %1294 = vmatpush1.msra.mxu0 %v742
  %1295 = vmatprep.subr.mxu0 0.0
  %1296 = vmatpush1.msra.mxu0 0.0
  %1297 = vmatprep.subr.mxu0 0.0
  %1298 = vmatpush1.msra.mxu0 0.0
  %1299 = vmatprep.subr.mxu0 0.0
  %1300 = vmatpush1.msra.mxu0 0.0
  %1301 = vmatprep.subr.mxu0 0.0
  %1302 = vmatpush1.msra.mxu0 0.0
  %1303 = vmatprep.subr.mxu0 0.0
  %1304 = vmatpush1.msra.mxu0 0.0
  %1305 = vmatprep.subr.mxu0 0.0
  %1306 = vmatpush1.msra.mxu0 0.0
  %1307 = vmatprep.subr.mxu0 0.0
  %1308 = vmatpush1.msra.mxu0 0.0
  %1309 = vmatprep.subr.mxu0 0.0
  %1310 = vmatpush1.msra.mxu0 0.0
  %1311 = vmatprep.subr.mxu0 0.0
  %1312 = vmatpush1.msra.mxu0 0.0
  %1313 = vmatprep.subr.mxu0 0.0
  %1314 = vmatpush1.msra.mxu0 0.0
  %1315 = vmatprep.subr.mxu0 0.0
  %1316 = vmatpush1.msra.mxu0 0.0
  %1317 = vmatprep.subr.mxu0 0.0
  %1318 = vmatpush1.msra.mxu0 0.0
  %1319 = vmatprep.subr.mxu0 0.0
  %1320 = vmatpush1.msra.mxu0 0.0
  %1321 = vmatprep.subr.mxu0 0.0
  %1322 = vmatpush1.msra.mxu0 0.0
  %1323 = vmatprep.subr.mxu0 0.0
  %1324 = vmatpush1.msra.mxu0 0.0
  %1325 = vmatprep.subr.mxu0 0.0
  %1326 = vmatpush1.msra.mxu0 0.0
  %1327 = vmatprep.subr.mxu0 0.0
  %1328 = vmatpush1.msra.mxu0 0.0
  %1329 = vmatprep.subr.mxu0 0.0
  %1330 = vmatpush1.msra.mxu0 0.0
  %1331 = vmatprep.subr.mxu0 0.0
  %1332 = vmatpush1.msra.mxu0 0.0
  %1333 = vmatprep.subr.mxu0 0.0
  %1334 = vmatpush1.msra.mxu0 0.0
  %1335 = vmatprep.subr.mxu0 0.0
  %1336 = vmatpush1.msra.mxu0 0.0
  %1337 = vmatprep.subr.mxu0 0.0
  %1338 = vmatpush1.msra.mxu0 0.0
  %1339 = vmatprep.subr.mxu0 0.0
  %1340 = vmatpush1.msra.mxu0 0.0
  %1341 = vmatprep.subr.mxu0 0.0
  %1342 = vmatpush1.msra.mxu0 0.0
  %1343 = vmatprep.subr.mxu0 0.0
  %1344 = vmatpush1.msra.mxu0 0.0
  %1345 = vmatprep.subr.mxu0 0.0
  %1346 = vmatpush1.msra.mxu0 0.0
  %1347 = vmatprep.subr.mxu0 0.0
  %1348 = vmatpush1.msra.mxu0 0.0
  %1349 = vmatprep.subr.mxu0 0.0
  %1350 = vmatpush1.msra.mxu0 0.0
  %1351 = vmatprep.subr.mxu0 0.0
  %1352 = vmatpush1.msra.mxu0 0.0
  %1353 = vmatprep.subr.mxu0 0.0
  %1354 = vmatpush1.msra.mxu0 0.0
  %1355 = vmatprep.mubr.f32.mxu0 0.0
  %1356 = vmatmul.mubr.f32.gmra.mrb[0].mxu0 %v1286
  %v1357 = vpop.f32.mrb[0].mxu0
  %v1358 = vadd.f32 %v1277, %v1357
  %v1359 = vpop.f32.mrb[0].mxu0
  %1360 = vmatprep.mubr.f32.mxu0 0.0
  %1361 = vmatmul.mubr.f32.gmra.mrb[0].mxu0 %v1289
  %v1362 = vpop.f32.mrb[0].mxu0
  %v1363 = vadd.f32 %v1282, %v1362
  %v1364 = vpop.f32.mrb[0].mxu0
  %1365 = vdwg.mxu0
  %v1366 = vld [vmem:[%s14] sm:$0x1]
  %v1368 = vlaneseq
  %v1369 = vshrl.u32 %v1368, 7
  %v1370 = vsub.s32 0, %v1369
  %v1371 = vrot.slane %v1366, %v1370
  %v1373 = vadd.f32 %v1358, %v1371
  %v1374 = vadd.f32 %v1363, %v1371
  %v1375 = vadd.f32 %v1373, %v239
  %v1376 = vadd.f32 %v1374, %v240
  %v1377 = vld [vmem:[%s15] sm:$0x1]
  %v1378 = vld [vmem:[%s16] sm:$0x1]
  %v1379 = vsel %vm197, %v1375, 0.0
  %1380 = vadd.xlane.f32.xlu0 %v1379
  %v1381 = vpop.xlane.xlu0 %1380
  %v1382 = vsel %vm197, %v1376, 0.0
  %1383 = vadd.xlane.f32.xlu0 %v1382
  %v1384 = vpop.xlane.xlu0 %1383
  %v1385 = vmul.f32 %v1381, %v204
  %v1386 = vmul.f32 %v1384, %v204
  %v1387 = vsub.f32 %v1375, %v1385
  %v1388 = vsub.f32 %v1376, %v1386
  %v1389 = vmul.f32 %v1387, %v1387
  %v1390 = vmul.f32 %v1388, %v1388
  %v1391 = vsel %vm197, %v1389, 0.0
  %1392 = vadd.xlane.f32.xlu0 %v1391
  %v1393 = vpop.xlane.xlu0 %1392
  %v1394 = vsel %vm197, %v1390, 0.0
  %1395 = vadd.xlane.f32.xlu0 %v1394
  %v1396 = vpop.xlane.xlu0 %1395
  %v1397 = vmul.f32 %v1393, %v204
  %v1398 = vmul.f32 %v1396, %v204
  %v1399 = vadd.f32 %v1397, 1e-12
  %v1400 = vadd.f32 %v1398, 1e-12
  %v1401 = vrsqrt.pop %v1399
  %v1402 = vrsqrt.pop %v1400
  %v1403 = vmul.f32 %v1387, %v1401
  %v1404 = vmul.f32 %v1388, %v1402
  %v1406 = vlaneseq
  %v1407 = vshrl.u32 %v1406, 7
  %v1408 = vsub.s32 0, %v1407
  %v1409 = vrot.slane %v1377, %v1408
  %v1411 = vmul.f32 %v1403, %v1409
  %v1412 = vmul.f32 %v1404, %v1409
  %v1414 = vlaneseq
  %v1415 = vshrl.u32 %v1414, 7
  %v1416 = vsub.s32 0, %v1415
  %v1417 = vrot.slane %v1378, %v1416
  %v1419 = vadd.f32 %v1411, %v1417
  %v1420 = vadd.f32 %v1412, %v1417
  %v1421 = vld [vmem:[%s17] sm:$0xff]
  %v1422 = vld [vmem:[%s17 + $0x8] sm:$0xff]
  %v1423 = vld [vmem:[%s17 + $0x10] sm:$0xff]
  %v1424 = vld [vmem:[%s17 + $0x18] sm:$0xff]
  %v1425 = vld [vmem:[%s18] sm:$0x1]
  %v1427 = vlaneseq
  %v1428 = vshrl.u32 %v1427, 7
  %v1429 = vsub.s32 0, %v1428
  %v1430 = vrot.slane %v1425, %v1429
  %v1433 = vsel %vm197, %v1419, 0
  %v1436 = vsel %vm197, %v1420, 0
  %1438 = vmatprep.subr.mxu0 0.0
  %1439 = vmatpush1.msra.mxu0 %v1421
  %1440 = vmatprep.subr.mxu0 0.0
  %1441 = vmatpush1.msra.mxu0 %v1422
  %1442 = vmatprep.subr.mxu0 0.0
  %1443 = vmatpush1.msra.mxu0 %v1423
  %1444 = vmatprep.subr.mxu0 0.0
  %1445 = vmatpush1.msra.mxu0 %v1424
  %1446 = vmatprep.subr.mxu0 0.0
  %1447 = vmatpush1.msra.mxu0 0.0
  %1448 = vmatprep.subr.mxu0 0.0
  %1449 = vmatpush1.msra.mxu0 0.0
  %1450 = vmatprep.subr.mxu0 0.0
  %1451 = vmatpush1.msra.mxu0 0.0
  %1452 = vmatprep.subr.mxu0 0.0
  %1453 = vmatpush1.msra.mxu0 0.0
  %1454 = vmatprep.subr.mxu0 0.0
  %1455 = vmatpush1.msra.mxu0 0.0
  %1456 = vmatprep.subr.mxu0 0.0
  %1457 = vmatpush1.msra.mxu0 0.0
  %1458 = vmatprep.subr.mxu0 0.0
  %1459 = vmatpush1.msra.mxu0 0.0
  %1460 = vmatprep.subr.mxu0 0.0
  %1461 = vmatpush1.msra.mxu0 0.0
  %1462 = vmatprep.subr.mxu0 0.0
  %1463 = vmatpush1.msra.mxu0 0.0
  %1464 = vmatprep.subr.mxu0 0.0
  %1465 = vmatpush1.msra.mxu0 0.0
  %1466 = vmatprep.subr.mxu0 0.0
  %1467 = vmatpush1.msra.mxu0 0.0
  %1468 = vmatprep.subr.mxu0 0.0
  %1469 = vmatpush1.msra.mxu0 0.0
  %1470 = vmatprep.subr.mxu0 0.0
  %1471 = vmatpush1.msra.mxu0 0.0
  %1472 = vmatprep.subr.mxu0 0.0
  %1473 = vmatpush1.msra.mxu0 0.0
  %1474 = vmatprep.subr.mxu0 0.0
  %1475 = vmatpush1.msra.mxu0 0.0
  %1476 = vmatprep.subr.mxu0 0.0
  %1477 = vmatpush1.msra.mxu0 0.0
  %1478 = vmatprep.subr.mxu0 0.0
  %1479 = vmatpush1.msra.mxu0 0.0
  %1480 = vmatprep.subr.mxu0 0.0
  %1481 = vmatpush1.msra.mxu0 0.0
  %1482 = vmatprep.subr.mxu0 0.0
  %1483 = vmatpush1.msra.mxu0 0.0
  %1484 = vmatprep.subr.mxu0 0.0
  %1485 = vmatpush1.msra.mxu0 0.0
  %1486 = vmatprep.subr.mxu0 0.0
  %1487 = vmatpush1.msra.mxu0 0.0
  %1488 = vmatprep.subr.mxu0 0.0
  %1489 = vmatpush1.msra.mxu0 0.0
  %1490 = vmatprep.subr.mxu0 0.0
  %1491 = vmatpush1.msra.mxu0 0.0
  %1492 = vmatprep.subr.mxu0 0.0
  %1493 = vmatpush1.msra.mxu0 0.0
  %1494 = vmatprep.subr.mxu0 0.0
  %1495 = vmatpush1.msra.mxu0 0.0
  %1496 = vmatprep.subr.mxu0 0.0
  %1497 = vmatpush1.msra.mxu0 0.0
  %1498 = vmatprep.subr.mxu0 0.0
  %1499 = vmatpush1.msra.mxu0 0.0
  %1500 = vmatprep.subr.mxu0 0.0
  %1501 = vmatpush1.msra.mxu0 0.0
  %1502 = vmatprep.mubr.f32.mxu0 0.0
  %1503 = vmatmul.mubr.f32.gmra.mrb[0].mxu0 %v1433
  %v1504 = vpop.f32.mrb[0].mxu0
  %v1505 = vadd.f32 %v1430, %v1504
  %v1506 = vpop.f32.mrb[0].mxu0
  %1507 = vmatprep.mubr.f32.mxu0 0.0
  %1508 = vmatmul.mubr.f32.gmra.mrb[0].mxu0 %v1436
  %v1509 = vpop.f32.mrb[0].mxu0
  %v1510 = vadd.f32 %v1430, %v1509
  %v1511 = vpop.f32.mrb[0].mxu0
  %1512 = vdwg.mxu0
  %v1513 = vmul.f32 %v1505, 0.5
  %v1514 = vmul.f32 %v1510, 0.5
  %v1515 = vmul.f32 %v1505, 0.70710677
  %v1516 = vmul.f32 %v1510, 0.70710677
  %v1517 = vand.u32 2147483647, %v1515
  %v1518 = vand.u32 2147483647, %v1516
  %v1519 = vmul.f32 %v1517, 0.3275911
  %v1520 = vmul.f32 %v1518, 0.3275911
  %v1521 = vadd.f32 %v1519, 1.0
  %v1522 = vadd.f32 %v1520, 1.0
  %v1523 = vrcp.pop %v1521
  %v1524 = vmul.f32 1.0, %v1523
  %v1525 = vrcp.pop %v1522
  %v1526 = vmul.f32 1.0, %v1525
  %v1527 = vmul.f32 %v1524, 1.0614054
  %v1528 = vmul.f32 %v1526, 1.0614054
  %v1529 = vadd.f32 %v1527, -1.4531521
  %v1530 = vadd.f32 %v1528, -1.4531521
  %v1531 = vmul.f32 %v1529, %v1524
  %v1532 = vmul.f32 %v1530, %v1526
  %v1533 = vadd.f32 %v1531, 1.4214138
  %v1534 = vadd.f32 %v1532, 1.4214138
  %v1535 = vmul.f32 %v1533, %v1524
  %v1536 = vmul.f32 %v1534, %v1526
  %v1537 = vadd.f32 %v1535, -0.28449672
  %v1538 = vadd.f32 %v1536, -0.28449672
  %v1539 = vmul.f32 %v1537, %v1524
  %v1540 = vmul.f32 %v1538, %v1526
  %v1541 = vadd.f32 %v1539, 0.2548296
  %v1542 = vadd.f32 %v1540, 0.2548296
  %v1543 = vmul.f32 %v1541, %v1524
  %v1544 = vmul.f32 %v1542, %v1526
  %v1545 = vsub.f32 0.0, %v1517
  %v1546 = vsub.f32 0.0, %v1518
  %v1547 = vmul.f32 %v1545, %v1517
  %v1548 = vmul.f32 %v1546, %v1518
  %v1549 = vmul.f32 %v1547, 1.442695
  %v1550 = vpow.pop %v1549
  %v1551 = vmul.f32 %v1548, 1.442695
  %v1552 = vpow.pop %v1551
  %v1553 = vmul.f32 %v1543, %v1550
  %v1554 = vmul.f32 %v1544, %v1552
  %v1555 = vsub.f32 1.0, %v1553
  %v1556 = vsub.f32 1.0, %v1554
  %vm1557 = vcmp.ge.f32.partialorder %v1515, 0.0
  %vm1558 = vcmp.ge.f32.partialorder %v1516, 0.0
  %v1559 = vsub.f32 0.0, %v1555
  %v1560 = vsub.f32 0.0, %v1556
  %v1561 = vsel %vm1557, %v1555, %v1559
  %v1562 = vsel %vm1558, %v1556, %v1560
  %v1563 = vadd.f32 %v1561, 1.0
  %v1564 = vadd.f32 %v1562, 1.0
  %v1565 = vmul.f32 %v1513, %v1563
  %v1566 = vmul.f32 %v1514, %v1564
  %v1567 = vld [vmem:[%s19] sm:$0xff]
  %v1568 = vld [vmem:[%s19 + $0x8] sm:$0xff]
  %v1569 = vld [vmem:[%s19 + $0x10] sm:$0xff]
  %v1570 = vld [vmem:[%s19 + $0x18] sm:$0xff]
  %v1571 = vld [vmem:[%s19 + $0x20] sm:$0xff]
  %v1572 = vld [vmem:[%s19 + $0x28] sm:$0xff]
  %v1573 = vld [vmem:[%s19 + $0x30] sm:$0xff]
  %v1574 = vld [vmem:[%s19 + $0x38] sm:$0xff]
  %v1575 = vld [vmem:[%s20] sm:$0x1]
  %v1577 = vlaneseq
  %v1578 = vshrl.u32 %v1577, 7
  %v1579 = vsub.s32 0, %v1578
  %v1580 = vrot.slane %v1575, %v1579
  %vm1582 = vcmask 523264
  %v1584 = vsel %vm1582, %v1565, 0
  %v1587 = vsel %vm1582, %v1566, 0
  %1589 = vmatprep.subr.mxu0 0.0
  %1590 = vmatpush1.msra.mxu0 %v1567
  %1591 = vmatprep.subr.mxu0 0.0
  %1592 = vmatpush1.msra.mxu0 %v1568
  %1593 = vmatprep.subr.mxu0 0.0
  %1594 = vmatpush1.msra.mxu0 %v1569
  %1595 = vmatprep.subr.mxu0 0.0
  %1596 = vmatpush1.msra.mxu0 %v1570
  %1597 = vmatprep.subr.mxu0 0.0
  %1598 = vmatpush1.msra.mxu0 %v1571
  %1599 = vmatprep.subr.mxu0 0.0
  %1600 = vmatpush1.msra.mxu0 %v1572
  %1601 = vmatprep.subr.mxu0 0.0
  %1602 = vmatpush1.msra.mxu0 %v1573
  %1603 = vmatprep.subr.mxu0 0.0
  %1604 = vmatpush1.msra.mxu0 %v1574
  %1605 = vmatprep.subr.mxu0 0.0
  %1606 = vmatpush1.msra.mxu0 0.0
  %1607 = vmatprep.subr.mxu0 0.0
  %1608 = vmatpush1.msra.mxu0 0.0
  %1609 = vmatprep.subr.mxu0 0.0
  %1610 = vmatpush1.msra.mxu0 0.0
  %1611 = vmatprep.subr.mxu0 0.0
  %1612 = vmatpush1.msra.mxu0 0.0
  %1613 = vmatprep.subr.mxu0 0.0
  %1614 = vmatpush1.msra.mxu0 0.0
  %1615 = vmatprep.subr.mxu0 0.0
  %1616 = vmatpush1.msra.mxu0 0.0
  %1617 = vmatprep.subr.mxu0 0.0
  %1618 = vmatpush1.msra.mxu0 0.0
  %1619 = vmatprep.subr.mxu0 0.0
  %1620 = vmatpush1.msra.mxu0 0.0
  %1621 = vmatprep.subr.mxu0 0.0
  %1622 = vmatpush1.msra.mxu0 0.0
  %1623 = vmatprep.subr.mxu0 0.0
  %1624 = vmatpush1.msra.mxu0 0.0
  %1625 = vmatprep.subr.mxu0 0.0
  %1626 = vmatpush1.msra.mxu0 0.0
  %1627 = vmatprep.subr.mxu0 0.0
  %1628 = vmatpush1.msra.mxu0 0.0
  %1629 = vmatprep.subr.mxu0 0.0
  %1630 = vmatpush1.msra.mxu0 0.0
  %1631 = vmatprep.subr.mxu0 0.0
  %1632 = vmatpush1.msra.mxu0 0.0
  %1633 = vmatprep.subr.mxu0 0.0
  %1634 = vmatpush1.msra.mxu0 0.0
  %1635 = vmatprep.subr.mxu0 0.0
  %1636 = vmatpush1.msra.mxu0 0.0
  %1637 = vmatprep.subr.mxu0 0.0
  %1638 = vmatpush1.msra.mxu0 0.0
  %1639 = vmatprep.subr.mxu0 0.0
  %1640 = vmatpush1.msra.mxu0 0.0
  %1641 = vmatprep.subr.mxu0 0.0
  %1642 = vmatpush1.msra.mxu0 0.0
  %1643 = vmatprep.subr.mxu0 0.0
  %1644 = vmatpush1.msra.mxu0 0.0
  %1645 = vmatprep.subr.mxu0 0.0
  %1646 = vmatpush1.msra.mxu0 0.0
  %1647 = vmatprep.subr.mxu0 0.0
  %1648 = vmatpush1.msra.mxu0 0.0
  %1649 = vmatprep.subr.mxu0 0.0
  %1650 = vmatpush1.msra.mxu0 0.0
  %1651 = vmatprep.subr.mxu0 0.0
  %1652 = vmatpush1.msra.mxu0 0.0
  %1653 = vmatprep.mubr.f32.mxu0 0.0
  %1654 = vmatmul.mubr.f32.gmra.mrb[0].mxu0 %v1584
  %v1655 = vpop.f32.mrb[0].mxu0
  %v1656 = vadd.f32 %v1580, %v1655
  %v1657 = vpop.f32.mrb[0].mxu0
  %1658 = vmatprep.mubr.f32.mxu0 0.0
  %1659 = vmatmul.mubr.f32.gmra.mrb[0].mxu0 %v1587
  %v1660 = vpop.f32.mrb[0].mxu0
  %v1661 = vadd.f32 %v1580, %v1660
  %v1662 = vpop.f32.mrb[0].mxu0
  %1663 = vdwg.mxu0
  %v1664 = vadd.f32 %v1656, %v1419
  %v1665 = vadd.f32 %v1661, %v1420
  %v1666 = vld [vmem:[%s21] sm:$0x1]
  %v1667 = vld [vmem:[%s22] sm:$0x1]
  %v1668 = vsel %vm197, %v1664, 0.0
  %1669 = vadd.xlane.f32.xlu0 %v1668
  %v1670 = vpop.xlane.xlu0 %1669
  %v1671 = vsel %vm197, %v1665, 0.0
  %1672 = vadd.xlane.f32.xlu0 %v1671
  %v1673 = vpop.xlane.xlu0 %1672
  %v1674 = vmul.f32 %v1670, %v204
  %v1675 = vmul.f32 %v1673, %v204
  %v1676 = vsub.f32 %v1664, %v1674
  %v1677 = vsub.f32 %v1665, %v1675
  %v1678 = vmul.f32 %v1676, %v1676
  %v1679 = vmul.f32 %v1677, %v1677
  %v1680 = vsel %vm197, %v1678, 0.0
  %1681 = vadd.xlane.f32.xlu0 %v1680
  %v1682 = vpop.xlane.xlu0 %1681
  %v1683 = vsel %vm197, %v1679, 0.0
  %1684 = vadd.xlane.f32.xlu0 %v1683
  %v1685 = vpop.xlane.xlu0 %1684
  %v1686 = vmul.f32 %v1682, %v204
  %v1687 = vmul.f32 %v1685, %v204
  %v1688 = vadd.f32 %v1686, 1e-12
  %v1689 = vadd.f32 %v1687, 1e-12
  %v1690 = vrsqrt.pop %v1688
  %v1691 = vrsqrt.pop %v1689
  %v1692 = vmul.f32 %v1676, %v1690
  %v1693 = vmul.f32 %v1677, %v1691
  %v1695 = vlaneseq
  %v1696 = vshrl.u32 %v1695, 7
  %v1697 = vsub.s32 0, %v1696
  %v1698 = vrot.slane %v1666, %v1697
  %v1700 = vmul.f32 %v1692, %v1698
  %v1701 = vmul.f32 %v1693, %v1698
  %v1703 = vlaneseq
  %v1704 = vshrl.u32 %v1703, 7
  %v1705 = vsub.s32 0, %v1704
  %v1706 = vrot.slane %v1667, %v1705
  %v1708 = vadd.f32 %v1700, %v1706
  %v1709 = vadd.f32 %v1701, %v1706
  %s1710 = scalar_lea.vmem %s7, 64
  %v1711 = vld [vmem:[%s1710] sm:$0xff]
  %v1712 = vld [vmem:[%s1710 + $0x8] sm:$0xff]
  %v1713 = vld [vmem:[%s1710 + $0x10] sm:$0xff]
  %v1714 = vld [vmem:[%s1710 + $0x18] sm:$0xff]
  %s1715 = scalar_lea.vmem %s8, 2
  %v1716 = vld [vmem:[%s1715] sm:$0x1]
  %v1718 = vlaneseq
  %v1719 = vshrl.u32 %v1718, 7
  %v1720 = vsub.s32 0, %v1719
  %v1721 = vrot.slane %v1716, %v1720
  %v1724 = vsel %vm197, %v1708, 0
  %v1727 = vsel %vm197, %v1709, 0
  %1729 = vmatprep.subr.mxu0 0.0
  %1730 = vmatpush1.msra.mxu0 %v1711
  %1731 = vmatprep.subr.mxu0 0.0
  %1732 = vmatpush1.msra.mxu0 %v1712
  %1733 = vmatprep.subr.mxu0 0.0
  %1734 = vmatpush1.msra.mxu0 %v1713
  %1735 = vmatprep.subr.mxu0 0.0
  %1736 = vmatpush1.msra.mxu0 %v1714
  %1737 = vmatprep.subr.mxu0 0.0
  %1738 = vmatpush1.msra.mxu0 0.0
  %1739 = vmatprep.subr.mxu0 0.0
  %1740 = vmatpush1.msra.mxu0 0.0
  %1741 = vmatprep.subr.mxu0 0.0
  %1742 = vmatpush1.msra.mxu0 0.0
  %1743 = vmatprep.subr.mxu0 0.0
  %1744 = vmatpush1.msra.mxu0 0.0
  %1745 = vmatprep.subr.mxu0 0.0
  %1746 = vmatpush1.msra.mxu0 0.0
  %1747 = vmatprep.subr.mxu0 0.0
  %1748 = vmatpush1.msra.mxu0 0.0
  %1749 = vmatprep.subr.mxu0 0.0
  %1750 = vmatpush1.msra.mxu0 0.0
  %1751 = vmatprep.subr.mxu0 0.0
  %1752 = vmatpush1.msra.mxu0 0.0
  %1753 = vmatprep.subr.mxu0 0.0
  %1754 = vmatpush1.msra.mxu0 0.0
  %1755 = vmatprep.subr.mxu0 0.0
  %1756 = vmatpush1.msra.mxu0 0.0
  %1757 = vmatprep.subr.mxu0 0.0
  %1758 = vmatpush1.msra.mxu0 0.0
  %1759 = vmatprep.subr.mxu0 0.0
  %1760 = vmatpush1.msra.mxu0 0.0
  %1761 = vmatprep.subr.mxu0 0.0
  %1762 = vmatpush1.msra.mxu0 0.0
  %1763 = vmatprep.subr.mxu0 0.0
  %1764 = vmatpush1.msra.mxu0 0.0
  %1765 = vmatprep.subr.mxu0 0.0
  %1766 = vmatpush1.msra.mxu0 0.0
  %1767 = vmatprep.subr.mxu0 0.0
  %1768 = vmatpush1.msra.mxu0 0.0
  %1769 = vmatprep.subr.mxu0 0.0
  %1770 = vmatpush1.msra.mxu0 0.0
  %1771 = vmatprep.subr.mxu0 0.0
  %1772 = vmatpush1.msra.mxu0 0.0
  %1773 = vmatprep.subr.mxu0 0.0
  %1774 = vmatpush1.msra.mxu0 0.0
  %1775 = vmatprep.subr.mxu0 0.0
  %1776 = vmatpush1.msra.mxu0 0.0
  %1777 = vmatprep.subr.mxu0 0.0
  %1778 = vmatpush1.msra.mxu0 0.0
  %1779 = vmatprep.subr.mxu0 0.0
  %1780 = vmatpush1.msra.mxu0 0.0
  %1781 = vmatprep.subr.mxu0 0.0
  %1782 = vmatpush1.msra.mxu0 0.0
  %1783 = vmatprep.subr.mxu0 0.0
  %1784 = vmatpush1.msra.mxu0 0.0
  %1785 = vmatprep.subr.mxu0 0.0
  %1786 = vmatpush1.msra.mxu0 0.0
  %1787 = vmatprep.subr.mxu0 0.0
  %1788 = vmatpush1.msra.mxu0 0.0
  %1789 = vmatprep.subr.mxu0 0.0
  %1790 = vmatpush1.msra.mxu0 0.0
  %1791 = vmatprep.subr.mxu0 0.0
  %1792 = vmatpush1.msra.mxu0 0.0
  %1793 = vmatprep.mubr.f32.mxu0 0.0
  %1794 = vmatmul.mubr.f32.gmra.mrb[0].mxu0 %v1724
  %v1795 = vpop.f32.mrb[0].mxu0
  %v1796 = vadd.f32 %v1721, %v1795
  %v1797 = vpop.f32.mrb[0].mxu0
  %1798 = vmatprep.mubr.f32.mxu0 0.0
  %1799 = vmatmul.mubr.f32.gmra.mrb[0].mxu0 %v1727
  %v1800 = vpop.f32.mrb[0].mxu0
  %v1801 = vadd.f32 %v1721, %v1800
  %v1802 = vpop.f32.mrb[0].mxu0
  %1803 = vdwg.mxu0
  %s1804 = scalar_lea.vmem %s9, 64
  %v1805 = vld [vmem:[%s1804] sm:$0xff]
  %v1806 = vld [vmem:[%s1804 + $0x8] sm:$0xff]
  %v1807 = vld [vmem:[%s1804 + $0x10] sm:$0xff]
  %v1808 = vld [vmem:[%s1804 + $0x18] sm:$0xff]
  %s1809 = scalar_lea.vmem %s10, 2
  %v1810 = vld [vmem:[%s1809] sm:$0x1]
  %v1812 = vlaneseq
  %v1813 = vshrl.u32 %v1812, 7
  %v1814 = vsub.s32 0, %v1813
  %v1815 = vrot.slane %v1810, %v1814
  %1817 = vmatprep.subr.mxu0 0.0
  %1818 = vmatpush1.msra.mxu0 %v1805
  %1819 = vmatprep.subr.mxu0 0.0
  %1820 = vmatpush1.msra.mxu0 %v1806
  %1821 = vmatprep.subr.mxu0 0.0
  %1822 = vmatpush1.msra.mxu0 %v1807
  %1823 = vmatprep.subr.mxu0 0.0
  %1824 = vmatpush1.msra.mxu0 %v1808
  %1825 = vmatprep.subr.mxu0 0.0
  %1826 = vmatpush1.msra.mxu0 0.0
  %1827 = vmatprep.subr.mxu0 0.0
  %1828 = vmatpush1.msra.mxu0 0.0
  %1829 = vmatprep.subr.mxu0 0.0
  %1830 = vmatpush1.msra.mxu0 0.0
  %1831 = vmatprep.subr.mxu0 0.0
  %1832 = vmatpush1.msra.mxu0 0.0
  %1833 = vmatprep.subr.mxu0 0.0
  %1834 = vmatpush1.msra.mxu0 0.0
  %1835 = vmatprep.subr.mxu0 0.0
  %1836 = vmatpush1.msra.mxu0 0.0
  %1837 = vmatprep.subr.mxu0 0.0
  %1838 = vmatpush1.msra.mxu0 0.0
  %1839 = vmatprep.subr.mxu0 0.0
  %1840 = vmatpush1.msra.mxu0 0.0
  %1841 = vmatprep.subr.mxu0 0.0
  %1842 = vmatpush1.msra.mxu0 0.0
  %1843 = vmatprep.subr.mxu0 0.0
  %1844 = vmatpush1.msra.mxu0 0.0
  %1845 = vmatprep.subr.mxu0 0.0
  %1846 = vmatpush1.msra.mxu0 0.0
  %1847 = vmatprep.subr.mxu0 0.0
  %1848 = vmatpush1.msra.mxu0 0.0
  %1849 = vmatprep.subr.mxu0 0.0
  %1850 = vmatpush1.msra.mxu0 0.0
  %1851 = vmatprep.subr.mxu0 0.0
  %1852 = vmatpush1.msra.mxu0 0.0
  %1853 = vmatprep.subr.mxu0 0.0
  %1854 = vmatpush1.msra.mxu0 0.0
  %1855 = vmatprep.subr.mxu0 0.0
  %1856 = vmatpush1.msra.mxu0 0.0
  %1857 = vmatprep.subr.mxu0 0.0
  %1858 = vmatpush1.msra.mxu0 0.0
  %1859 = vmatprep.subr.mxu0 0.0
  %1860 = vmatpush1.msra.mxu0 0.0
  %1861 = vmatprep.subr.mxu0 0.0
  %1862 = vmatpush1.msra.mxu0 0.0
  %1863 = vmatprep.subr.mxu0 0.0
  %1864 = vmatpush1.msra.mxu0 0.0
  %1865 = vmatprep.subr.mxu0 0.0
  %1866 = vmatpush1.msra.mxu0 0.0
  %1867 = vmatprep.subr.mxu0 0.0
  %1868 = vmatpush1.msra.mxu0 0.0
  %1869 = vmatprep.subr.mxu0 0.0
  %1870 = vmatpush1.msra.mxu0 0.0
  %1871 = vmatprep.subr.mxu0 0.0
  %1872 = vmatpush1.msra.mxu0 0.0
  %1873 = vmatprep.subr.mxu0 0.0
  %1874 = vmatpush1.msra.mxu0 0.0
  %1875 = vmatprep.subr.mxu0 0.0
  %1876 = vmatpush1.msra.mxu0 0.0
  %1877 = vmatprep.subr.mxu0 0.0
  %1878 = vmatpush1.msra.mxu0 0.0
  %1879 = vmatprep.subr.mxu0 0.0
  %1880 = vmatpush1.msra.mxu0 0.0
  %1881 = vmatprep.mubr.f32.mxu0 0.0
  %1882 = vmatmul.mubr.f32.gmra.mrb[0].mxu0 %v1724
  %v1883 = vpop.f32.mrb[0].mxu0
  %v1884 = vadd.f32 %v1815, %v1883
  %v1885 = vpop.f32.mrb[0].mxu0
  %1886 = vmatprep.mubr.f32.mxu0 0.0
  %1887 = vmatmul.mubr.f32.gmra.mrb[0].mxu0 %v1727
  %v1888 = vpop.f32.mrb[0].mxu0
  %v1889 = vadd.f32 %v1815, %v1888
  %v1890 = vpop.f32.mrb[0].mxu0
  %1891 = vdwg.mxu0
  %s1892 = scalar_lea.vmem %s11, 64
  %v1893 = vld [vmem:[%s1892] sm:$0xff]
  %v1894 = vld [vmem:[%s1892 + $0x8] sm:$0xff]
  %v1895 = vld [vmem:[%s1892 + $0x10] sm:$0xff]
  %v1896 = vld [vmem:[%s1892 + $0x18] sm:$0xff]
  %s1897 = scalar_lea.vmem %s12, 2
  %v1898 = vld [vmem:[%s1897] sm:$0x1]
  %v1900 = vlaneseq
  %v1901 = vshrl.u32 %v1900, 7
  %v1902 = vsub.s32 0, %v1901
  %v1903 = vrot.slane %v1898, %v1902
  %1905 = vmatprep.subr.mxu0 0.0
  %1906 = vmatpush1.msra.mxu0 %v1893
  %1907 = vmatprep.subr.mxu0 0.0
  %1908 = vmatpush1.msra.mxu0 %v1894
  %1909 = vmatprep.subr.mxu0 0.0
  %1910 = vmatpush1.msra.mxu0 %v1895
  %1911 = vmatprep.subr.mxu0 0.0
  %1912 = vmatpush1.msra.mxu0 %v1896
  %1913 = vmatprep.subr.mxu0 0.0
  %1914 = vmatpush1.msra.mxu0 0.0
  %1915 = vmatprep.subr.mxu0 0.0
  %1916 = vmatpush1.msra.mxu0 0.0
  %1917 = vmatprep.subr.mxu0 0.0
  %1918 = vmatpush1.msra.mxu0 0.0
  %1919 = vmatprep.subr.mxu0 0.0
  %1920 = vmatpush1.msra.mxu0 0.0
  %1921 = vmatprep.subr.mxu0 0.0
  %1922 = vmatpush1.msra.mxu0 0.0
  %1923 = vmatprep.subr.mxu0 0.0
  %1924 = vmatpush1.msra.mxu0 0.0
  %1925 = vmatprep.subr.mxu0 0.0
  %1926 = vmatpush1.msra.mxu0 0.0
  %1927 = vmatprep.subr.mxu0 0.0
  %1928 = vmatpush1.msra.mxu0 0.0
  %1929 = vmatprep.subr.mxu0 0.0
  %1930 = vmatpush1.msra.mxu0 0.0
  %1931 = vmatprep.subr.mxu0 0.0
  %1932 = vmatpush1.msra.mxu0 0.0
  %1933 = vmatprep.subr.mxu0 0.0
  %1934 = vmatpush1.msra.mxu0 0.0
  %1935 = vmatprep.subr.mxu0 0.0
  %1936 = vmatpush1.msra.mxu0 0.0
  %1937 = vmatprep.subr.mxu0 0.0
  %1938 = vmatpush1.msra.mxu0 0.0
  %1939 = vmatprep.subr.mxu0 0.0
  %1940 = vmatpush1.msra.mxu0 0.0
  %1941 = vmatprep.subr.mxu0 0.0
  %1942 = vmatpush1.msra.mxu0 0.0
  %1943 = vmatprep.subr.mxu0 0.0
  %1944 = vmatpush1.msra.mxu0 0.0
  %1945 = vmatprep.subr.mxu0 0.0
  %1946 = vmatpush1.msra.mxu0 0.0
  %1947 = vmatprep.subr.mxu0 0.0
  %1948 = vmatpush1.msra.mxu0 0.0
  %1949 = vmatprep.subr.mxu0 0.0
  %1950 = vmatpush1.msra.mxu0 0.0
  %1951 = vmatprep.subr.mxu0 0.0
  %1952 = vmatpush1.msra.mxu0 0.0
  %1953 = vmatprep.subr.mxu0 0.0
  %1954 = vmatpush1.msra.mxu0 0.0
  %1955 = vmatprep.subr.mxu0 0.0
  %1956 = vmatpush1.msra.mxu0 0.0
  %1957 = vmatprep.subr.mxu0 0.0
  %1958 = vmatpush1.msra.mxu0 0.0
  %1959 = vmatprep.subr.mxu0 0.0
  %1960 = vmatpush1.msra.mxu0 0.0
  %1961 = vmatprep.subr.mxu0 0.0
  %1962 = vmatpush1.msra.mxu0 0.0
  %1963 = vmatprep.subr.mxu0 0.0
  %1964 = vmatpush1.msra.mxu0 0.0
  %1965 = vmatprep.subr.mxu0 0.0
  %1966 = vmatpush1.msra.mxu0 0.0
  %1967 = vmatprep.subr.mxu0 0.0
  %1968 = vmatpush1.msra.mxu0 0.0
  %1969 = vmatprep.mubr.f32.mxu0 0.0
  %1970 = vmatmul.mubr.f32.gmra.mrb[0].mxu0 %v1724
  %v1971 = vpop.f32.mrb[0].mxu0
  %v1972 = vadd.f32 %v1903, %v1971
  %v1973 = vpop.f32.mrb[0].mxu0
  %1974 = vmatprep.mubr.f32.mxu0 0.0
  %1975 = vmatmul.mubr.f32.gmra.mrb[0].mxu0 %v1727
  %v1976 = vpop.f32.mrb[0].mxu0
  %v1977 = vadd.f32 %v1903, %v1976
  %v1978 = vpop.f32.mrb[0].mxu0
  %1979 = vdwg.mxu0
  %v1981 = vsel %vm546, %v1796, 0
  %v1984 = vsel %vm546, %v1801, 0
  %v1987 = vsel %vm546, %v1884, 0
  %v1990 = vsel %vm546, %v1889, 0
  %1992 = vmatprep.subr.mxu0 0.0
  %1993 = vmatpush1.xpose.msra.mxu0 %v1987
  %1994 = vmatprep.subr.mxu0 0.0
  %1995 = vmatpush1.xpose.msra.mxu0 %v1990
  %1996 = vmatprep.subr.mxu0 0.0
  %1997 = vmatpush1.xpose.msra.mxu0 0.0
  %1998 = vmatprep.subr.mxu0 0.0
  %1999 = vmatpush1.xpose.msra.mxu0 0.0
  %2000 = vmatprep.subr.mxu0 0.0
  %2001 = vmatpush1.xpose.msra.mxu0 0.0
  %2002 = vmatprep.subr.mxu0 0.0
  %2003 = vmatpush1.xpose.msra.mxu0 0.0
  %2004 = vmatprep.subr.mxu0 0.0
  %2005 = vmatpush1.xpose.msra.mxu0 0.0
  %2006 = vmatprep.subr.mxu0 0.0
  %2007 = vmatpush1.xpose.msra.mxu0 0.0
  %2008 = vmatprep.subr.mxu0 0.0
  %2009 = vmatpush1.xpose.msra.mxu0 0.0
  %2010 = vmatprep.subr.mxu0 0.0
  %2011 = vmatpush1.xpose.msra.mxu0 0.0
  %2012 = vmatprep.subr.mxu0 0.0
  %2013 = vmatpush1.xpose.msra.mxu0 0.0
  %2014 = vmatprep.subr.mxu0 0.0
  %2015 = vmatpush1.xpose.msra.mxu0 0.0
  %2016 = vmatprep.subr.mxu0 0.0
  %2017 = vmatpush1.xpose.msra.mxu0 0.0
  %2018 = vmatprep.subr.mxu0 0.0
  %2019 = vmatpush1.xpose.msra.mxu0 0.0
  %2020 = vmatprep.subr.mxu0 0.0
  %2021 = vmatpush1.xpose.msra.mxu0 0.0
  %2022 = vmatprep.subr.mxu0 0.0
  %2023 = vmatpush1.xpose.msra.mxu0 0.0
  %2024 = vmatprep.subr.mxu0 0.0
  %2025 = vmatpush1.xpose.msra.mxu0 0.0
  %2026 = vmatprep.subr.mxu0 0.0
  %2027 = vmatpush1.xpose.msra.mxu0 0.0
  %2028 = vmatprep.subr.mxu0 0.0
  %2029 = vmatpush1.xpose.msra.mxu0 0.0
  %2030 = vmatprep.subr.mxu0 0.0
  %2031 = vmatpush1.xpose.msra.mxu0 0.0
  %2032 = vmatprep.subr.mxu0 0.0
  %2033 = vmatpush1.xpose.msra.mxu0 0.0
  %2034 = vmatprep.subr.mxu0 0.0
  %2035 = vmatpush1.xpose.msra.mxu0 0.0
  %2036 = vmatprep.subr.mxu0 0.0
  %2037 = vmatpush1.xpose.msra.mxu0 0.0
  %2038 = vmatprep.subr.mxu0 0.0
  %2039 = vmatpush1.xpose.msra.mxu0 0.0
  %2040 = vmatprep.subr.mxu0 0.0
  %2041 = vmatpush1.xpose.msra.mxu0 0.0
  %2042 = vmatprep.subr.mxu0 0.0
  %2043 = vmatpush1.xpose.msra.mxu0 0.0
  %2044 = vmatprep.subr.mxu0 0.0
  %2045 = vmatpush1.xpose.msra.mxu0 0.0
  %2046 = vmatprep.subr.mxu0 0.0
  %2047 = vmatpush1.xpose.msra.mxu0 0.0
  %2048 = vmatprep.subr.mxu0 0.0
  %2049 = vmatpush1.xpose.msra.mxu0 0.0
  %2050 = vmatprep.subr.mxu0 0.0
  %2051 = vmatpush1.xpose.msra.mxu0 0.0
  %2052 = vmatprep.subr.mxu0 0.0
  %2053 = vmatpush1.xpose.msra.mxu0 0.0
  %2054 = vmatprep.subr.mxu0 0.0
  %2055 = vmatpush1.xpose.msra.mxu0 0.0
  %2056 = vmatprep.mubr.f32.mxu0 0.0
  %2057 = vmatmul.mubr.f32.gmra.mrb[0].mxu0 %v1981
  %v2058 = vpop.f32.mrb[0].mxu0
  %v2059 = vadd.f32 0.0, %v2058
  %v2060 = vpop.f32.mrb[0].mxu0
  %2061 = vmatprep.mubr.f32.mxu0 0.0
  %2062 = vmatmul.mubr.f32.gmra.mrb[0].mxu0 %v1984
  %v2063 = vpop.f32.mrb[0].mxu0
  %v2064 = vadd.f32 0.0, %v2063
  %v2065 = vpop.f32.mrb[0].mxu0
  %2066 = vdwg.mxu0
  %v2067 = vmul.f32 %v2059, 0.25
  %v2068 = vmul.f32 %v2064, 0.25
  %v2069 = vadd.f32 %v2067, %v280
  %v2070 = vadd.f32 %v2068, %v281
  %v2071 = vsel %vm546, %v2069, -inf
  %2072 = vmax.xlane.f32.xlu0 %v2071
  %v2073 = vpop.xlane.xlu0 %2072
  %v2074 = vsel %vm546, %v2070, -inf
  %2075 = vmax.xlane.f32.xlu0 %v2074
  %v2076 = vpop.xlane.xlu0 %2075
  %v2077 = vsub.f32 %v2069, %v2073
  %v2078 = vsub.f32 %v2070, %v2076
  %v2079 = vmul.f32 %v2077, 1.442695
  %v2080 = vpow.pop %v2079
  %v2081 = vmul.f32 %v2078, 1.442695
  %v2082 = vpow.pop %v2081
  %v2083 = vsel %vm546, %v2080, 0.0
  %2084 = vadd.xlane.f32.xlu0 %v2083
  %v2085 = vpop.xlane.xlu0 %2084
  %v2086 = vsel %vm546, %v2082, 0.0
  %2087 = vadd.xlane.f32.xlu0 %v2086
  %v2088 = vpop.xlane.xlu0 %2087
  %v2089 = vrcp.pop %v2085
  %v2090 = vmul.f32 %v2080, %v2089
  %v2091 = vrcp.pop %v2088
  %v2092 = vmul.f32 %v2082, %v2091
  %v2094 = vsel %vm546, %v2090, 0
  %v2097 = vsel %vm546, %v2092, 0
  %2099 = vmatprep.subr.mxu0 0.0
  %2100 = vmatpush1.msra.mxu0 %v1972
  %2101 = vmatprep.subr.mxu0 0.0
  %2102 = vmatpush1.msra.mxu0 %v1977
  %2103 = vmatprep.subr.mxu0 0.0
  %2104 = vmatpush1.msra.mxu0 0.0
  %2105 = vmatprep.subr.mxu0 0.0
  %2106 = vmatpush1.msra.mxu0 0.0
  %2107 = vmatprep.subr.mxu0 0.0
  %2108 = vmatpush1.msra.mxu0 0.0
  %2109 = vmatprep.subr.mxu0 0.0
  %2110 = vmatpush1.msra.mxu0 0.0
  %2111 = vmatprep.subr.mxu0 0.0
  %2112 = vmatpush1.msra.mxu0 0.0
  %2113 = vmatprep.subr.mxu0 0.0
  %2114 = vmatpush1.msra.mxu0 0.0
  %2115 = vmatprep.subr.mxu0 0.0
  %2116 = vmatpush1.msra.mxu0 0.0
  %2117 = vmatprep.subr.mxu0 0.0
  %2118 = vmatpush1.msra.mxu0 0.0
  %2119 = vmatprep.subr.mxu0 0.0
  %2120 = vmatpush1.msra.mxu0 0.0
  %2121 = vmatprep.subr.mxu0 0.0
  %2122 = vmatpush1.msra.mxu0 0.0
  %2123 = vmatprep.subr.mxu0 0.0
  %2124 = vmatpush1.msra.mxu0 0.0
  %2125 = vmatprep.subr.mxu0 0.0
  %2126 = vmatpush1.msra.mxu0 0.0
  %2127 = vmatprep.subr.mxu0 0.0
  %2128 = vmatpush1.msra.mxu0 0.0
  %2129 = vmatprep.subr.mxu0 0.0
  %2130 = vmatpush1.msra.mxu0 0.0
  %2131 = vmatprep.subr.mxu0 0.0
  %2132 = vmatpush1.msra.mxu0 0.0
  %2133 = vmatprep.subr.mxu0 0.0
  %2134 = vmatpush1.msra.mxu0 0.0
  %2135 = vmatprep.subr.mxu0 0.0
  %2136 = vmatpush1.msra.mxu0 0.0
  %2137 = vmatprep.subr.mxu0 0.0
  %2138 = vmatpush1.msra.mxu0 0.0
  %2139 = vmatprep.subr.mxu0 0.0
  %2140 = vmatpush1.msra.mxu0 0.0
  %2141 = vmatprep.subr.mxu0 0.0
  %2142 = vmatpush1.msra.mxu0 0.0
  %2143 = vmatprep.subr.mxu0 0.0
  %2144 = vmatpush1.msra.mxu0 0.0
  %2145 = vmatprep.subr.mxu0 0.0
  %2146 = vmatpush1.msra.mxu0 0.0
  %2147 = vmatprep.subr.mxu0 0.0
  %2148 = vmatpush1.msra.mxu0 0.0
  %2149 = vmatprep.subr.mxu0 0.0
  %2150 = vmatpush1.msra.mxu0 0.0
  %2151 = vmatprep.subr.mxu0 0.0
  %2152 = vmatpush1.msra.mxu0 0.0
  %2153 = vmatprep.subr.mxu0 0.0
  %2154 = vmatpush1.msra.mxu0 0.0
  %2155 = vmatprep.subr.mxu0 0.0
  %2156 = vmatpush1.msra.mxu0 0.0
  %2157 = vmatprep.subr.mxu0 0.0
  %2158 = vmatpush1.msra.mxu0 0.0
  %2159 = vmatprep.subr.mxu0 0.0
  %2160 = vmatpush1.msra.mxu0 0.0
  %2161 = vmatprep.subr.mxu0 0.0
  %2162 = vmatpush1.msra.mxu0 0.0
  %2163 = vmatprep.mubr.f32.mxu0 0.0
  %2164 = vmatmul.mubr.f32.gmra.mrb[0].mxu0 %v2094
  %v2165 = vpop.f32.mrb[0].mxu0
  %v2166 = vadd.f32 0.0, %v2165
  %v2167 = vpop.f32.mrb[0].mxu0
  %2168 = vmatprep.mubr.f32.mxu0 0.0
  %2169 = vmatmul.mubr.f32.gmra.mrb[0].mxu0 %v2097
  %v2170 = vpop.f32.mrb[0].mxu0
  %v2171 = vadd.f32 0.0, %v2170
  %v2172 = vpop.f32.mrb[0].mxu0
  %2173 = vdwg.mxu0
  %s2174 = scalar_lea.vmem %s13, 32
  %v2175 = vld [vmem:[%s2174] sm:$0xff]
  %v2176 = vld [vmem:[%s2174 + $0x8] sm:$0xff]
  %s2177 = scalar_lea.vmem %s7, 96
  %v2178 = vld [vmem:[%s2177] sm:$0xff]
  %v2179 = vld [vmem:[%s2177 + $0x8] sm:$0xff]
  %v2180 = vld [vmem:[%s2177 + $0x10] sm:$0xff]
  %v2181 = vld [vmem:[%s2177 + $0x18] sm:$0xff]
  %s2182 = scalar_lea.vmem %s8, 3
  %v2183 = vld [vmem:[%s2182] sm:$0x1]
  %v2185 = vlaneseq
  %v2186 = vshrl.u32 %v2185, 7
  %v2187 = vsub.s32 0, %v2186
  %v2188 = vrot.slane %v2183, %v2187
  %2190 = vmatprep.subr.mxu0 0.0
  %2191 = vmatpush1.msra.mxu0 %v2178
  %2192 = vmatprep.subr.mxu0 0.0
  %2193 = vmatpush1.msra.mxu0 %v2179
  %2194 = vmatprep.subr.mxu0 0.0
  %2195 = vmatpush1.msra.mxu0 %v2180
  %2196 = vmatprep.subr.mxu0 0.0
  %2197 = vmatpush1.msra.mxu0 %v2181
  %2198 = vmatprep.subr.mxu0 0.0
  %2199 = vmatpush1.msra.mxu0 0.0
  %2200 = vmatprep.subr.mxu0 0.0
  %2201 = vmatpush1.msra.mxu0 0.0
  %2202 = vmatprep.subr.mxu0 0.0
  %2203 = vmatpush1.msra.mxu0 0.0
  %2204 = vmatprep.subr.mxu0 0.0
  %2205 = vmatpush1.msra.mxu0 0.0
  %2206 = vmatprep.subr.mxu0 0.0
  %2207 = vmatpush1.msra.mxu0 0.0
  %2208 = vmatprep.subr.mxu0 0.0
  %2209 = vmatpush1.msra.mxu0 0.0
  %2210 = vmatprep.subr.mxu0 0.0
  %2211 = vmatpush1.msra.mxu0 0.0
  %2212 = vmatprep.subr.mxu0 0.0
  %2213 = vmatpush1.msra.mxu0 0.0
  %2214 = vmatprep.subr.mxu0 0.0
  %2215 = vmatpush1.msra.mxu0 0.0
  %2216 = vmatprep.subr.mxu0 0.0
  %2217 = vmatpush1.msra.mxu0 0.0
  %2218 = vmatprep.subr.mxu0 0.0
  %2219 = vmatpush1.msra.mxu0 0.0
  %2220 = vmatprep.subr.mxu0 0.0
  %2221 = vmatpush1.msra.mxu0 0.0
  %2222 = vmatprep.subr.mxu0 0.0
  %2223 = vmatpush1.msra.mxu0 0.0
  %2224 = vmatprep.subr.mxu0 0.0
  %2225 = vmatpush1.msra.mxu0 0.0
  %2226 = vmatprep.subr.mxu0 0.0
  %2227 = vmatpush1.msra.mxu0 0.0
  %2228 = vmatprep.subr.mxu0 0.0
  %2229 = vmatpush1.msra.mxu0 0.0
  %2230 = vmatprep.subr.mxu0 0.0
  %2231 = vmatpush1.msra.mxu0 0.0
  %2232 = vmatprep.subr.mxu0 0.0
  %2233 = vmatpush1.msra.mxu0 0.0
  %2234 = vmatprep.subr.mxu0 0.0
  %2235 = vmatpush1.msra.mxu0 0.0
  %2236 = vmatprep.subr.mxu0 0.0
  %2237 = vmatpush1.msra.mxu0 0.0
  %2238 = vmatprep.subr.mxu0 0.0
  %2239 = vmatpush1.msra.mxu0 0.0
  %2240 = vmatprep.subr.mxu0 0.0
  %2241 = vmatpush1.msra.mxu0 0.0
  %2242 = vmatprep.subr.mxu0 0.0
  %2243 = vmatpush1.msra.mxu0 0.0
  %2244 = vmatprep.subr.mxu0 0.0
  %2245 = vmatpush1.msra.mxu0 0.0
  %2246 = vmatprep.subr.mxu0 0.0
  %2247 = vmatpush1.msra.mxu0 0.0
  %2248 = vmatprep.subr.mxu0 0.0
  %2249 = vmatpush1.msra.mxu0 0.0
  %2250 = vmatprep.subr.mxu0 0.0
  %2251 = vmatpush1.msra.mxu0 0.0
  %2252 = vmatprep.subr.mxu0 0.0
  %2253 = vmatpush1.msra.mxu0 0.0
  %2254 = vmatprep.mubr.f32.mxu0 0.0
  %2255 = vmatmul.mubr.f32.gmra.mrb[0].mxu0 %v1724
  %v2256 = vpop.f32.mrb[0].mxu0
  %v2257 = vadd.f32 %v2188, %v2256
  %v2258 = vpop.f32.mrb[0].mxu0
  %2259 = vmatprep.mubr.f32.mxu0 0.0
  %2260 = vmatmul.mubr.f32.gmra.mrb[0].mxu0 %v1727
  %v2261 = vpop.f32.mrb[0].mxu0
  %v2262 = vadd.f32 %v2188, %v2261
  %v2263 = vpop.f32.mrb[0].mxu0
  %2264 = vdwg.mxu0
  %s2265 = scalar_lea.vmem %s9, 96
  %v2266 = vld [vmem:[%s2265] sm:$0xff]
  %v2267 = vld [vmem:[%s2265 + $0x8] sm:$0xff]
  %v2268 = vld [vmem:[%s2265 + $0x10] sm:$0xff]
  %v2269 = vld [vmem:[%s2265 + $0x18] sm:$0xff]
  %s2270 = scalar_lea.vmem %s10, 3
  %v2271 = vld [vmem:[%s2270] sm:$0x1]
  %v2273 = vlaneseq
  %v2274 = vshrl.u32 %v2273, 7
  %v2275 = vsub.s32 0, %v2274
  %v2276 = vrot.slane %v2271, %v2275
  %2278 = vmatprep.subr.mxu0 0.0
  %2279 = vmatpush1.msra.mxu0 %v2266
  %2280 = vmatprep.subr.mxu0 0.0
  %2281 = vmatpush1.msra.mxu0 %v2267
  %2282 = vmatprep.subr.mxu0 0.0
  %2283 = vmatpush1.msra.mxu0 %v2268
  %2284 = vmatprep.subr.mxu0 0.0
  %2285 = vmatpush1.msra.mxu0 %v2269
  %2286 = vmatprep.subr.mxu0 0.0
  %2287 = vmatpush1.msra.mxu0 0.0
  %2288 = vmatprep.subr.mxu0 0.0
  %2289 = vmatpush1.msra.mxu0 0.0
  %2290 = vmatprep.subr.mxu0 0.0
  %2291 = vmatpush1.msra.mxu0 0.0
  %2292 = vmatprep.subr.mxu0 0.0
  %2293 = vmatpush1.msra.mxu0 0.0
  %2294 = vmatprep.subr.mxu0 0.0
  %2295 = vmatpush1.msra.mxu0 0.0
  %2296 = vmatprep.subr.mxu0 0.0
  %2297 = vmatpush1.msra.mxu0 0.0
  %2298 = vmatprep.subr.mxu0 0.0
  %2299 = vmatpush1.msra.mxu0 0.0
  %2300 = vmatprep.subr.mxu0 0.0
  %2301 = vmatpush1.msra.mxu0 0.0
  %2302 = vmatprep.subr.mxu0 0.0
  %2303 = vmatpush1.msra.mxu0 0.0
  %2304 = vmatprep.subr.mxu0 0.0
  %2305 = vmatpush1.msra.mxu0 0.0
  %2306 = vmatprep.subr.mxu0 0.0
  %2307 = vmatpush1.msra.mxu0 0.0
  %2308 = vmatprep.subr.mxu0 0.0
  %2309 = vmatpush1.msra.mxu0 0.0
  %2310 = vmatprep.subr.mxu0 0.0
  %2311 = vmatpush1.msra.mxu0 0.0
  %2312 = vmatprep.subr.mxu0 0.0
  %2313 = vmatpush1.msra.mxu0 0.0
  %2314 = vmatprep.subr.mxu0 0.0
  %2315 = vmatpush1.msra.mxu0 0.0
  %2316 = vmatprep.subr.mxu0 0.0
  %2317 = vmatpush1.msra.mxu0 0.0
  %2318 = vmatprep.subr.mxu0 0.0
  %2319 = vmatpush1.msra.mxu0 0.0
  %2320 = vmatprep.subr.mxu0 0.0
  %2321 = vmatpush1.msra.mxu0 0.0
  %2322 = vmatprep.subr.mxu0 0.0
  %2323 = vmatpush1.msra.mxu0 0.0
  %2324 = vmatprep.subr.mxu0 0.0
  %2325 = vmatpush1.msra.mxu0 0.0
  %2326 = vmatprep.subr.mxu0 0.0
  %2327 = vmatpush1.msra.mxu0 0.0
  %2328 = vmatprep.subr.mxu0 0.0
  %2329 = vmatpush1.msra.mxu0 0.0
  %2330 = vmatprep.subr.mxu0 0.0
  %2331 = vmatpush1.msra.mxu0 0.0
  %2332 = vmatprep.subr.mxu0 0.0
  %2333 = vmatpush1.msra.mxu0 0.0
  %2334 = vmatprep.subr.mxu0 0.0
  %2335 = vmatpush1.msra.mxu0 0.0
  %2336 = vmatprep.subr.mxu0 0.0
  %2337 = vmatpush1.msra.mxu0 0.0
  %2338 = vmatprep.subr.mxu0 0.0
  %2339 = vmatpush1.msra.mxu0 0.0
  %2340 = vmatprep.subr.mxu0 0.0
  %2341 = vmatpush1.msra.mxu0 0.0
  %2342 = vmatprep.mubr.f32.mxu0 0.0
  %2343 = vmatmul.mubr.f32.gmra.mrb[0].mxu0 %v1724
  %v2344 = vpop.f32.mrb[0].mxu0
  %v2345 = vadd.f32 %v2276, %v2344
  %v2346 = vpop.f32.mrb[0].mxu0
  %2347 = vmatprep.mubr.f32.mxu0 0.0
  %2348 = vmatmul.mubr.f32.gmra.mrb[0].mxu0 %v1727
  %v2349 = vpop.f32.mrb[0].mxu0
  %v2350 = vadd.f32 %v2276, %v2349
  %v2351 = vpop.f32.mrb[0].mxu0
  %2352 = vdwg.mxu0
  %s2353 = scalar_lea.vmem %s11, 96
  %v2354 = vld [vmem:[%s2353] sm:$0xff]
  %v2355 = vld [vmem:[%s2353 + $0x8] sm:$0xff]
  %v2356 = vld [vmem:[%s2353 + $0x10] sm:$0xff]
  %v2357 = vld [vmem:[%s2353 + $0x18] sm:$0xff]
  %s2358 = scalar_lea.vmem %s12, 3
  %v2359 = vld [vmem:[%s2358] sm:$0x1]
  %v2361 = vlaneseq
  %v2362 = vshrl.u32 %v2361, 7
  %v2363 = vsub.s32 0, %v2362
  %v2364 = vrot.slane %v2359, %v2363
  %2366 = vmatprep.subr.mxu0 0.0
  %2367 = vmatpush1.msra.mxu0 %v2354
  %2368 = vmatprep.subr.mxu0 0.0
  %2369 = vmatpush1.msra.mxu0 %v2355
  %2370 = vmatprep.subr.mxu0 0.0
  %2371 = vmatpush1.msra.mxu0 %v2356
  %2372 = vmatprep.subr.mxu0 0.0
  %2373 = vmatpush1.msra.mxu0 %v2357
  %2374 = vmatprep.subr.mxu0 0.0
  %2375 = vmatpush1.msra.mxu0 0.0
  %2376 = vmatprep.subr.mxu0 0.0
  %2377 = vmatpush1.msra.mxu0 0.0
  %2378 = vmatprep.subr.mxu0 0.0
  %2379 = vmatpush1.msra.mxu0 0.0
  %2380 = vmatprep.subr.mxu0 0.0
  %2381 = vmatpush1.msra.mxu0 0.0
  %2382 = vmatprep.subr.mxu0 0.0
  %2383 = vmatpush1.msra.mxu0 0.0
  %2384 = vmatprep.subr.mxu0 0.0
  %2385 = vmatpush1.msra.mxu0 0.0
  %2386 = vmatprep.subr.mxu0 0.0
  %2387 = vmatpush1.msra.mxu0 0.0
  %2388 = vmatprep.subr.mxu0 0.0
  %2389 = vmatpush1.msra.mxu0 0.0
  %2390 = vmatprep.subr.mxu0 0.0
  %2391 = vmatpush1.msra.mxu0 0.0
  %2392 = vmatprep.subr.mxu0 0.0
  %2393 = vmatpush1.msra.mxu0 0.0
  %2394 = vmatprep.subr.mxu0 0.0
  %2395 = vmatpush1.msra.mxu0 0.0
  %2396 = vmatprep.subr.mxu0 0.0
  %2397 = vmatpush1.msra.mxu0 0.0
  %2398 = vmatprep.subr.mxu0 0.0
  %2399 = vmatpush1.msra.mxu0 0.0
  %2400 = vmatprep.subr.mxu0 0.0
  %2401 = vmatpush1.msra.mxu0 0.0
  %2402 = vmatprep.subr.mxu0 0.0
  %2403 = vmatpush1.msra.mxu0 0.0
  %2404 = vmatprep.subr.mxu0 0.0
  %2405 = vmatpush1.msra.mxu0 0.0
  %2406 = vmatprep.subr.mxu0 0.0
  %2407 = vmatpush1.msra.mxu0 0.0
  %2408 = vmatprep.subr.mxu0 0.0
  %2409 = vmatpush1.msra.mxu0 0.0
  %2410 = vmatprep.subr.mxu0 0.0
  %2411 = vmatpush1.msra.mxu0 0.0
  %2412 = vmatprep.subr.mxu0 0.0
  %2413 = vmatpush1.msra.mxu0 0.0
  %2414 = vmatprep.subr.mxu0 0.0
  %2415 = vmatpush1.msra.mxu0 0.0
  %2416 = vmatprep.subr.mxu0 0.0
  %2417 = vmatpush1.msra.mxu0 0.0
  %2418 = vmatprep.subr.mxu0 0.0
  %2419 = vmatpush1.msra.mxu0 0.0
  %2420 = vmatprep.subr.mxu0 0.0
  %2421 = vmatpush1.msra.mxu0 0.0
  %2422 = vmatprep.subr.mxu0 0.0
  %2423 = vmatpush1.msra.mxu0 0.0
  %2424 = vmatprep.subr.mxu0 0.0
  %2425 = vmatpush1.msra.mxu0 0.0
  %2426 = vmatprep.subr.mxu0 0.0
  %2427 = vmatpush1.msra.mxu0 0.0
  %2428 = vmatprep.subr.mxu0 0.0
  %2429 = vmatpush1.msra.mxu0 0.0
  %2430 = vmatprep.mubr.f32.mxu0 0.0
  %2431 = vmatmul.mubr.f32.gmra.mrb[0].mxu0 %v1724
  %v2432 = vpop.f32.mrb[0].mxu0
  %v2433 = vadd.f32 %v2364, %v2432
  %v2434 = vpop.f32.mrb[0].mxu0
  %2435 = vmatprep.mubr.f32.mxu0 0.0
  %2436 = vmatmul.mubr.f32.gmra.mrb[0].mxu0 %v1727
  %v2437 = vpop.f32.mrb[0].mxu0
  %v2438 = vadd.f32 %v2364, %v2437
  %v2439 = vpop.f32.mrb[0].mxu0
  %2440 = vdwg.mxu0
  %v2442 = vsel %vm546, %v2257, 0
  %v2445 = vsel %vm546, %v2262, 0
  %v2448 = vsel %vm546, %v2345, 0
  %v2451 = vsel %vm546, %v2350, 0
  %2453 = vmatprep.subr.mxu0 0.0
  %2454 = vmatpush1.xpose.msra.mxu0 %v2448
  %2455 = vmatprep.subr.mxu0 0.0
  %2456 = vmatpush1.xpose.msra.mxu0 %v2451
  %2457 = vmatprep.subr.mxu0 0.0
  %2458 = vmatpush1.xpose.msra.mxu0 0.0
  %2459 = vmatprep.subr.mxu0 0.0
  %2460 = vmatpush1.xpose.msra.mxu0 0.0
  %2461 = vmatprep.subr.mxu0 0.0
  %2462 = vmatpush1.xpose.msra.mxu0 0.0
  %2463 = vmatprep.subr.mxu0 0.0
  %2464 = vmatpush1.xpose.msra.mxu0 0.0
  %2465 = vmatprep.subr.mxu0 0.0
  %2466 = vmatpush1.xpose.msra.mxu0 0.0
  %2467 = vmatprep.subr.mxu0 0.0
  %2468 = vmatpush1.xpose.msra.mxu0 0.0
  %2469 = vmatprep.subr.mxu0 0.0
  %2470 = vmatpush1.xpose.msra.mxu0 0.0
  %2471 = vmatprep.subr.mxu0 0.0
  %2472 = vmatpush1.xpose.msra.mxu0 0.0
  %2473 = vmatprep.subr.mxu0 0.0
  %2474 = vmatpush1.xpose.msra.mxu0 0.0
  %2475 = vmatprep.subr.mxu0 0.0
  %2476 = vmatpush1.xpose.msra.mxu0 0.0
  %2477 = vmatprep.subr.mxu0 0.0
  %2478 = vmatpush1.xpose.msra.mxu0 0.0
  %2479 = vmatprep.subr.mxu0 0.0
  %2480 = vmatpush1.xpose.msra.mxu0 0.0
  %2481 = vmatprep.subr.mxu0 0.0
  %2482 = vmatpush1.xpose.msra.mxu0 0.0
  %2483 = vmatprep.subr.mxu0 0.0
  %2484 = vmatpush1.xpose.msra.mxu0 0.0
  %2485 = vmatprep.subr.mxu0 0.0
  %2486 = vmatpush1.xpose.msra.mxu0 0.0
  %2487 = vmatprep.subr.mxu0 0.0
  %2488 = vmatpush1.xpose.msra.mxu0 0.0
  %2489 = vmatprep.subr.mxu0 0.0
  %2490 = vmatpush1.xpose.msra.mxu0 0.0
  %2491 = vmatprep.subr.mxu0 0.0
  %2492 = vmatpush1.xpose.msra.mxu0 0.0
  %2493 = vmatprep.subr.mxu0 0.0
  %2494 = vmatpush1.xpose.msra.mxu0 0.0
  %2495 = vmatprep.subr.mxu0 0.0
  %2496 = vmatpush1.xpose.msra.mxu0 0.0
  %2497 = vmatprep.subr.mxu0 0.0
  %2498 = vmatpush1.xpose.msra.mxu0 0.0
  %2499 = vmatprep.subr.mxu0 0.0
  %2500 = vmatpush1.xpose.msra.mxu0 0.0
  %2501 = vmatprep.subr.mxu0 0.0
  %2502 = vmatpush1.xpose.msra.mxu0 0.0
  %2503 = vmatprep.subr.mxu0 0.0
  %2504 = vmatpush1.xpose.msra.mxu0 0.0
  %2505 = vmatprep.subr.mxu0 0.0
  %2506 = vmatpush1.xpose.msra.mxu0 0.0
  %2507 = vmatprep.subr.mxu0 0.0
  %2508 = vmatpush1.xpose.msra.mxu0 0.0
  %2509 = vmatprep.subr.mxu0 0.0
  %2510 = vmatpush1.xpose.msra.mxu0 0.0
  %2511 = vmatprep.subr.mxu0 0.0
  %2512 = vmatpush1.xpose.msra.mxu0 0.0
  %2513 = vmatprep.subr.mxu0 0.0
  %2514 = vmatpush1.xpose.msra.mxu0 0.0
  %2515 = vmatprep.subr.mxu0 0.0
  %2516 = vmatpush1.xpose.msra.mxu0 0.0
  %2517 = vmatprep.mubr.f32.mxu0 0.0
  %2518 = vmatmul.mubr.f32.gmra.mrb[0].mxu0 %v2442
  %v2519 = vpop.f32.mrb[0].mxu0
  %v2520 = vadd.f32 0.0, %v2519
  %v2521 = vpop.f32.mrb[0].mxu0
  %2522 = vmatprep.mubr.f32.mxu0 0.0
  %2523 = vmatmul.mubr.f32.gmra.mrb[0].mxu0 %v2445
  %v2524 = vpop.f32.mrb[0].mxu0
  %v2525 = vadd.f32 0.0, %v2524
  %v2526 = vpop.f32.mrb[0].mxu0
  %2527 = vdwg.mxu0
  %v2528 = vmul.f32 %v2520, 0.25
  %v2529 = vmul.f32 %v2525, 0.25
  %v2530 = vadd.f32 %v2528, %v280
  %v2531 = vadd.f32 %v2529, %v281
  %v2532 = vsel %vm546, %v2530, -inf
  %2533 = vmax.xlane.f32.xlu0 %v2532
  %v2534 = vpop.xlane.xlu0 %2533
  %v2535 = vsel %vm546, %v2531, -inf
  %2536 = vmax.xlane.f32.xlu0 %v2535
  %v2537 = vpop.xlane.xlu0 %2536
  %v2538 = vsub.f32 %v2530, %v2534
  %v2539 = vsub.f32 %v2531, %v2537
  %v2540 = vmul.f32 %v2538, 1.442695
  %v2541 = vpow.pop %v2540
  %v2542 = vmul.f32 %v2539, 1.442695
  %v2543 = vpow.pop %v2542
  %v2544 = vsel %vm546, %v2541, 0.0
  %2545 = vadd.xlane.f32.xlu0 %v2544
  %v2546 = vpop.xlane.xlu0 %2545
  %v2547 = vsel %vm546, %v2543, 0.0
  %2548 = vadd.xlane.f32.xlu0 %v2547
  %v2549 = vpop.xlane.xlu0 %2548
  %v2550 = vrcp.pop %v2546
  %v2551 = vmul.f32 %v2541, %v2550
  %v2552 = vrcp.pop %v2549
  %v2553 = vmul.f32 %v2543, %v2552
  %v2555 = vsel %vm546, %v2551, 0
  %v2558 = vsel %vm546, %v2553, 0
  %2560 = vmatprep.subr.mxu0 0.0
  %2561 = vmatpush1.msra.mxu0 %v2433
  %2562 = vmatprep.subr.mxu0 0.0
  %2563 = vmatpush1.msra.mxu0 %v2438
  %2564 = vmatprep.subr.mxu0 0.0
  %2565 = vmatpush1.msra.mxu0 0.0
  %2566 = vmatprep.subr.mxu0 0.0
  %2567 = vmatpush1.msra.mxu0 0.0
  %2568 = vmatprep.subr.mxu0 0.0
  %2569 = vmatpush1.msra.mxu0 0.0
  %2570 = vmatprep.subr.mxu0 0.0
  %2571 = vmatpush1.msra.mxu0 0.0
  %2572 = vmatprep.subr.mxu0 0.0
  %2573 = vmatpush1.msra.mxu0 0.0
  %2574 = vmatprep.subr.mxu0 0.0
  %2575 = vmatpush1.msra.mxu0 0.0
  %2576 = vmatprep.subr.mxu0 0.0
  %2577 = vmatpush1.msra.mxu0 0.0
  %2578 = vmatprep.subr.mxu0 0.0
  %2579 = vmatpush1.msra.mxu0 0.0
  %2580 = vmatprep.subr.mxu0 0.0
  %2581 = vmatpush1.msra.mxu0 0.0
  %2582 = vmatprep.subr.mxu0 0.0
  %2583 = vmatpush1.msra.mxu0 0.0
  %2584 = vmatprep.subr.mxu0 0.0
  %2585 = vmatpush1.msra.mxu0 0.0
  %2586 = vmatprep.subr.mxu0 0.0
  %2587 = vmatpush1.msra.mxu0 0.0
  %2588 = vmatprep.subr.mxu0 0.0
  %2589 = vmatpush1.msra.mxu0 0.0
  %2590 = vmatprep.subr.mxu0 0.0
  %2591 = vmatpush1.msra.mxu0 0.0
  %2592 = vmatprep.subr.mxu0 0.0
  %2593 = vmatpush1.msra.mxu0 0.0
  %2594 = vmatprep.subr.mxu0 0.0
  %2595 = vmatpush1.msra.mxu0 0.0
  %2596 = vmatprep.subr.mxu0 0.0
  %2597 = vmatpush1.msra.mxu0 0.0
  %2598 = vmatprep.subr.mxu0 0.0
  %2599 = vmatpush1.msra.mxu0 0.0
  %2600 = vmatprep.subr.mxu0 0.0
  %2601 = vmatpush1.msra.mxu0 0.0
  %2602 = vmatprep.subr.mxu0 0.0
  %2603 = vmatpush1.msra.mxu0 0.0
  %2604 = vmatprep.subr.mxu0 0.0
  %2605 = vmatpush1.msra.mxu0 0.0
  %2606 = vmatprep.subr.mxu0 0.0
  %2607 = vmatpush1.msra.mxu0 0.0
  %2608 = vmatprep.subr.mxu0 0.0
  %2609 = vmatpush1.msra.mxu0 0.0
  %2610 = vmatprep.subr.mxu0 0.0
  %2611 = vmatpush1.msra.mxu0 0.0
  %2612 = vmatprep.subr.mxu0 0.0
  %2613 = vmatpush1.msra.mxu0 0.0
  %2614 = vmatprep.subr.mxu0 0.0
  %2615 = vmatpush1.msra.mxu0 0.0
  %2616 = vmatprep.subr.mxu0 0.0
  %2617 = vmatpush1.msra.mxu0 0.0
  %2618 = vmatprep.subr.mxu0 0.0
  %2619 = vmatpush1.msra.mxu0 0.0
  %2620 = vmatprep.subr.mxu0 0.0
  %2621 = vmatpush1.msra.mxu0 0.0
  %2622 = vmatprep.subr.mxu0 0.0
  %2623 = vmatpush1.msra.mxu0 0.0
  %2624 = vmatprep.mubr.f32.mxu0 0.0
  %2625 = vmatmul.mubr.f32.gmra.mrb[0].mxu0 %v2555
  %v2626 = vpop.f32.mrb[0].mxu0
  %v2627 = vadd.f32 0.0, %v2626
  %v2628 = vpop.f32.mrb[0].mxu0
  %2629 = vmatprep.mubr.f32.mxu0 0.0
  %2630 = vmatmul.mubr.f32.gmra.mrb[0].mxu0 %v2558
  %v2631 = vpop.f32.mrb[0].mxu0
  %v2632 = vadd.f32 0.0, %v2631
  %v2633 = vpop.f32.mrb[0].mxu0
  %2634 = vdwg.mxu0
  %s2635 = scalar_lea.vmem %s13, 48
  %v2636 = vld [vmem:[%s2635] sm:$0xff]
  %v2637 = vld [vmem:[%s2635 + $0x8] sm:$0xff]
  %v2639 = vsel %vm546, %v2627, 0
  %v2642 = vsel %vm546, %v2632, 0
  %2644 = vmatprep.subr.mxu0 0.0
  %2645 = vmatpush1.msra.mxu0 %v2636
  %2646 = vmatprep.subr.mxu0 0.0
  %2647 = vmatpush1.msra.mxu0 %v2637
  %2648 = vmatprep.subr.mxu0 0.0
  %2649 = vmatpush1.msra.mxu0 0.0
  %2650 = vmatprep.subr.mxu0 0.0
  %2651 = vmatpush1.msra.mxu0 0.0
  %2652 = vmatprep.subr.mxu0 0.0
  %2653 = vmatpush1.msra.mxu0 0.0
  %2654 = vmatprep.subr.mxu0 0.0
  %2655 = vmatpush1.msra.mxu0 0.0
  %2656 = vmatprep.subr.mxu0 0.0
  %2657 = vmatpush1.msra.mxu0 0.0
  %2658 = vmatprep.subr.mxu0 0.0
  %2659 = vmatpush1.msra.mxu0 0.0
  %2660 = vmatprep.subr.mxu0 0.0
  %2661 = vmatpush1.msra.mxu0 0.0
  %2662 = vmatprep.subr.mxu0 0.0
  %2663 = vmatpush1.msra.mxu0 0.0
  %2664 = vmatprep.subr.mxu0 0.0
  %2665 = vmatpush1.msra.mxu0 0.0
  %2666 = vmatprep.subr.mxu0 0.0
  %2667 = vmatpush1.msra.mxu0 0.0
  %2668 = vmatprep.subr.mxu0 0.0
  %2669 = vmatpush1.msra.mxu0 0.0
  %2670 = vmatprep.subr.mxu0 0.0
  %2671 = vmatpush1.msra.mxu0 0.0
  %2672 = vmatprep.subr.mxu0 0.0
  %2673 = vmatpush1.msra.mxu0 0.0
  %2674 = vmatprep.subr.mxu0 0.0
  %2675 = vmatpush1.msra.mxu0 0.0
  %2676 = vmatprep.subr.mxu0 0.0
  %2677 = vmatpush1.msra.mxu0 0.0
  %2678 = vmatprep.subr.mxu0 0.0
  %2679 = vmatpush1.msra.mxu0 0.0
  %2680 = vmatprep.subr.mxu0 0.0
  %2681 = vmatpush1.msra.mxu0 0.0
  %2682 = vmatprep.subr.mxu0 0.0
  %2683 = vmatpush1.msra.mxu0 0.0
  %2684 = vmatprep.subr.mxu0 0.0
  %2685 = vmatpush1.msra.mxu0 0.0
  %2686 = vmatprep.subr.mxu0 0.0
  %2687 = vmatpush1.msra.mxu0 0.0
  %2688 = vmatprep.subr.mxu0 0.0
  %2689 = vmatpush1.msra.mxu0 0.0
  %2690 = vmatprep.subr.mxu0 0.0
  %2691 = vmatpush1.msra.mxu0 0.0
  %2692 = vmatprep.subr.mxu0 0.0
  %2693 = vmatpush1.msra.mxu0 0.0
  %2694 = vmatprep.subr.mxu0 0.0
  %2695 = vmatpush1.msra.mxu0 0.0
  %2696 = vmatprep.subr.mxu0 0.0
  %2697 = vmatpush1.msra.mxu0 0.0
  %2698 = vmatprep.subr.mxu0 0.0
  %2699 = vmatpush1.msra.mxu0 0.0
  %2700 = vmatprep.subr.mxu0 0.0
  %2701 = vmatpush1.msra.mxu0 0.0
  %2702 = vmatprep.subr.mxu0 0.0
  %2703 = vmatpush1.msra.mxu0 0.0
  %2704 = vmatprep.subr.mxu0 0.0
  %2705 = vmatpush1.msra.mxu0 0.0
  %2706 = vmatprep.subr.mxu0 0.0
  %2707 = vmatpush1.msra.mxu0 0.0
  %2708 = vmatprep.mubr.f32.mxu0 0.0
  %2709 = vmatmul.mubr.f32.gmra.mrb[0].mxu0 %v2639
  %v2710 = vpop.f32.mrb[0].mxu0
  %v2711 = vadd.f32 0.0, %v2710
  %v2712 = vpop.f32.mrb[0].mxu0
  %2713 = vmatprep.mubr.f32.mxu0 0.0
  %2714 = vmatmul.mubr.f32.gmra.mrb[0].mxu0 %v2642
  %v2715 = vpop.f32.mrb[0].mxu0
  %v2716 = vadd.f32 0.0, %v2715
  %v2717 = vpop.f32.mrb[0].mxu0
  %2718 = vdwg.mxu0
  %v2720 = vsel %vm546, %v2166, 0
  %v2723 = vsel %vm546, %v2171, 0
  %2725 = vmatprep.subr.mxu0 0.0
  %2726 = vmatpush1.msra.mxu0 %v2175
  %2727 = vmatprep.subr.mxu0 0.0
  %2728 = vmatpush1.msra.mxu0 %v2176
  %2729 = vmatprep.subr.mxu0 0.0
  %2730 = vmatpush1.msra.mxu0 0.0
  %2731 = vmatprep.subr.mxu0 0.0
  %2732 = vmatpush1.msra.mxu0 0.0
  %2733 = vmatprep.subr.mxu0 0.0
  %2734 = vmatpush1.msra.mxu0 0.0
  %2735 = vmatprep.subr.mxu0 0.0
  %2736 = vmatpush1.msra.mxu0 0.0
  %2737 = vmatprep.subr.mxu0 0.0
  %2738 = vmatpush1.msra.mxu0 0.0
  %2739 = vmatprep.subr.mxu0 0.0
  %2740 = vmatpush1.msra.mxu0 0.0
  %2741 = vmatprep.subr.mxu0 0.0
  %2742 = vmatpush1.msra.mxu0 0.0
  %2743 = vmatprep.subr.mxu0 0.0
  %2744 = vmatpush1.msra.mxu0 0.0
  %2745 = vmatprep.subr.mxu0 0.0
  %2746 = vmatpush1.msra.mxu0 0.0
  %2747 = vmatprep.subr.mxu0 0.0
  %2748 = vmatpush1.msra.mxu0 0.0
  %2749 = vmatprep.subr.mxu0 0.0
  %2750 = vmatpush1.msra.mxu0 0.0
  %2751 = vmatprep.subr.mxu0 0.0
  %2752 = vmatpush1.msra.mxu0 0.0
  %2753 = vmatprep.subr.mxu0 0.0
  %2754 = vmatpush1.msra.mxu0 0.0
  %2755 = vmatprep.subr.mxu0 0.0
  %2756 = vmatpush1.msra.mxu0 0.0
  %2757 = vmatprep.subr.mxu0 0.0
  %2758 = vmatpush1.msra.mxu0 0.0
  %2759 = vmatprep.subr.mxu0 0.0
  %2760 = vmatpush1.msra.mxu0 0.0
  %2761 = vmatprep.subr.mxu0 0.0
  %2762 = vmatpush1.msra.mxu0 0.0
  %2763 = vmatprep.subr.mxu0 0.0
  %2764 = vmatpush1.msra.mxu0 0.0
  %2765 = vmatprep.subr.mxu0 0.0
  %2766 = vmatpush1.msra.mxu0 0.0
  %2767 = vmatprep.subr.mxu0 0.0
  %2768 = vmatpush1.msra.mxu0 0.0
  %2769 = vmatprep.subr.mxu0 0.0
  %2770 = vmatpush1.msra.mxu0 0.0
  %2771 = vmatprep.subr.mxu0 0.0
  %2772 = vmatpush1.msra.mxu0 0.0
  %2773 = vmatprep.subr.mxu0 0.0
  %2774 = vmatpush1.msra.mxu0 0.0
  %2775 = vmatprep.subr.mxu0 0.0
  %2776 = vmatpush1.msra.mxu0 0.0
  %2777 = vmatprep.subr.mxu0 0.0
  %2778 = vmatpush1.msra.mxu0 0.0
  %2779 = vmatprep.subr.mxu0 0.0
  %2780 = vmatpush1.msra.mxu0 0.0
  %2781 = vmatprep.subr.mxu0 0.0
  %2782 = vmatpush1.msra.mxu0 0.0
  %2783 = vmatprep.subr.mxu0 0.0
  %2784 = vmatpush1.msra.mxu0 0.0
  %2785 = vmatprep.subr.mxu0 0.0
  %2786 = vmatpush1.msra.mxu0 0.0
  %2787 = vmatprep.subr.mxu0 0.0
  %2788 = vmatpush1.msra.mxu0 0.0
  %2789 = vmatprep.mubr.f32.mxu0 0.0
  %2790 = vmatmul.mubr.f32.gmra.mrb[0].mxu0 %v2720
  %v2791 = vpop.f32.mrb[0].mxu0
  %v2792 = vadd.f32 %v2711, %v2791
  %v2793 = vpop.f32.mrb[0].mxu0
  %2794 = vmatprep.mubr.f32.mxu0 0.0
  %2795 = vmatmul.mubr.f32.gmra.mrb[0].mxu0 %v2723
  %v2796 = vpop.f32.mrb[0].mxu0
  %v2797 = vadd.f32 %v2716, %v2796
  %v2798 = vpop.f32.mrb[0].mxu0
  %2799 = vdwg.mxu0
  %s2800 = scalar_lea.vmem %s14, 1
  %v2801 = vld [vmem:[%s2800] sm:$0x1]
  %v2803 = vlaneseq
  %v2804 = vshrl.u32 %v2803, 7
  %v2805 = vsub.s32 0, %v2804
  %v2806 = vrot.slane %v2801, %v2805
  %v2808 = vadd.f32 %v2792, %v2806
  %v2809 = vadd.f32 %v2797, %v2806
  %v2810 = vadd.f32 %v2808, %v1708
  %v2811 = vadd.f32 %v2809, %v1709
  %s2812 = scalar_lea.vmem %s15, 1
  %v2813 = vld [vmem:[%s2812] sm:$0x1]
  %s2814 = scalar_lea.vmem %s16, 1
  %v2815 = vld [vmem:[%s2814] sm:$0x1]
  %v2816 = vsel %vm197, %v2810, 0.0
  %2817 = vadd.xlane.f32.xlu0 %v2816
  %v2818 = vpop.xlane.xlu0 %2817
  %v2819 = vsel %vm197, %v2811, 0.0
  %2820 = vadd.xlane.f32.xlu0 %v2819
  %v2821 = vpop.xlane.xlu0 %2820
  %v2822 = vmul.f32 %v2818, %v204
  %v2823 = vmul.f32 %v2821, %v204
  %v2824 = vsub.f32 %v2810, %v2822
  %v2825 = vsub.f32 %v2811, %v2823
  %v2826 = vmul.f32 %v2824, %v2824
  %v2827 = vmul.f32 %v2825, %v2825
  %v2828 = vsel %vm197, %v2826, 0.0
  %2829 = vadd.xlane.f32.xlu0 %v2828
  %v2830 = vpop.xlane.xlu0 %2829
  %v2831 = vsel %vm197, %v2827, 0.0
  %2832 = vadd.xlane.f32.xlu0 %v2831
  %v2833 = vpop.xlane.xlu0 %2832
  %v2834 = vmul.f32 %v2830, %v204
  %v2835 = vmul.f32 %v2833, %v204
  %v2836 = vadd.f32 %v2834, 1e-12
  %v2837 = vadd.f32 %v2835, 1e-12
  %v2838 = vrsqrt.pop %v2836
  %v2839 = vrsqrt.pop %v2837
  %v2840 = vmul.f32 %v2824, %v2838
  %v2841 = vmul.f32 %v2825, %v2839
  %v2843 = vlaneseq
  %v2844 = vshrl.u32 %v2843, 7
  %v2845 = vsub.s32 0, %v2844
  %v2846 = vrot.slane %v2813, %v2845
  %v2848 = vmul.f32 %v2840, %v2846
  %v2849 = vmul.f32 %v2841, %v2846
  %v2851 = vlaneseq
  %v2852 = vshrl.u32 %v2851, 7
  %v2853 = vsub.s32 0, %v2852
  %v2854 = vrot.slane %v2815, %v2853
  %v2856 = vadd.f32 %v2848, %v2854
  %v2857 = vadd.f32 %v2849, %v2854
  %s2858 = scalar_lea.vmem %s17, 32
  %v2859 = vld [vmem:[%s2858] sm:$0xff]
  %v2860 = vld [vmem:[%s2858 + $0x8] sm:$0xff]
  %v2861 = vld [vmem:[%s2858 + $0x10] sm:$0xff]
  %v2862 = vld [vmem:[%s2858 + $0x18] sm:$0xff]
  %s2863 = scalar_lea.vmem %s18, 1
  %v2864 = vld [vmem:[%s2863] sm:$0x1]
  %v2866 = vlaneseq
  %v2867 = vshrl.u32 %v2866, 7
  %v2868 = vsub.s32 0, %v2867
  %v2869 = vrot.slane %v2864, %v2868
  %v2872 = vsel %vm197, %v2856, 0
  %v2875 = vsel %vm197, %v2857, 0
  %2877 = vmatprep.subr.mxu0 0.0
  %2878 = vmatpush1.msra.mxu0 %v2859
  %2879 = vmatprep.subr.mxu0 0.0
  %2880 = vmatpush1.msra.mxu0 %v2860
  %2881 = vmatprep.subr.mxu0 0.0
  %2882 = vmatpush1.msra.mxu0 %v2861
  %2883 = vmatprep.subr.mxu0 0.0
  %2884 = vmatpush1.msra.mxu0 %v2862
  %2885 = vmatprep.subr.mxu0 0.0
  %2886 = vmatpush1.msra.mxu0 0.0
  %2887 = vmatprep.subr.mxu0 0.0
  %2888 = vmatpush1.msra.mxu0 0.0
  %2889 = vmatprep.subr.mxu0 0.0
  %2890 = vmatpush1.msra.mxu0 0.0
  %2891 = vmatprep.subr.mxu0 0.0
  %2892 = vmatpush1.msra.mxu0 0.0
  %2893 = vmatprep.subr.mxu0 0.0
  %2894 = vmatpush1.msra.mxu0 0.0
  %2895 = vmatprep.subr.mxu0 0.0
  %2896 = vmatpush1.msra.mxu0 0.0
  %2897 = vmatprep.subr.mxu0 0.0
  %2898 = vmatpush1.msra.mxu0 0.0
  %2899 = vmatprep.subr.mxu0 0.0
  %2900 = vmatpush1.msra.mxu0 0.0
  %2901 = vmatprep.subr.mxu0 0.0
  %2902 = vmatpush1.msra.mxu0 0.0
  %2903 = vmatprep.subr.mxu0 0.0
  %2904 = vmatpush1.msra.mxu0 0.0
  %2905 = vmatprep.subr.mxu0 0.0
  %2906 = vmatpush1.msra.mxu0 0.0
  %2907 = vmatprep.subr.mxu0 0.0
  %2908 = vmatpush1.msra.mxu0 0.0
  %2909 = vmatprep.subr.mxu0 0.0
  %2910 = vmatpush1.msra.mxu0 0.0
  %2911 = vmatprep.subr.mxu0 0.0
  %2912 = vmatpush1.msra.mxu0 0.0
  %2913 = vmatprep.subr.mxu0 0.0
  %2914 = vmatpush1.msra.mxu0 0.0
  %2915 = vmatprep.subr.mxu0 0.0
  %2916 = vmatpush1.msra.mxu0 0.0
  %2917 = vmatprep.subr.mxu0 0.0
  %2918 = vmatpush1.msra.mxu0 0.0
  %2919 = vmatprep.subr.mxu0 0.0
  %2920 = vmatpush1.msra.mxu0 0.0
  %2921 = vmatprep.subr.mxu0 0.0
  %2922 = vmatpush1.msra.mxu0 0.0
  %2923 = vmatprep.subr.mxu0 0.0
  %2924 = vmatpush1.msra.mxu0 0.0
  %2925 = vmatprep.subr.mxu0 0.0
  %2926 = vmatpush1.msra.mxu0 0.0
  %2927 = vmatprep.subr.mxu0 0.0
  %2928 = vmatpush1.msra.mxu0 0.0
  %2929 = vmatprep.subr.mxu0 0.0
  %2930 = vmatpush1.msra.mxu0 0.0
  %2931 = vmatprep.subr.mxu0 0.0
  %2932 = vmatpush1.msra.mxu0 0.0
  %2933 = vmatprep.subr.mxu0 0.0
  %2934 = vmatpush1.msra.mxu0 0.0
  %2935 = vmatprep.subr.mxu0 0.0
  %2936 = vmatpush1.msra.mxu0 0.0
  %2937 = vmatprep.subr.mxu0 0.0
  %2938 = vmatpush1.msra.mxu0 0.0
  %2939 = vmatprep.subr.mxu0 0.0
  %2940 = vmatpush1.msra.mxu0 0.0
  %2941 = vmatprep.mubr.f32.mxu0 0.0
  %2942 = vmatmul.mubr.f32.gmra.mrb[0].mxu0 %v2872
  %v2943 = vpop.f32.mrb[0].mxu0
  %v2944 = vadd.f32 %v2869, %v2943
  %v2945 = vpop.f32.mrb[0].mxu0
  %2946 = vmatprep.mubr.f32.mxu0 0.0
  %2947 = vmatmul.mubr.f32.gmra.mrb[0].mxu0 %v2875
  %v2948 = vpop.f32.mrb[0].mxu0
  %v2949 = vadd.f32 %v2869, %v2948
  %v2950 = vpop.f32.mrb[0].mxu0
  %2951 = vdwg.mxu0
  %v2952 = vmul.f32 %v2944, 0.5
  %v2953 = vmul.f32 %v2949, 0.5
  %v2954 = vmul.f32 %v2944, 0.70710677
  %v2955 = vmul.f32 %v2949, 0.70710677
  %v2956 = vand.u32 2147483647, %v2954
  %v2957 = vand.u32 2147483647, %v2955
  %v2958 = vmul.f32 %v2956, 0.3275911
  %v2959 = vmul.f32 %v2957, 0.3275911
  %v2960 = vadd.f32 %v2958, 1.0
  %v2961 = vadd.f32 %v2959, 1.0
  %v2962 = vrcp.pop %v2960
  %v2963 = vmul.f32 1.0, %v2962
  %v2964 = vrcp.pop %v2961
  %v2965 = vmul.f32 1.0, %v2964
  %v2966 = vmul.f32 %v2963, 1.0614054
  %v2967 = vmul.f32 %v2965, 1.0614054
  %v2968 = vadd.f32 %v2966, -1.4531521
  %v2969 = vadd.f32 %v2967, -1.4531521
  %v2970 = vmul.f32 %v2968, %v2963
  %v2971 = vmul.f32 %v2969, %v2965
  %v2972 = vadd.f32 %v2970, 1.4214138
  %v2973 = vadd.f32 %v2971, 1.4214138
  %v2974 = vmul.f32 %v2972, %v2963
  %v2975 = vmul.f32 %v2973, %v2965
  %v2976 = vadd.f32 %v2974, -0.28449672
  %v2977 = vadd.f32 %v2975, -0.28449672
  %v2978 = vmul.f32 %v2976, %v2963
  %v2979 = vmul.f32 %v2977, %v2965
  %v2980 = vadd.f32 %v2978, 0.2548296
  %v2981 = vadd.f32 %v2979, 0.2548296
  %v2982 = vmul.f32 %v2980, %v2963
  %v2983 = vmul.f32 %v2981, %v2965
  %v2984 = vsub.f32 0.0, %v2956
  %v2985 = vsub.f32 0.0, %v2957
  %v2986 = vmul.f32 %v2984, %v2956
  %v2987 = vmul.f32 %v2985, %v2957
  %v2988 = vmul.f32 %v2986, 1.442695
  %v2989 = vpow.pop %v2988
  %v2990 = vmul.f32 %v2987, 1.442695
  %v2991 = vpow.pop %v2990
  %v2992 = vmul.f32 %v2982, %v2989
  %v2993 = vmul.f32 %v2983, %v2991
  %v2994 = vsub.f32 1.0, %v2992
  %v2995 = vsub.f32 1.0, %v2993
  %vm2996 = vcmp.ge.f32.partialorder %v2954, 0.0
  %vm2997 = vcmp.ge.f32.partialorder %v2955, 0.0
  %v2998 = vsub.f32 0.0, %v2994
  %v2999 = vsub.f32 0.0, %v2995
  %v3000 = vsel %vm2996, %v2994, %v2998
  %v3001 = vsel %vm2997, %v2995, %v2999
  %v3002 = vadd.f32 %v3000, 1.0
  %v3003 = vadd.f32 %v3001, 1.0
  %v3004 = vmul.f32 %v2952, %v3002
  %v3005 = vmul.f32 %v2953, %v3003
  %s3006 = scalar_lea.vmem %s19, 64
  %v3007 = vld [vmem:[%s3006] sm:$0xff]
  %v3008 = vld [vmem:[%s3006 + $0x8] sm:$0xff]
  %v3009 = vld [vmem:[%s3006 + $0x10] sm:$0xff]
  %v3010 = vld [vmem:[%s3006 + $0x18] sm:$0xff]
  %v3011 = vld [vmem:[%s3006 + $0x20] sm:$0xff]
  %v3012 = vld [vmem:[%s3006 + $0x28] sm:$0xff]
  %v3013 = vld [vmem:[%s3006 + $0x30] sm:$0xff]
  %v3014 = vld [vmem:[%s3006 + $0x38] sm:$0xff]
  %s3015 = scalar_lea.vmem %s20, 1
  %v3016 = vld [vmem:[%s3015] sm:$0x1]
  %v3018 = vlaneseq
  %v3019 = vshrl.u32 %v3018, 7
  %v3020 = vsub.s32 0, %v3019
  %v3021 = vrot.slane %v3016, %v3020
  %v3024 = vsel %vm1582, %v3004, 0
  %v3027 = vsel %vm1582, %v3005, 0
  %3029 = vmatprep.subr.mxu0 0.0
  %3030 = vmatpush1.msra.mxu0 %v3007
  %3031 = vmatprep.subr.mxu0 0.0
  %3032 = vmatpush1.msra.mxu0 %v3008
  %3033 = vmatprep.subr.mxu0 0.0
  %3034 = vmatpush1.msra.mxu0 %v3009
  %3035 = vmatprep.subr.mxu0 0.0
  %3036 = vmatpush1.msra.mxu0 %v3010
  %3037 = vmatprep.subr.mxu0 0.0
  %3038 = vmatpush1.msra.mxu0 %v3011
  %3039 = vmatprep.subr.mxu0 0.0
  %3040 = vmatpush1.msra.mxu0 %v3012
  %3041 = vmatprep.subr.mxu0 0.0
  %3042 = vmatpush1.msra.mxu0 %v3013
  %3043 = vmatprep.subr.mxu0 0.0
  %3044 = vmatpush1.msra.mxu0 %v3014
  %3045 = vmatprep.subr.mxu0 0.0
  %3046 = vmatpush1.msra.mxu0 0.0
  %3047 = vmatprep.subr.mxu0 0.0
  %3048 = vmatpush1.msra.mxu0 0.0
  %3049 = vmatprep.subr.mxu0 0.0
  %3050 = vmatpush1.msra.mxu0 0.0
  %3051 = vmatprep.subr.mxu0 0.0
  %3052 = vmatpush1.msra.mxu0 0.0
  %3053 = vmatprep.subr.mxu0 0.0
  %3054 = vmatpush1.msra.mxu0 0.0
  %3055 = vmatprep.subr.mxu0 0.0
  %3056 = vmatpush1.msra.mxu0 0.0
  %3057 = vmatprep.subr.mxu0 0.0
  %3058 = vmatpush1.msra.mxu0 0.0
  %3059 = vmatprep.subr.mxu0 0.0
  %3060 = vmatpush1.msra.mxu0 0.0
  %3061 = vmatprep.subr.mxu0 0.0
  %3062 = vmatpush1.msra.mxu0 0.0
  %3063 = vmatprep.subr.mxu0 0.0
  %3064 = vmatpush1.msra.mxu0 0.0
  %3065 = vmatprep.subr.mxu0 0.0
  %3066 = vmatpush1.msra.mxu0 0.0
  %3067 = vmatprep.subr.mxu0 0.0
  %3068 = vmatpush1.msra.mxu0 0.0
  %3069 = vmatprep.subr.mxu0 0.0
  %3070 = vmatpush1.msra.mxu0 0.0
  %3071 = vmatprep.subr.mxu0 0.0
  %3072 = vmatpush1.msra.mxu0 0.0
  %3073 = vmatprep.subr.mxu0 0.0
  %3074 = vmatpush1.msra.mxu0 0.0
  %3075 = vmatprep.subr.mxu0 0.0
  %3076 = vmatpush1.msra.mxu0 0.0
  %3077 = vmatprep.subr.mxu0 0.0
  %3078 = vmatpush1.msra.mxu0 0.0
  %3079 = vmatprep.subr.mxu0 0.0
  %3080 = vmatpush1.msra.mxu0 0.0
  %3081 = vmatprep.subr.mxu0 0.0
  %3082 = vmatpush1.msra.mxu0 0.0
  %3083 = vmatprep.subr.mxu0 0.0
  %3084 = vmatpush1.msra.mxu0 0.0
  %3085 = vmatprep.subr.mxu0 0.0
  %3086 = vmatpush1.msra.mxu0 0.0
  %3087 = vmatprep.subr.mxu0 0.0
  %3088 = vmatpush1.msra.mxu0 0.0
  %3089 = vmatprep.subr.mxu0 0.0
  %3090 = vmatpush1.msra.mxu0 0.0
  %3091 = vmatprep.subr.mxu0 0.0
  %3092 = vmatpush1.msra.mxu0 0.0
  %3093 = vmatprep.mubr.f32.mxu0 0.0
  %3094 = vmatmul.mubr.f32.gmra.mrb[0].mxu0 %v3024
  %v3095 = vpop.f32.mrb[0].mxu0
  %v3096 = vadd.f32 %v3021, %v3095
  %v3097 = vpop.f32.mrb[0].mxu0
  %3098 = vmatprep.mubr.f32.mxu0 0.0
  %3099 = vmatmul.mubr.f32.gmra.mrb[0].mxu0 %v3027
  %v3100 = vpop.f32.mrb[0].mxu0
  %v3101 = vadd.f32 %v3021, %v3100
  %v3102 = vpop.f32.mrb[0].mxu0
  %3103 = vdwg.mxu0
  %v3104 = vadd.f32 %v3096, %v2856
  %v3105 = vadd.f32 %v3101, %v2857
  %s3106 = scalar_lea.vmem %s21, 1
  %v3107 = vld [vmem:[%s3106] sm:$0x1]
  %s3108 = scalar_lea.vmem %s22, 1
  %v3109 = vld [vmem:[%s3108] sm:$0x1]
  %v3110 = vsel %vm197, %v3104, 0.0
  %3111 = vadd.xlane.f32.xlu0 %v3110
  %v3112 = vpop.xlane.xlu0 %3111
  %v3113 = vsel %vm197, %v3105, 0.0
  %3114 = vadd.xlane.f32.xlu0 %v3113
  %v3115 = vpop.xlane.xlu0 %3114
  %v3116 = vmul.f32 %v3112, %v204
  %v3117 = vmul.f32 %v3115, %v204
  %v3118 = vsub.f32 %v3104, %v3116
  %v3119 = vsub.f32 %v3105, %v3117
  %v3120 = vmul.f32 %v3118, %v3118
  %v3121 = vmul.f32 %v3119, %v3119
  %v3122 = vsel %vm197, %v3120, 0.0
  %3123 = vadd.xlane.f32.xlu0 %v3122
  %v3124 = vpop.xlane.xlu0 %3123
  %v3125 = vsel %vm197, %v3121, 0.0
  %3126 = vadd.xlane.f32.xlu0 %v3125
  %v3127 = vpop.xlane.xlu0 %3126
  %v3128 = vmul.f32 %v3124, %v204
  %v3129 = vmul.f32 %v3127, %v204
  %v3130 = vadd.f32 %v3128, 1e-12
  %v3131 = vadd.f32 %v3129, 1e-12
  %v3132 = vrsqrt.pop %v3130
  %v3133 = vrsqrt.pop %v3131
  %v3134 = vmul.f32 %v3118, %v3132
  %v3135 = vmul.f32 %v3119, %v3133
  %v3137 = vlaneseq
  %v3138 = vshrl.u32 %v3137, 7
  %v3139 = vsub.s32 0, %v3138
  %v3140 = vrot.slane %v3107, %v3139
  %v3142 = vmul.f32 %v3134, %v3140
  %v3143 = vmul.f32 %v3135, %v3140
  %v3145 = vlaneseq
  %v3146 = vshrl.u32 %v3145, 7
  %v3147 = vsub.s32 0, %v3146
  %v3148 = vrot.slane %v3109, %v3147
  %v3150 = vadd.f32 %v3142, %v3148
  %v3151 = vadd.f32 %v3143, %v3148
  %v3152 = vld [vmem:[%s23] sm:$0xff]
  %v3153 = vld [vmem:[%s23 + $0x8] sm:$0xff]
  %v3154 = vld [vmem:[%s23 + $0x10] sm:$0xff]
  %v3155 = vld [vmem:[%s23 + $0x18] sm:$0xff]
  %v3156 = vld [vmem:[%s24] sm:$0x1]
  %v3158 = vlaneseq
  %v3159 = vshrl.u32 %v3158, 7
  %v3160 = vsub.s32 0, %v3159
  %v3161 = vrot.slane %v3156, %v3160
  %v3164 = vsel %vm197, %v3150, 0
  %v3167 = vsel %vm197, %v3151, 0
  %3169 = vmatprep.subr.mxu0 0.0
  %3170 = vmatpush1.msra.mxu0 %v3152
  %3171 = vmatprep.subr.mxu0 0.0
  %3172 = vmatpush1.msra.mxu0 %v3153
  %3173 = vmatprep.subr.mxu0 0.0
  %3174 = vmatpush1.msra.mxu0 %v3154
  %3175 = vmatprep.subr.mxu0 0.0
  %3176 = vmatpush1.msra.mxu0 %v3155
  %3177 = vmatprep.subr.mxu0 0.0
  %3178 = vmatpush1.msra.mxu0 0.0
  %3179 = vmatprep.subr.mxu0 0.0
  %3180 = vmatpush1.msra.mxu0 0.0
  %3181 = vmatprep.subr.mxu0 0.0
  %3182 = vmatpush1.msra.mxu0 0.0
  %3183 = vmatprep.subr.mxu0 0.0
  %3184 = vmatpush1.msra.mxu0 0.0
  %3185 = vmatprep.subr.mxu0 0.0
  %3186 = vmatpush1.msra.mxu0 0.0
  %3187 = vmatprep.subr.mxu0 0.0
  %3188 = vmatpush1.msra.mxu0 0.0
  %3189 = vmatprep.subr.mxu0 0.0
  %3190 = vmatpush1.msra.mxu0 0.0
  %3191 = vmatprep.subr.mxu0 0.0
  %3192 = vmatpush1.msra.mxu0 0.0
  %3193 = vmatprep.subr.mxu0 0.0
  %3194 = vmatpush1.msra.mxu0 0.0
  %3195 = vmatprep.subr.mxu0 0.0
  %3196 = vmatpush1.msra.mxu0 0.0
  %3197 = vmatprep.subr.mxu0 0.0
  %3198 = vmatpush1.msra.mxu0 0.0
  %3199 = vmatprep.subr.mxu0 0.0
  %3200 = vmatpush1.msra.mxu0 0.0
  %3201 = vmatprep.subr.mxu0 0.0
  %3202 = vmatpush1.msra.mxu0 0.0
  %3203 = vmatprep.subr.mxu0 0.0
  %3204 = vmatpush1.msra.mxu0 0.0
  %3205 = vmatprep.subr.mxu0 0.0
  %3206 = vmatpush1.msra.mxu0 0.0
  %3207 = vmatprep.subr.mxu0 0.0
  %3208 = vmatpush1.msra.mxu0 0.0
  %3209 = vmatprep.subr.mxu0 0.0
  %3210 = vmatpush1.msra.mxu0 0.0
  %3211 = vmatprep.subr.mxu0 0.0
  %3212 = vmatpush1.msra.mxu0 0.0
  %3213 = vmatprep.subr.mxu0 0.0
  %3214 = vmatpush1.msra.mxu0 0.0
  %3215 = vmatprep.subr.mxu0 0.0
  %3216 = vmatpush1.msra.mxu0 0.0
  %3217 = vmatprep.subr.mxu0 0.0
  %3218 = vmatpush1.msra.mxu0 0.0
  %3219 = vmatprep.subr.mxu0 0.0
  %3220 = vmatpush1.msra.mxu0 0.0
  %3221 = vmatprep.subr.mxu0 0.0
  %3222 = vmatpush1.msra.mxu0 0.0
  %3223 = vmatprep.subr.mxu0 0.0
  %3224 = vmatpush1.msra.mxu0 0.0
  %3225 = vmatprep.subr.mxu0 0.0
  %3226 = vmatpush1.msra.mxu0 0.0
  %3227 = vmatprep.subr.mxu0 0.0
  %3228 = vmatpush1.msra.mxu0 0.0
  %3229 = vmatprep.subr.mxu0 0.0
  %3230 = vmatpush1.msra.mxu0 0.0
  %3231 = vmatprep.subr.mxu0 0.0
  %3232 = vmatpush1.msra.mxu0 0.0
  %3233 = vmatprep.mubr.f32.mxu0 0.0
  %3234 = vmatmul.mubr.f32.gmra.mrb[0].mxu0 %v3164
  %v3235 = vpop.f32.mrb[0].mxu0
  %v3236 = vadd.f32 %v3161, %v3235
  %v3237 = vpop.f32.mrb[0].mxu0
  %3238 = vmatprep.mubr.f32.mxu0 0.0
  %3239 = vmatmul.mubr.f32.gmra.mrb[0].mxu0 %v3167
  %v3240 = vpop.f32.mrb[0].mxu0
  %v3241 = vadd.f32 %v3161, %v3240
  %v3242 = vpop.f32.mrb[0].mxu0
  %3243 = vdwg.mxu0
  %3244 = vst [vmem:[%s25] sm:$0xff] %v3236
  %3245 = vst [vmem:[%s25 + $0x8] sm:$0xff] %v3241
  // Predicated region
  $region102: #{sbert_punc_case_forward.1} parent=0 // pred_check
    _
  $region103: #{sbert_punc_case_forward.1} parent=0 // pred_check_branch
    %3247 = sbr.rel (0) target = $region105
  $region104: #{sbert_punc_case_forward.1} parent=0 // pred_region
    _
  $region105: #{sbert_punc_case_forward.1} parent=0 // pred_fallthru
    _
  // Predicated region
  $region106: #{sbert_punc_case_forward.1} parent=0 // pred_check
    _
  $region107: #{sbert_punc_case_forward.1} parent=0 // pred_check_branch
    %3249 = sbr.rel (0) target = $region109
  $region108: #{sbert_punc_case_forward.1} parent=0 // pred_region
    _
  $region109: #{sbert_punc_case_forward.1} parent=0 // pred_fallthru
    _

</llo_original>
